<compile_context>
chip_gen: v5e
topology: v5e:2x2
jax: 0.10.0
libtpu: 0.0.40
codegen_flags: <defaults>
</compile_context>

<pallas_src>
import jax
import jax.numpy as jnp
from jax.experimental import pallas as pl
from jax.experimental.pallas import tpu as pltpu

C, H, W = 4, 16, 16        # channels, per-image spatial size
K, PAD = 3, 1              # kernel_size, zero padding ((k-1)//2 keeps the residual shape)
EPS = 1e-5                 # InstanceNorm2d default eps
TB = 8                     # images packed along lanes -> last dim = TB*W = 128
GB_MAX = 16                # max lane-groups per grid step (512 KiB block, ~2 MiB dbl-buffered)


def resconv_kernel(x_ref, w1_ref, w2_ref, o_ref):
    # x_ref / o_ref block: (GB, C, H, TB*W); lane l holds image (l // W), column (l % W).
    # w*_ref: (C*C*K*K,) f32 in SMEM, row-major over (C_out, C_in, K, K).
    GB, _, Hh, TBW = x_ref.shape

    # ---- hoisted, group-invariant constants (built once per grid step) ----------------
    row = jax.lax.broadcasted_iota(jnp.int32, (Hh, TBW), 0)          # sublane index
    col = jax.lax.broadcasted_iota(jnp.int32, (Hh, TBW), 1) % W      # column inside image
    row_ok = {1: row < (Hh - 1), -1: row > 0}                        # valid after h-shift
    col_ok = {1: col < (W - 1), -1: col > 0}                         # valid after w-shift
    lane = jax.lax.broadcasted_iota(jnp.int32, (1, TBW), 1)
    seg_bits = [(lane & (1 << j)) == 0 for j in range((W - 1).bit_length())]
    inv_hw = 1.0 / (Hh * W)

    # SMEM weight scalars read once per grid step (loop-invariant across groups)
    def read_w(w_ref):
        return [[[[w_ref[((co * C + ci) * K + kh) * K + kw]
                   for kw in range(K)] for kh in range(K)]
                 for ci in range(C)] for co in range(C)]
    w1 = read_w(w1_ref)
    w2 = read_w(w2_ref)

    # ---- 3x3 zero-padded conv (PyTorch cross-correlation) on the VPU ------------------
    def conv3x3(chans, w):
        # no bias: per-channel constants cancel exactly through InstanceNorm(affine=False)
        accs = [jnp.zeros((Hh, TBW), jnp.float32) for _ in range(C)]
        for kh in range(K):
            dh = kh - PAD
            if dh == 0:
                xh = chans
            else:      # shift along H once per (dh, ci); reused for every kw and co
                xh = [jnp.where(row_ok[dh],
                                pltpu.roll(ch, shift=(-dh) % Hh, axis=0), 0.0)
                      for ch in chans]
            for kw in range(K):
                dw = kw - PAD
                for ci in range(C):
                    if dw == 0:
                        patch = xh[ci]
                    else:  # lane shift + mask (also blocks leakage between packed images)
                        patch = jnp.where(col_ok[dw],
                                          pltpu.roll(xh[ci], shift=(-dw) % TBW, axis=1),
                                          0.0)
                    for co in range(C):
                        accs[co] = accs[co] + w[co][ci][kh][kw] * patch
        return accs

    # ---- sum within each W-lane image segment, broadcast back to all its lanes --------
    def seg_allsum(v):                                      # v: (R, TBW)
        for j, take_up in enumerate(seg_bits):
            s = 1 << j
            up = pltpu.roll(v, shift=(-s) % TBW, axis=1)    # v[l + s]
            dn = pltpu.roll(v, shift=s, axis=1)             # v[l - s]
            v = v + jnp.where(take_up, up, dn)              # partner = v[l XOR s]
        return v

    # ---- InstanceNorm2d(affine=False): one (2C,128) stat slab, one butterfly ----------
    def inorm(chans, relu):
        rows = ([jnp.sum(y, axis=0, keepdims=True) for y in chans]
                + [jnp.sum(y * y, axis=0, keepdims=True) for y in chans])
        stats = seg_allsum(jnp.concatenate(rows, axis=0)) * inv_hw     # (2C, TBW)
        mean = stats[:C]                                               # (C, TBW)
        var = jnp.maximum(stats[C:] - mean * mean, 0.0)
        inv = jax.lax.rsqrt(var + EPS)                                 # (C, TBW)
        out = []
        for c in range(C):
            t = (chans[c] - mean[c:c + 1]) * inv[c:c + 1]
            if relu:
                t = jnp.maximum(t, 0.0)                                # fused ReLU
            out.append(t)
        return out

    # ---- per-group body (one 8-image lane-packed group) -------------------------------
    def group(g, carry):
        x = [x_ref[g, c].astype(jnp.float32) for c in range(C)]
        y = conv3x3(x, w1)
        y = inorm(y, relu=True)
        y = conv3x3(y, w2)
        y = inorm(y, relu=False)
        for c in range(C):           # residual add; lane-dense (16,128) stores
            o_ref[g, c] = (x[c] + y[c]).astype(o_ref.dtype)
        return carry

    if GB == 1:
        group(0, 0)
    else:
        jax.lax.fori_loop(0, GB, group, 0)


def _resconv_forward(x, w1, b1, w2, b2):
    # b1 / b2 cancel exactly through InstanceNorm(affine=False); kept in the signature to
    # match the PyTorch module but never sent to the kernel.
    del b1, b2
    N, Cc, Hh, Ww = x.shape
    assert (Cc, Hh, Ww) == (C, H, W)

    G = pl.cdiv(N, TB)                         # number of 8-image lane groups
    GB = max(1, min(GB_MAX, pl.cdiv(G, 2)))    # keep the parallel grid >= 2 steps (v7x)
    steps = pl.cdiv(G, GB)
    Gp = steps * GB
    Np = Gp * TB

    # Pad batch and pack TB images along the lane axis:
    # (Np, C, H, W) -> (Gp, C, H, TB*W), lane = image_in_group * W + column.
    xp = x if Np == N else jnp.concatenate(
        [x, jnp.zeros((Np - N, C, H, W), x.dtype)], axis=0)
    tbw = TB * W
    xp = xp.reshape(Gp, TB, C, H, W).transpose(0, 2, 3, 1, 4).reshape(Gp, C, H, tbw)

    smem = pl.BlockSpec(memory_space=pltpu.MemorySpace.SMEM)
    out = pl.pallas_call(
        resconv_kernel,
        out_shape=jax.ShapeDtypeStruct((Gp, C, H, tbw), x.dtype),
        grid=(steps,),
        in_specs=[pl.BlockSpec((GB, C, H, tbw), lambda n: (n, 0, 0, 0)), smem, smem],
        out_specs=pl.BlockSpec((GB, C, H, tbw), lambda n: (n, 0, 0, 0)),
        compiler_params=pltpu.CompilerParams(dimension_semantics=("parallel",)),
    )(xp, w1.reshape(-1), w2.reshape(-1))

    out = out.reshape(Gp, C, H, TB, W).transpose(0, 3, 1, 2, 4).reshape(Np, C, H, W)
    return out[:N]


resconv_forward = jax.jit(_resconv_forward)


def ref_forward(x, w1, b1, w2, b2):
    # pure-JAX reference (XLA conv, with biases) for correctness checking
    dn = ("NCHW", "OIHW", "NCHW")

    def conv(t, w, b):
        y = jax.lax.conv_general_dilated(t, w, (1, 1), [(PAD, PAD), (PAD, PAD)],
                                         dimension_numbers=dn)
        return y + b[None, :, None, None]

    def inorm(y):
        m = jnp.mean(y, axis=(2, 3), keepdims=True)
        v = jnp.mean((y - m) ** 2, axis=(2, 3), keepdims=True)
        return (y - m) * jax.lax.rsqrt(v + EPS)

    y = jnp.maximum(inorm(conv(x, w1, b1)), 0.0)
    y = inorm(conv(y, w2, b2))
    return x + y


if __name__ == "__main__":
    key = jax.random.PRNGKey(0)
    k0, k1, k2, k3, k4 = jax.random.split(key, 5)
    scale = 1.0 / (C * K * K) ** 0.5
    w1 = jax.random.normal(k1, (C, C, K, K), jnp.float32) * scale
    b1 = jax.random.normal(k2, (C,), jnp.float32) * scale
    w2 = jax.random.normal(k3, (C, C, K, K), jnp.float32) * scale
    b2 = jax.random.normal(k4, (C,), jnp.float32) * scale

    # nominal small input (batch smaller than the lane-packing factor; GB=1, 1 grid step)
    x = jax.random.normal(k0, (2, C, H, W), jnp.float32)
    out = jax.block_until_ready(resconv_forward(x, w1, b1, w2, b2))
    err = float(jnp.max(jnp.abs(out - ref_forward(x, w1, b1, w2, b2))))
    assert err < 2e-4, f"mismatch vs reference (N=2): max abs err = {err}"

    # non-multiple-of-8 batch -> exercises batch padding, image-boundary masks, 2 grid steps
    x9 = jax.random.normal(jax.random.PRNGKey(7), (9, C, H, W), jnp.float32)
    out9 = jax.block_until_ready(resconv_forward(x9, w1, b1, w2, b2))
    err9 = float(jnp.max(jnp.abs(out9 - ref_forward(x9, w1, b1, w2, b2))))
    assert err9 < 2e-4, f"mismatch vs reference (N=9): max abs err = {err9}"

    # larger batch -> GB > 1 (in-kernel group loop) with 2 parallel grid steps
    x64 = jax.random.normal(jax.random.PRNGKey(3), (64, C, H, W), jnp.float32)
    out64 = jax.block_until_ready(resconv_forward(x64, w1, b1, w2, b2))
    err64 = float(jnp.max(jnp.abs(out64 - ref_forward(x64, w1, b1, w2, b2))))
    assert err64 < 2e-4, f"mismatch vs reference (N=64): max abs err = {err64}"

    print("KERNEL_OK")
</pallas_src>

<mosaic_0001>
module attributes {stable_mosaic.version = 11 : i64} {
  func.func @resconv_kernel(%arg0: i32, %arg1: memref<1x4x16x128xf32, #tpu.memory_space<vmem>>, %arg2: memref<144xf32, #tpu.memory_space<smem>>, %arg3: memref<144xf32, #tpu.memory_space<smem>>, %arg4: memref<1x4x16x128xf32, #tpu.memory_space<vmem>>) attributes {dimension_semantics = [#tpu.dimension_semantics<parallel>], iteration_bounds = array<i64: 1>, scalar_prefetch = 0 : i64, scratch_operands = 0 : i64, tpu.core_type = #tpu.core_type<tc>, window_params = [{transform_indices = @transform_0, window_bounds = array<i64: 1, 4, 16, 128>}, {transform_indices = @transform_1, window_bounds = array<i64: 144>}, {transform_indices = @transform_2, window_bounds = array<i64: 144>}, {transform_indices = @transform_3, window_bounds = array<i64: 1, 4, 16, 128>}]} {
    %0 = tpu.iota {dimensions = array<i32: 0>} : vector<16x128xi32>
    %1 = tpu.iota {dimensions = array<i32: 1>} : vector<16x128xi32>
    %c16_i32 = arith.constant 16 : i32
    %c0_i32 = arith.constant 0 : i32
    %2 = arith.cmpi eq, %c16_i32, %c0_i32 : i32
    %c1_i32 = arith.constant 1 : i32
    %3 = arith.select %2, %c1_i32, %c16_i32 : i32
    %4 = vector.broadcast %3 : i32 to vector<16x128xi32>
    %5 = arith.remsi %1, %4 : vector<16x128xi32>
    %c0_i32_0 = arith.constant 0 : i32
    %6 = vector.broadcast %c0_i32_0 : i32 to vector<16x128xi32>
    %7 = arith.cmpi ne, %5, %6 : vector<16x128xi32>
    %c0_i32_1 = arith.constant 0 : i32
    %8 = vector.broadcast %c0_i32_1 : i32 to vector<16x128xi32>
    %9 = arith.cmpi slt, %5, %8 : vector<16x128xi32>
    %c0_i32_2 = arith.constant 0 : i32
    %10 = arith.cmpi slt, %3, %c0_i32_2 : i32
    %11 = vector.broadcast %10 : i1 to vector<16x128xi1>
    %12 = vector.broadcast %11 : vector<16x128xi1> to vector<16x128xi1>
    %13 = arith.xori %9, %12 : vector<16x128xi1>
    %14 = arith.andi %13, %7 : vector<16x128xi1>
    %15 = vector.broadcast %3 : i32 to vector<16x128xi32>
    %16 = arith.addi %5, %15 : vector<16x128xi32>
    %17 = arith.select %14, %16, %5 : vector<16x128xi1>, vector<16x128xi32>
    %c15_i32 = arith.constant 15 : i32
    %18 = vector.broadcast %c15_i32 : i32 to vector<16x128xi32>
    %19 = arith.cmpi slt, %0, %18 : vector<16x128xi32>
    %c0_i32_3 = arith.constant 0 : i32
    %20 = vector.broadcast %c0_i32_3 : i32 to vector<16x128xi32>
    %21 = arith.cmpi sgt, %0, %20 : vector<16x128xi32>
    %c15_i32_4 = arith.constant 15 : i32
    %22 = vector.broadcast %c15_i32_4 : i32 to vector<16x128xi32>
    %23 = arith.cmpi slt, %17, %22 : vector<16x128xi32>
    %c0_i32_5 = arith.constant 0 : i32
    %24 = vector.broadcast %c0_i32_5 : i32 to vector<16x128xi32>
    %25 = arith.cmpi sgt, %17, %24 : vector<16x128xi32>
    %26 = tpu.iota {dimensions = array<i32: 1>} : vector<1x128xi32>
    %c1_i32_6 = arith.constant 1 : i32
    %27 = vector.broadcast %c1_i32_6 : i32 to vector<1x128xi32>
    %28 = arith.andi %26, %27 : vector<1x128xi32>
    %c0_i32_7 = arith.constant 0 : i32
    %29 = vector.broadcast %c0_i32_7 : i32 to vector<1x128xi32>
    %30 = arith.cmpi eq, %28, %29 : vector<1x128xi32>
    %c2_i32 = arith.constant 2 : i32
    %31 = vector.broadcast %c2_i32 : i32 to vector<1x128xi32>
    %32 = arith.andi %26, %31 : vector<1x128xi32>
    %c0_i32_8 = arith.constant 0 : i32
    %33 = vector.broadcast %c0_i32_8 : i32 to vector<1x128xi32>
    %34 = arith.cmpi eq, %32, %33 : vector<1x128xi32>
    %c4_i32 = arith.constant 4 : i32
    %35 = vector.broadcast %c4_i32 : i32 to vector<1x128xi32>
    %36 = arith.andi %26, %35 : vector<1x128xi32>
    %c0_i32_9 = arith.constant 0 : i32
    %37 = vector.broadcast %c0_i32_9 : i32 to vector<1x128xi32>
    %38 = arith.cmpi eq, %36, %37 : vector<1x128xi32>
    %c8_i32 = arith.constant 8 : i32
    %39 = vector.broadcast %c8_i32 : i32 to vector<1x128xi32>
    %40 = arith.andi %26, %39 : vector<1x128xi32>
    %c0_i32_10 = arith.constant 0 : i32
    %41 = vector.broadcast %c0_i32_10 : i32 to vector<1x128xi32>
    %42 = arith.cmpi eq, %40, %41 : vector<1x128xi32>
    %c0 = arith.constant 0 : index
    %43 = memref.load %arg2[%c0] : memref<144xf32, #tpu.memory_space<smem>>
    %c1 = arith.constant 1 : index
    %44 = memref.load %arg2[%c1] : memref<144xf32, #tpu.memory_space<smem>>
    %c2 = arith.constant 2 : index
    %45 = memref.load %arg2[%c2] : memref<144xf32, #tpu.memory_space<smem>>
    %c3 = arith.constant 3 : index
    %46 = memref.load %arg2[%c3] : memref<144xf32, #tpu.memory_space<smem>>
    %c4 = arith.constant 4 : index
    %47 = memref.load %arg2[%c4] : memref<144xf32, #tpu.memory_space<smem>>
    %c5 = arith.constant 5 : index
    %48 = memref.load %arg2[%c5] : memref<144xf32, #tpu.memory_space<smem>>
    %c6 = arith.constant 6 : index
    %49 = memref.load %arg2[%c6] : memref<144xf32, #tpu.memory_space<smem>>
    %c7 = arith.constant 7 : index
    %50 = memref.load %arg2[%c7] : memref<144xf32, #tpu.memory_space<smem>>
    %c8 = arith.constant 8 : index
    %51 = memref.load %arg2[%c8] : memref<144xf32, #tpu.memory_space<smem>>
    %c9 = arith.constant 9 : index
    %52 = memref.load %arg2[%c9] : memref<144xf32, #tpu.memory_space<smem>>
    %c10 = arith.constant 10 : index
    %53 = memref.load %arg2[%c10] : memref<144xf32, #tpu.memory_space<smem>>
    %c11 = arith.constant 11 : index
    %54 = memref.load %arg2[%c11] : memref<144xf32, #tpu.memory_space<smem>>
    %c12 = arith.constant 12 : index
    %55 = memref.load %arg2[%c12] : memref<144xf32, #tpu.memory_space<smem>>
    %c13 = arith.constant 13 : index
    %56 = memref.load %arg2[%c13] : memref<144xf32, #tpu.memory_space<smem>>
    %c14 = arith.constant 14 : index
    %57 = memref.load %arg2[%c14] : memref<144xf32, #tpu.memory_space<smem>>
    %c15 = arith.constant 15 : index
    %58 = memref.load %arg2[%c15] : memref<144xf32, #tpu.memory_space<smem>>
    %c16 = arith.constant 16 : index
    %59 = memref.load %arg2[%c16] : memref<144xf32, #tpu.memory_space<smem>>
    %c17 = arith.constant 17 : index
    %60 = memref.load %arg2[%c17] : memref<144xf32, #tpu.memory_space<smem>>
    %c18 = arith.constant 18 : index
    %61 = memref.load %arg2[%c18] : memref<144xf32, #tpu.memory_space<smem>>
    %c19 = arith.constant 19 : index
    %62 = memref.load %arg2[%c19] : memref<144xf32, #tpu.memory_space<smem>>
    %c20 = arith.constant 20 : index
    %63 = memref.load %arg2[%c20] : memref<144xf32, #tpu.memory_space<smem>>
    %c21 = arith.constant 21 : index
    %64 = memref.load %arg2[%c21] : memref<144xf32, #tpu.memory_space<smem>>
    %c22 = arith.constant 22 : index
    %65 = memref.load %arg2[%c22] : memref<144xf32, #tpu.memory_space<smem>>
    %c23 = arith.constant 23 : index
    %66 = memref.load %arg2[%c23] : memref<144xf32, #tpu.memory_space<smem>>
    %c24 = arith.constant 24 : index
    %67 = memref.load %arg2[%c24] : memref<144xf32, #tpu.memory_space<smem>>
    %c25 = arith.constant 25 : index
    %68 = memref.load %arg2[%c25] : memref<144xf32, #tpu.memory_space<smem>>
    %c26 = arith.constant 26 : index
    %69 = memref.load %arg2[%c26] : memref<144xf32, #tpu.memory_space<smem>>
    %c27 = arith.constant 27 : index
    %70 = memref.load %arg2[%c27] : memref<144xf32, #tpu.memory_space<smem>>
    %c28 = arith.constant 28 : index
    %71 = memref.load %arg2[%c28] : memref<144xf32, #tpu.memory_space<smem>>
    %c29 = arith.constant 29 : index
    %72 = memref.load %arg2[%c29] : memref<144xf32, #tpu.memory_space<smem>>
    %c30 = arith.constant 30 : index
    %73 = memref.load %arg2[%c30] : memref<144xf32, #tpu.memory_space<smem>>
    %c31 = arith.constant 31 : index
    %74 = memref.load %arg2[%c31] : memref<144xf32, #tpu.memory_space<smem>>
    %c32 = arith.constant 32 : index
    %75 = memref.load %arg2[%c32] : memref<144xf32, #tpu.memory_space<smem>>
    %c33 = arith.constant 33 : index
    %76 = memref.load %arg2[%c33] : memref<144xf32, #tpu.memory_space<smem>>
    %c34 = arith.constant 34 : index
    %77 = memref.load %arg2[%c34] : memref<144xf32, #tpu.memory_space<smem>>
    %c35 = arith.constant 35 : index
    %78 = memref.load %arg2[%c35] : memref<144xf32, #tpu.memory_space<smem>>
    %c36 = arith.constant 36 : index
    %79 = memref.load %arg2[%c36] : memref<144xf32, #tpu.memory_space<smem>>
    %c37 = arith.constant 37 : index
    %80 = memref.load %arg2[%c37] : memref<144xf32, #tpu.memory_space<smem>>
    %c38 = arith.constant 38 : index
    %81 = memref.load %arg2[%c38] : memref<144xf32, #tpu.memory_space<smem>>
    %c39 = arith.constant 39 : index
    %82 = memref.load %arg2[%c39] : memref<144xf32, #tpu.memory_space<smem>>
    %c40 = arith.constant 40 : index
    %83 = memref.load %arg2[%c40] : memref<144xf32, #tpu.memory_space<smem>>
    %c41 = arith.constant 41 : index
    %84 = memref.load %arg2[%c41] : memref<144xf32, #tpu.memory_space<smem>>
    %c42 = arith.constant 42 : index
    %85 = memref.load %arg2[%c42] : memref<144xf32, #tpu.memory_space<smem>>
    %c43 = arith.constant 43 : index
    %86 = memref.load %arg2[%c43] : memref<144xf32, #tpu.memory_space<smem>>
    %c44 = arith.constant 44 : index
    %87 = memref.load %arg2[%c44] : memref<144xf32, #tpu.memory_space<smem>>
    %c45 = arith.constant 45 : index
    %88 = memref.load %arg2[%c45] : memref<144xf32, #tpu.memory_space<smem>>
    %c46 = arith.constant 46 : index
    %89 = memref.load %arg2[%c46] : memref<144xf32, #tpu.memory_space<smem>>
    %c47 = arith.constant 47 : index
    %90 = memref.load %arg2[%c47] : memref<144xf32, #tpu.memory_space<smem>>
    %c48 = arith.constant 48 : index
    %91 = memref.load %arg2[%c48] : memref<144xf32, #tpu.memory_space<smem>>
    %c49 = arith.constant 49 : index
    %92 = memref.load %arg2[%c49] : memref<144xf32, #tpu.memory_space<smem>>
    %c50 = arith.constant 50 : index
    %93 = memref.load %arg2[%c50] : memref<144xf32, #tpu.memory_space<smem>>
    %c51 = arith.constant 51 : index
    %94 = memref.load %arg2[%c51] : memref<144xf32, #tpu.memory_space<smem>>
    %c52 = arith.constant 52 : index
    %95 = memref.load %arg2[%c52] : memref<144xf32, #tpu.memory_space<smem>>
    %c53 = arith.constant 53 : index
    %96 = memref.load %arg2[%c53] : memref<144xf32, #tpu.memory_space<smem>>
    %c54 = arith.constant 54 : index
    %97 = memref.load %arg2[%c54] : memref<144xf32, #tpu.memory_space<smem>>
    %c55 = arith.constant 55 : index
    %98 = memref.load %arg2[%c55] : memref<144xf32, #tpu.memory_space<smem>>
    %c56 = arith.constant 56 : index
    %99 = memref.load %arg2[%c56] : memref<144xf32, #tpu.memory_space<smem>>
    %c57 = arith.constant 57 : index
    %100 = memref.load %arg2[%c57] : memref<144xf32, #tpu.memory_space<smem>>
    %c58 = arith.constant 58 : index
    %101 = memref.load %arg2[%c58] : memref<144xf32, #tpu.memory_space<smem>>
    %c59 = arith.constant 59 : index
    %102 = memref.load %arg2[%c59] : memref<144xf32, #tpu.memory_space<smem>>
    %c60 = arith.constant 60 : index
    %103 = memref.load %arg2[%c60] : memref<144xf32, #tpu.memory_space<smem>>
    %c61 = arith.constant 61 : index
    %104 = memref.load %arg2[%c61] : memref<144xf32, #tpu.memory_space<smem>>
    %c62 = arith.constant 62 : index
    %105 = memref.load %arg2[%c62] : memref<144xf32, #tpu.memory_space<smem>>
    %c63 = arith.constant 63 : index
    %106 = memref.load %arg2[%c63] : memref<144xf32, #tpu.memory_space<smem>>
    %c64 = arith.constant 64 : index
    %107 = memref.load %arg2[%c64] : memref<144xf32, #tpu.memory_space<smem>>
    %c65 = arith.constant 65 : index
    %108 = memref.load %arg2[%c65] : memref<144xf32, #tpu.memory_space<smem>>
    %c66 = arith.constant 66 : index
    %109 = memref.load %arg2[%c66] : memref<144xf32, #tpu.memory_space<smem>>
    %c67 = arith.constant 67 : index
    %110 = memref.load %arg2[%c67] : memref<144xf32, #tpu.memory_space<smem>>
    %c68 = arith.constant 68 : index
    %111 = memref.load %arg2[%c68] : memref<144xf32, #tpu.memory_space<smem>>
    %c69 = arith.constant 69 : index
    %112 = memref.load %arg2[%c69] : memref<144xf32, #tpu.memory_space<smem>>
    %c70 = arith.constant 70 : index
    %113 = memref.load %arg2[%c70] : memref<144xf32, #tpu.memory_space<smem>>
    %c71 = arith.constant 71 : index
    %114 = memref.load %arg2[%c71] : memref<144xf32, #tpu.memory_space<smem>>
    %c72 = arith.constant 72 : index
    %115 = memref.load %arg2[%c72] : memref<144xf32, #tpu.memory_space<smem>>
    %c73 = arith.constant 73 : index
    %116 = memref.load %arg2[%c73] : memref<144xf32, #tpu.memory_space<smem>>
    %c74 = arith.constant 74 : index
    %117 = memref.load %arg2[%c74] : memref<144xf32, #tpu.memory_space<smem>>
    %c75 = arith.constant 75 : index
    %118 = memref.load %arg2[%c75] : memref<144xf32, #tpu.memory_space<smem>>
    %c76 = arith.constant 76 : index
    %119 = memref.load %arg2[%c76] : memref<144xf32, #tpu.memory_space<smem>>
    %c77 = arith.constant 77 : index
    %120 = memref.load %arg2[%c77] : memref<144xf32, #tpu.memory_space<smem>>
    %c78 = arith.constant 78 : index
    %121 = memref.load %arg2[%c78] : memref<144xf32, #tpu.memory_space<smem>>
    %c79 = arith.constant 79 : index
    %122 = memref.load %arg2[%c79] : memref<144xf32, #tpu.memory_space<smem>>
    %c80 = arith.constant 80 : index
    %123 = memref.load %arg2[%c80] : memref<144xf32, #tpu.memory_space<smem>>
    %c81 = arith.constant 81 : index
    %124 = memref.load %arg2[%c81] : memref<144xf32, #tpu.memory_space<smem>>
    %c82 = arith.constant 82 : index
    %125 = memref.load %arg2[%c82] : memref<144xf32, #tpu.memory_space<smem>>
    %c83 = arith.constant 83 : index
    %126 = memref.load %arg2[%c83] : memref<144xf32, #tpu.memory_space<smem>>
    %c84 = arith.constant 84 : index
    %127 = memref.load %arg2[%c84] : memref<144xf32, #tpu.memory_space<smem>>
    %c85 = arith.constant 85 : index
    %128 = memref.load %arg2[%c85] : memref<144xf32, #tpu.memory_space<smem>>
    %c86 = arith.constant 86 : index
    %129 = memref.load %arg2[%c86] : memref<144xf32, #tpu.memory_space<smem>>
    %c87 = arith.constant 87 : index
    %130 = memref.load %arg2[%c87] : memref<144xf32, #tpu.memory_space<smem>>
    %c88 = arith.constant 88 : index
    %131 = memref.load %arg2[%c88] : memref<144xf32, #tpu.memory_space<smem>>
    %c89 = arith.constant 89 : index
    %132 = memref.load %arg2[%c89] : memref<144xf32, #tpu.memory_space<smem>>
    %c90 = arith.constant 90 : index
    %133 = memref.load %arg2[%c90] : memref<144xf32, #tpu.memory_space<smem>>
    %c91 = arith.constant 91 : index
    %134 = memref.load %arg2[%c91] : memref<144xf32, #tpu.memory_space<smem>>
    %c92 = arith.constant 92 : index
    %135 = memref.load %arg2[%c92] : memref<144xf32, #tpu.memory_space<smem>>
    %c93 = arith.constant 93 : index
    %136 = memref.load %arg2[%c93] : memref<144xf32, #tpu.memory_space<smem>>
    %c94 = arith.constant 94 : index
    %137 = memref.load %arg2[%c94] : memref<144xf32, #tpu.memory_space<smem>>
    %c95 = arith.constant 95 : index
    %138 = memref.load %arg2[%c95] : memref<144xf32, #tpu.memory_space<smem>>
    %c96 = arith.constant 96 : index
    %139 = memref.load %arg2[%c96] : memref<144xf32, #tpu.memory_space<smem>>
    %c97 = arith.constant 97 : index
    %140 = memref.load %arg2[%c97] : memref<144xf32, #tpu.memory_space<smem>>
    %c98 = arith.constant 98 : index
    %141 = memref.load %arg2[%c98] : memref<144xf32, #tpu.memory_space<smem>>
    %c99 = arith.constant 99 : index
    %142 = memref.load %arg2[%c99] : memref<144xf32, #tpu.memory_space<smem>>
    %c100 = arith.constant 100 : index
    %143 = memref.load %arg2[%c100] : memref<144xf32, #tpu.memory_space<smem>>
    %c101 = arith.constant 101 : index
    %144 = memref.load %arg2[%c101] : memref<144xf32, #tpu.memory_space<smem>>
    %c102 = arith.constant 102 : index
    %145 = memref.load %arg2[%c102] : memref<144xf32, #tpu.memory_space<smem>>
    %c103 = arith.constant 103 : index
    %146 = memref.load %arg2[%c103] : memref<144xf32, #tpu.memory_space<smem>>
    %c104 = arith.constant 104 : index
    %147 = memref.load %arg2[%c104] : memref<144xf32, #tpu.memory_space<smem>>
    %c105 = arith.constant 105 : index
    %148 = memref.load %arg2[%c105] : memref<144xf32, #tpu.memory_space<smem>>
    %c106 = arith.constant 106 : index
    %149 = memref.load %arg2[%c106] : memref<144xf32, #tpu.memory_space<smem>>
    %c107 = arith.constant 107 : index
    %150 = memref.load %arg2[%c107] : memref<144xf32, #tpu.memory_space<smem>>
    %c108 = arith.constant 108 : index
    %151 = memref.load %arg2[%c108] : memref<144xf32, #tpu.memory_space<smem>>
    %c109 = arith.constant 109 : index
    %152 = memref.load %arg2[%c109] : memref<144xf32, #tpu.memory_space<smem>>
    %c110 = arith.constant 110 : index
    %153 = memref.load %arg2[%c110] : memref<144xf32, #tpu.memory_space<smem>>
    %c111 = arith.constant 111 : index
    %154 = memref.load %arg2[%c111] : memref<144xf32, #tpu.memory_space<smem>>
    %c112 = arith.constant 112 : index
    %155 = memref.load %arg2[%c112] : memref<144xf32, #tpu.memory_space<smem>>
    %c113 = arith.constant 113 : index
    %156 = memref.load %arg2[%c113] : memref<144xf32, #tpu.memory_space<smem>>
    %c114 = arith.constant 114 : index
    %157 = memref.load %arg2[%c114] : memref<144xf32, #tpu.memory_space<smem>>
    %c115 = arith.constant 115 : index
    %158 = memref.load %arg2[%c115] : memref<144xf32, #tpu.memory_space<smem>>
    %c116 = arith.constant 116 : index
    %159 = memref.load %arg2[%c116] : memref<144xf32, #tpu.memory_space<smem>>
    %c117 = arith.constant 117 : index
    %160 = memref.load %arg2[%c117] : memref<144xf32, #tpu.memory_space<smem>>
    %c118 = arith.constant 118 : index
    %161 = memref.load %arg2[%c118] : memref<144xf32, #tpu.memory_space<smem>>
    %c119 = arith.constant 119 : index
    %162 = memref.load %arg2[%c119] : memref<144xf32, #tpu.memory_space<smem>>
    %c120 = arith.constant 120 : index
    %163 = memref.load %arg2[%c120] : memref<144xf32, #tpu.memory_space<smem>>
    %c121 = arith.constant 121 : index
    %164 = memref.load %arg2[%c121] : memref<144xf32, #tpu.memory_space<smem>>
    %c122 = arith.constant 122 : index
    %165 = memref.load %arg2[%c122] : memref<144xf32, #tpu.memory_space<smem>>
    %c123 = arith.constant 123 : index
    %166 = memref.load %arg2[%c123] : memref<144xf32, #tpu.memory_space<smem>>
    %c124 = arith.constant 124 : index
    %167 = memref.load %arg2[%c124] : memref<144xf32, #tpu.memory_space<smem>>
    %c125 = arith.constant 125 : index
    %168 = memref.load %arg2[%c125] : memref<144xf32, #tpu.memory_space<smem>>
    %c126 = arith.constant 126 : index
    %169 = memref.load %arg2[%c126] : memref<144xf32, #tpu.memory_space<smem>>
    %c127 = arith.constant 127 : index
    %170 = memref.load %arg2[%c127] : memref<144xf32, #tpu.memory_space<smem>>
    %c128 = arith.constant 128 : index
    %171 = memref.load %arg2[%c128] : memref<144xf32, #tpu.memory_space<smem>>
    %c129 = arith.constant 129 : index
    %172 = memref.load %arg2[%c129] : memref<144xf32, #tpu.memory_space<smem>>
    %c130 = arith.constant 130 : index
    %173 = memref.load %arg2[%c130] : memref<144xf32, #tpu.memory_space<smem>>
    %c131 = arith.constant 131 : index
    %174 = memref.load %arg2[%c131] : memref<144xf32, #tpu.memory_space<smem>>
    %c132 = arith.constant 132 : index
    %175 = memref.load %arg2[%c132] : memref<144xf32, #tpu.memory_space<smem>>
    %c133 = arith.constant 133 : index
    %176 = memref.load %arg2[%c133] : memref<144xf32, #tpu.memory_space<smem>>
    %c134 = arith.constant 134 : index
    %177 = memref.load %arg2[%c134] : memref<144xf32, #tpu.memory_space<smem>>
    %c135 = arith.constant 135 : index
    %178 = memref.load %arg2[%c135] : memref<144xf32, #tpu.memory_space<smem>>
    %c136 = arith.constant 136 : index
    %179 = memref.load %arg2[%c136] : memref<144xf32, #tpu.memory_space<smem>>
    %c137 = arith.constant 137 : index
    %180 = memref.load %arg2[%c137] : memref<144xf32, #tpu.memory_space<smem>>
    %c138 = arith.constant 138 : index
    %181 = memref.load %arg2[%c138] : memref<144xf32, #tpu.memory_space<smem>>
    %c139 = arith.constant 139 : index
    %182 = memref.load %arg2[%c139] : memref<144xf32, #tpu.memory_space<smem>>
    %c140 = arith.constant 140 : index
    %183 = memref.load %arg2[%c140] : memref<144xf32, #tpu.memory_space<smem>>
    %c141 = arith.constant 141 : index
    %184 = memref.load %arg2[%c141] : memref<144xf32, #tpu.memory_space<smem>>
    %c142 = arith.constant 142 : index
    %185 = memref.load %arg2[%c142] : memref<144xf32, #tpu.memory_space<smem>>
    %c143 = arith.constant 143 : index
    %186 = memref.load %arg2[%c143] : memref<144xf32, #tpu.memory_space<smem>>
    %c0_11 = arith.constant 0 : index
    %187 = memref.load %arg3[%c0_11] : memref<144xf32, #tpu.memory_space<smem>>
    %c1_12 = arith.constant 1 : index
    %188 = memref.load %arg3[%c1_12] : memref<144xf32, #tpu.memory_space<smem>>
    %c2_13 = arith.constant 2 : index
    %189 = memref.load %arg3[%c2_13] : memref<144xf32, #tpu.memory_space<smem>>
    %c3_14 = arith.constant 3 : index
    %190 = memref.load %arg3[%c3_14] : memref<144xf32, #tpu.memory_space<smem>>
    %c4_15 = arith.constant 4 : index
    %191 = memref.load %arg3[%c4_15] : memref<144xf32, #tpu.memory_space<smem>>
    %c5_16 = arith.constant 5 : index
    %192 = memref.load %arg3[%c5_16] : memref<144xf32, #tpu.memory_space<smem>>
    %c6_17 = arith.constant 6 : index
    %193 = memref.load %arg3[%c6_17] : memref<144xf32, #tpu.memory_space<smem>>
    %c7_18 = arith.constant 7 : index
    %194 = memref.load %arg3[%c7_18] : memref<144xf32, #tpu.memory_space<smem>>
    %c8_19 = arith.constant 8 : index
    %195 = memref.load %arg3[%c8_19] : memref<144xf32, #tpu.memory_space<smem>>
    %c9_20 = arith.constant 9 : index
    %196 = memref.load %arg3[%c9_20] : memref<144xf32, #tpu.memory_space<smem>>
    %c10_21 = arith.constant 10 : index
    %197 = memref.load %arg3[%c10_21] : memref<144xf32, #tpu.memory_space<smem>>
    %c11_22 = arith.constant 11 : index
    %198 = memref.load %arg3[%c11_22] : memref<144xf32, #tpu.memory_space<smem>>
    %c12_23 = arith.constant 12 : index
    %199 = memref.load %arg3[%c12_23] : memref<144xf32, #tpu.memory_space<smem>>
    %c13_24 = arith.constant 13 : index
    %200 = memref.load %arg3[%c13_24] : memref<144xf32, #tpu.memory_space<smem>>
    %c14_25 = arith.constant 14 : index
    %201 = memref.load %arg3[%c14_25] : memref<144xf32, #tpu.memory_space<smem>>
    %c15_26 = arith.constant 15 : index
    %202 = memref.load %arg3[%c15_26] : memref<144xf32, #tpu.memory_space<smem>>
    %c16_27 = arith.constant 16 : index
    %203 = memref.load %arg3[%c16_27] : memref<144xf32, #tpu.memory_space<smem>>
    %c17_28 = arith.constant 17 : index
    %204 = memref.load %arg3[%c17_28] : memref<144xf32, #tpu.memory_space<smem>>
    %c18_29 = arith.constant 18 : index
    %205 = memref.load %arg3[%c18_29] : memref<144xf32, #tpu.memory_space<smem>>
    %c19_30 = arith.constant 19 : index
    %206 = memref.load %arg3[%c19_30] : memref<144xf32, #tpu.memory_space<smem>>
    %c20_31 = arith.constant 20 : index
    %207 = memref.load %arg3[%c20_31] : memref<144xf32, #tpu.memory_space<smem>>
    %c21_32 = arith.constant 21 : index
    %208 = memref.load %arg3[%c21_32] : memref<144xf32, #tpu.memory_space<smem>>
    %c22_33 = arith.constant 22 : index
    %209 = memref.load %arg3[%c22_33] : memref<144xf32, #tpu.memory_space<smem>>
    %c23_34 = arith.constant 23 : index
    %210 = memref.load %arg3[%c23_34] : memref<144xf32, #tpu.memory_space<smem>>
    %c24_35 = arith.constant 24 : index
    %211 = memref.load %arg3[%c24_35] : memref<144xf32, #tpu.memory_space<smem>>
    %c25_36 = arith.constant 25 : index
    %212 = memref.load %arg3[%c25_36] : memref<144xf32, #tpu.memory_space<smem>>
    %c26_37 = arith.constant 26 : index
    %213 = memref.load %arg3[%c26_37] : memref<144xf32, #tpu.memory_space<smem>>
    %c27_38 = arith.constant 27 : index
    %214 = memref.load %arg3[%c27_38] : memref<144xf32, #tpu.memory_space<smem>>
    %c28_39 = arith.constant 28 : index
    %215 = memref.load %arg3[%c28_39] : memref<144xf32, #tpu.memory_space<smem>>
    %c29_40 = arith.constant 29 : index
    %216 = memref.load %arg3[%c29_40] : memref<144xf32, #tpu.memory_space<smem>>
    %c30_41 = arith.constant 30 : index
    %217 = memref.load %arg3[%c30_41] : memref<144xf32, #tpu.memory_space<smem>>
    %c31_42 = arith.constant 31 : index
    %218 = memref.load %arg3[%c31_42] : memref<144xf32, #tpu.memory_space<smem>>
    %c32_43 = arith.constant 32 : index
    %219 = memref.load %arg3[%c32_43] : memref<144xf32, #tpu.memory_space<smem>>
    %c33_44 = arith.constant 33 : index
    %220 = memref.load %arg3[%c33_44] : memref<144xf32, #tpu.memory_space<smem>>
    %c34_45 = arith.constant 34 : index
    %221 = memref.load %arg3[%c34_45] : memref<144xf32, #tpu.memory_space<smem>>
    %c35_46 = arith.constant 35 : index
    %222 = memref.load %arg3[%c35_46] : memref<144xf32, #tpu.memory_space<smem>>
    %c36_47 = arith.constant 36 : index
    %223 = memref.load %arg3[%c36_47] : memref<144xf32, #tpu.memory_space<smem>>
    %c37_48 = arith.constant 37 : index
    %224 = memref.load %arg3[%c37_48] : memref<144xf32, #tpu.memory_space<smem>>
    %c38_49 = arith.constant 38 : index
    %225 = memref.load %arg3[%c38_49] : memref<144xf32, #tpu.memory_space<smem>>
    %c39_50 = arith.constant 39 : index
    %226 = memref.load %arg3[%c39_50] : memref<144xf32, #tpu.memory_space<smem>>
    %c40_51 = arith.constant 40 : index
    %227 = memref.load %arg3[%c40_51] : memref<144xf32, #tpu.memory_space<smem>>
    %c41_52 = arith.constant 41 : index
    %228 = memref.load %arg3[%c41_52] : memref<144xf32, #tpu.memory_space<smem>>
    %c42_53 = arith.constant 42 : index
    %229 = memref.load %arg3[%c42_53] : memref<144xf32, #tpu.memory_space<smem>>
    %c43_54 = arith.constant 43 : index
    %230 = memref.load %arg3[%c43_54] : memref<144xf32, #tpu.memory_space<smem>>
    %c44_55 = arith.constant 44 : index
    %231 = memref.load %arg3[%c44_55] : memref<144xf32, #tpu.memory_space<smem>>
    %c45_56 = arith.constant 45 : index
    %232 = memref.load %arg3[%c45_56] : memref<144xf32, #tpu.memory_space<smem>>
    %c46_57 = arith.constant 46 : index
    %233 = memref.load %arg3[%c46_57] : memref<144xf32, #tpu.memory_space<smem>>
    %c47_58 = arith.constant 47 : index
    %234 = memref.load %arg3[%c47_58] : memref<144xf32, #tpu.memory_space<smem>>
    %c48_59 = arith.constant 48 : index
    %235 = memref.load %arg3[%c48_59] : memref<144xf32, #tpu.memory_space<smem>>
    %c49_60 = arith.constant 49 : index
    %236 = memref.load %arg3[%c49_60] : memref<144xf32, #tpu.memory_space<smem>>
    %c50_61 = arith.constant 50 : index
    %237 = memref.load %arg3[%c50_61] : memref<144xf32, #tpu.memory_space<smem>>
    %c51_62 = arith.constant 51 : index
    %238 = memref.load %arg3[%c51_62] : memref<144xf32, #tpu.memory_space<smem>>
    %c52_63 = arith.constant 52 : index
    %239 = memref.load %arg3[%c52_63] : memref<144xf32, #tpu.memory_space<smem>>
    %c53_64 = arith.constant 53 : index
    %240 = memref.load %arg3[%c53_64] : memref<144xf32, #tpu.memory_space<smem>>
    %c54_65 = arith.constant 54 : index
    %241 = memref.load %arg3[%c54_65] : memref<144xf32, #tpu.memory_space<smem>>
    %c55_66 = arith.constant 55 : index
    %242 = memref.load %arg3[%c55_66] : memref<144xf32, #tpu.memory_space<smem>>
    %c56_67 = arith.constant 56 : index
    %243 = memref.load %arg3[%c56_67] : memref<144xf32, #tpu.memory_space<smem>>
    %c57_68 = arith.constant 57 : index
    %244 = memref.load %arg3[%c57_68] : memref<144xf32, #tpu.memory_space<smem>>
    %c58_69 = arith.constant 58 : index
    %245 = memref.load %arg3[%c58_69] : memref<144xf32, #tpu.memory_space<smem>>
    %c59_70 = arith.constant 59 : index
    %246 = memref.load %arg3[%c59_70] : memref<144xf32, #tpu.memory_space<smem>>
    %c60_71 = arith.constant 60 : index
    %247 = memref.load %arg3[%c60_71] : memref<144xf32, #tpu.memory_space<smem>>
    %c61_72 = arith.constant 61 : index
    %248 = memref.load %arg3[%c61_72] : memref<144xf32, #tpu.memory_space<smem>>
    %c62_73 = arith.constant 62 : index
    %249 = memref.load %arg3[%c62_73] : memref<144xf32, #tpu.memory_space<smem>>
    %c63_74 = arith.constant 63 : index
    %250 = memref.load %arg3[%c63_74] : memref<144xf32, #tpu.memory_space<smem>>
    %c64_75 = arith.constant 64 : index
    %251 = memref.load %arg3[%c64_75] : memref<144xf32, #tpu.memory_space<smem>>
    %c65_76 = arith.constant 65 : index
    %252 = memref.load %arg3[%c65_76] : memref<144xf32, #tpu.memory_space<smem>>
    %c66_77 = arith.constant 66 : index
    %253 = memref.load %arg3[%c66_77] : memref<144xf32, #tpu.memory_space<smem>>
    %c67_78 = arith.constant 67 : index
    %254 = memref.load %arg3[%c67_78] : memref<144xf32, #tpu.memory_space<smem>>
    %c68_79 = arith.constant 68 : index
    %255 = memref.load %arg3[%c68_79] : memref<144xf32, #tpu.memory_space<smem>>
    %c69_80 = arith.constant 69 : index
    %256 = memref.load %arg3[%c69_80] : memref<144xf32, #tpu.memory_space<smem>>
    %c70_81 = arith.constant 70 : index
    %257 = memref.load %arg3[%c70_81] : memref<144xf32, #tpu.memory_space<smem>>
    %c71_82 = arith.constant 71 : index
    %258 = memref.load %arg3[%c71_82] : memref<144xf32, #tpu.memory_space<smem>>
    %c72_83 = arith.constant 72 : index
    %259 = memref.load %arg3[%c72_83] : memref<144xf32, #tpu.memory_space<smem>>
    %c73_84 = arith.constant 73 : index
    %260 = memref.load %arg3[%c73_84] : memref<144xf32, #tpu.memory_space<smem>>
    %c74_85 = arith.constant 74 : index
    %261 = memref.load %arg3[%c74_85] : memref<144xf32, #tpu.memory_space<smem>>
    %c75_86 = arith.constant 75 : index
    %262 = memref.load %arg3[%c75_86] : memref<144xf32, #tpu.memory_space<smem>>
    %c76_87 = arith.constant 76 : index
    %263 = memref.load %arg3[%c76_87] : memref<144xf32, #tpu.memory_space<smem>>
    %c77_88 = arith.constant 77 : index
    %264 = memref.load %arg3[%c77_88] : memref<144xf32, #tpu.memory_space<smem>>
    %c78_89 = arith.constant 78 : index
    %265 = memref.load %arg3[%c78_89] : memref<144xf32, #tpu.memory_space<smem>>
    %c79_90 = arith.constant 79 : index
    %266 = memref.load %arg3[%c79_90] : memref<144xf32, #tpu.memory_space<smem>>
    %c80_91 = arith.constant 80 : index
    %267 = memref.load %arg3[%c80_91] : memref<144xf32, #tpu.memory_space<smem>>
    %c81_92 = arith.constant 81 : index
    %268 = memref.load %arg3[%c81_92] : memref<144xf32, #tpu.memory_space<smem>>
    %c82_93 = arith.constant 82 : index
    %269 = memref.load %arg3[%c82_93] : memref<144xf32, #tpu.memory_space<smem>>
    %c83_94 = arith.constant 83 : index
    %270 = memref.load %arg3[%c83_94] : memref<144xf32, #tpu.memory_space<smem>>
    %c84_95 = arith.constant 84 : index
    %271 = memref.load %arg3[%c84_95] : memref<144xf32, #tpu.memory_space<smem>>
    %c85_96 = arith.constant 85 : index
    %272 = memref.load %arg3[%c85_96] : memref<144xf32, #tpu.memory_space<smem>>
    %c86_97 = arith.constant 86 : index
    %273 = memref.load %arg3[%c86_97] : memref<144xf32, #tpu.memory_space<smem>>
    %c87_98 = arith.constant 87 : index
    %274 = memref.load %arg3[%c87_98] : memref<144xf32, #tpu.memory_space<smem>>
    %c88_99 = arith.constant 88 : index
    %275 = memref.load %arg3[%c88_99] : memref<144xf32, #tpu.memory_space<smem>>
    %c89_100 = arith.constant 89 : index
    %276 = memref.load %arg3[%c89_100] : memref<144xf32, #tpu.memory_space<smem>>
    %c90_101 = arith.constant 90 : index
    %277 = memref.load %arg3[%c90_101] : memref<144xf32, #tpu.memory_space<smem>>
    %c91_102 = arith.constant 91 : index
    %278 = memref.load %arg3[%c91_102] : memref<144xf32, #tpu.memory_space<smem>>
    %c92_103 = arith.constant 92 : index
    %279 = memref.load %arg3[%c92_103] : memref<144xf32, #tpu.memory_space<smem>>
    %c93_104 = arith.constant 93 : index
    %280 = memref.load %arg3[%c93_104] : memref<144xf32, #tpu.memory_space<smem>>
    %c94_105 = arith.constant 94 : index
    %281 = memref.load %arg3[%c94_105] : memref<144xf32, #tpu.memory_space<smem>>
    %c95_106 = arith.constant 95 : index
    %282 = memref.load %arg3[%c95_106] : memref<144xf32, #tpu.memory_space<smem>>
    %c96_107 = arith.constant 96 : index
    %283 = memref.load %arg3[%c96_107] : memref<144xf32, #tpu.memory_space<smem>>
    %c97_108 = arith.constant 97 : index
    %284 = memref.load %arg3[%c97_108] : memref<144xf32, #tpu.memory_space<smem>>
    %c98_109 = arith.constant 98 : index
    %285 = memref.load %arg3[%c98_109] : memref<144xf32, #tpu.memory_space<smem>>
    %c99_110 = arith.constant 99 : index
    %286 = memref.load %arg3[%c99_110] : memref<144xf32, #tpu.memory_space<smem>>
    %c100_111 = arith.constant 100 : index
    %287 = memref.load %arg3[%c100_111] : memref<144xf32, #tpu.memory_space<smem>>
    %c101_112 = arith.constant 101 : index
    %288 = memref.load %arg3[%c101_112] : memref<144xf32, #tpu.memory_space<smem>>
    %c102_113 = arith.constant 102 : index
    %289 = memref.load %arg3[%c102_113] : memref<144xf32, #tpu.memory_space<smem>>
    %c103_114 = arith.constant 103 : index
    %290 = memref.load %arg3[%c103_114] : memref<144xf32, #tpu.memory_space<smem>>
    %c104_115 = arith.constant 104 : index
    %291 = memref.load %arg3[%c104_115] : memref<144xf32, #tpu.memory_space<smem>>
    %c105_116 = arith.constant 105 : index
    %292 = memref.load %arg3[%c105_116] : memref<144xf32, #tpu.memory_space<smem>>
    %c106_117 = arith.constant 106 : index
    %293 = memref.load %arg3[%c106_117] : memref<144xf32, #tpu.memory_space<smem>>
    %c107_118 = arith.constant 107 : index
    %294 = memref.load %arg3[%c107_118] : memref<144xf32, #tpu.memory_space<smem>>
    %c108_119 = arith.constant 108 : index
    %295 = memref.load %arg3[%c108_119] : memref<144xf32, #tpu.memory_space<smem>>
    %c109_120 = arith.constant 109 : index
    %296 = memref.load %arg3[%c109_120] : memref<144xf32, #tpu.memory_space<smem>>
    %c110_121 = arith.constant 110 : index
    %297 = memref.load %arg3[%c110_121] : memref<144xf32, #tpu.memory_space<smem>>
    %c111_122 = arith.constant 111 : index
    %298 = memref.load %arg3[%c111_122] : memref<144xf32, #tpu.memory_space<smem>>
    %c112_123 = arith.constant 112 : index
    %299 = memref.load %arg3[%c112_123] : memref<144xf32, #tpu.memory_space<smem>>
    %c113_124 = arith.constant 113 : index
    %300 = memref.load %arg3[%c113_124] : memref<144xf32, #tpu.memory_space<smem>>
    %c114_125 = arith.constant 114 : index
    %301 = memref.load %arg3[%c114_125] : memref<144xf32, #tpu.memory_space<smem>>
    %c115_126 = arith.constant 115 : index
    %302 = memref.load %arg3[%c115_126] : memref<144xf32, #tpu.memory_space<smem>>
    %c116_127 = arith.constant 116 : index
    %303 = memref.load %arg3[%c116_127] : memref<144xf32, #tpu.memory_space<smem>>
    %c117_128 = arith.constant 117 : index
    %304 = memref.load %arg3[%c117_128] : memref<144xf32, #tpu.memory_space<smem>>
    %c118_129 = arith.constant 118 : index
    %305 = memref.load %arg3[%c118_129] : memref<144xf32, #tpu.memory_space<smem>>
    %c119_130 = arith.constant 119 : index
    %306 = memref.load %arg3[%c119_130] : memref<144xf32, #tpu.memory_space<smem>>
    %c120_131 = arith.constant 120 : index
    %307 = memref.load %arg3[%c120_131] : memref<144xf32, #tpu.memory_space<smem>>
    %c121_132 = arith.constant 121 : index
    %308 = memref.load %arg3[%c121_132] : memref<144xf32, #tpu.memory_space<smem>>
    %c122_133 = arith.constant 122 : index
    %309 = memref.load %arg3[%c122_133] : memref<144xf32, #tpu.memory_space<smem>>
    %c123_134 = arith.constant 123 : index
    %310 = memref.load %arg3[%c123_134] : memref<144xf32, #tpu.memory_space<smem>>
    %c124_135 = arith.constant 124 : index
    %311 = memref.load %arg3[%c124_135] : memref<144xf32, #tpu.memory_space<smem>>
    %c125_136 = arith.constant 125 : index
    %312 = memref.load %arg3[%c125_136] : memref<144xf32, #tpu.memory_space<smem>>
    %c126_137 = arith.constant 126 : index
    %313 = memref.load %arg3[%c126_137] : memref<144xf32, #tpu.memory_space<smem>>
    %c127_138 = arith.constant 127 : index
    %314 = memref.load %arg3[%c127_138] : memref<144xf32, #tpu.memory_space<smem>>
    %c128_139 = arith.constant 128 : index
    %315 = memref.load %arg3[%c128_139] : memref<144xf32, #tpu.memory_space<smem>>
    %c129_140 = arith.constant 129 : index
    %316 = memref.load %arg3[%c129_140] : memref<144xf32, #tpu.memory_space<smem>>
    %c130_141 = arith.constant 130 : index
    %317 = memref.load %arg3[%c130_141] : memref<144xf32, #tpu.memory_space<smem>>
    %c131_142 = arith.constant 131 : index
    %318 = memref.load %arg3[%c131_142] : memref<144xf32, #tpu.memory_space<smem>>
    %c132_143 = arith.constant 132 : index
    %319 = memref.load %arg3[%c132_143] : memref<144xf32, #tpu.memory_space<smem>>
    %c133_144 = arith.constant 133 : index
    %320 = memref.load %arg3[%c133_144] : memref<144xf32, #tpu.memory_space<smem>>
    %c134_145 = arith.constant 134 : index
    %321 = memref.load %arg3[%c134_145] : memref<144xf32, #tpu.memory_space<smem>>
    %c135_146 = arith.constant 135 : index
    %322 = memref.load %arg3[%c135_146] : memref<144xf32, #tpu.memory_space<smem>>
    %c136_147 = arith.constant 136 : index
    %323 = memref.load %arg3[%c136_147] : memref<144xf32, #tpu.memory_space<smem>>
    %c137_148 = arith.constant 137 : index
    %324 = memref.load %arg3[%c137_148] : memref<144xf32, #tpu.memory_space<smem>>
    %c138_149 = arith.constant 138 : index
    %325 = memref.load %arg3[%c138_149] : memref<144xf32, #tpu.memory_space<smem>>
    %c139_150 = arith.constant 139 : index
    %326 = memref.load %arg3[%c139_150] : memref<144xf32, #tpu.memory_space<smem>>
    %c140_151 = arith.constant 140 : index
    %327 = memref.load %arg3[%c140_151] : memref<144xf32, #tpu.memory_space<smem>>
    %c141_152 = arith.constant 141 : index
    %328 = memref.load %arg3[%c141_152] : memref<144xf32, #tpu.memory_space<smem>>
    %c142_153 = arith.constant 142 : index
    %329 = memref.load %arg3[%c142_153] : memref<144xf32, #tpu.memory_space<smem>>
    %c143_154 = arith.constant 143 : index
    %330 = memref.load %arg3[%c143_154] : memref<144xf32, #tpu.memory_space<smem>>
    %c0_155 = arith.constant 0 : index
    %c0_156 = arith.constant 0 : index
    %c0_157 = arith.constant 0 : index
    %c0_158 = arith.constant 0 : index
    %331 = vector.load %arg1[%c0_155, %c0_156, %c0_157, %c0_158] : memref<1x4x16x128xf32, #tpu.memory_space<vmem>>, vector<1x1x16x128xf32>
    %332 = vector.shape_cast %331 : vector<1x1x16x128xf32> to vector<16x128xf32>
    %c0_159 = arith.constant 0 : index
    %c1_160 = arith.constant 1 : index
    %c0_161 = arith.constant 0 : index
    %c0_162 = arith.constant 0 : index
    %333 = vector.load %arg1[%c0_159, %c1_160, %c0_161, %c0_162] : memref<1x4x16x128xf32, #tpu.memory_space<vmem>>, vector<1x1x16x128xf32>
    %334 = vector.shape_cast %333 : vector<1x1x16x128xf32> to vector<16x128xf32>
    %c0_163 = arith.constant 0 : index
    %c2_164 = arith.constant 2 : index
    %c0_165 = arith.constant 0 : index
    %c0_166 = arith.constant 0 : index
    %335 = vector.load %arg1[%c0_163, %c2_164, %c0_165, %c0_166] : memref<1x4x16x128xf32, #tpu.memory_space<vmem>>, vector<1x1x16x128xf32>
    %336 = vector.shape_cast %335 : vector<1x1x16x128xf32> to vector<16x128xf32>
    %c0_167 = arith.constant 0 : index
    %c3_168 = arith.constant 3 : index
    %c0_169 = arith.constant 0 : index
    %c0_170 = arith.constant 0 : index
    %337 = vector.load %arg1[%c0_167, %c3_168, %c0_169, %c0_170] : memref<1x4x16x128xf32, #tpu.memory_space<vmem>>, vector<1x1x16x128xf32>
    %338 = vector.shape_cast %337 : vector<1x1x16x128xf32> to vector<16x128xf32>
    %cst = arith.constant 0.000000e+00 : f32
    %339 = vector.broadcast %cst : f32 to vector<16x128xf32>
    %cst_171 = arith.constant 0.000000e+00 : f32
    %340 = vector.broadcast %cst_171 : f32 to vector<16x128xf32>
    %cst_172 = arith.constant 0.000000e+00 : f32
    %341 = vector.broadcast %cst_172 : f32 to vector<16x128xf32>
    %cst_173 = arith.constant 0.000000e+00 : f32
    %342 = vector.broadcast %cst_173 : f32 to vector<16x128xf32>
    %c1_i32_174 = arith.constant 1 : i32
    %343 = tpu.dynamic_rotate %332 by %c1_i32_174 dim 0 : vector<16x128xf32>, i32 -> vector<16x128xf32>
    %cst_175 = arith.constant 0.000000e+00 : f32
    %344 = vector.broadcast %cst_175 : f32 to vector<16x128xf32>
    %345 = arith.select %21, %343, %344 : vector<16x128xi1>, vector<16x128xf32>
    %c1_i32_176 = arith.constant 1 : i32
    %346 = tpu.dynamic_rotate %334 by %c1_i32_176 dim 0 : vector<16x128xf32>, i32 -> vector<16x128xf32>
    %cst_177 = arith.constant 0.000000e+00 : f32
    %347 = vector.broadcast %cst_177 : f32 to vector<16x128xf32>
    %348 = arith.select %21, %346, %347 : vector<16x128xi1>, vector<16x128xf32>
    %c1_i32_178 = arith.constant 1 : i32
    %349 = tpu.dynamic_rotate %336 by %c1_i32_178 dim 0 : vector<16x128xf32>, i32 -> vector<16x128xf32>
    %cst_179 = arith.constant 0.000000e+00 : f32
    %350 = vector.broadcast %cst_179 : f32 to vector<16x128xf32>
    %351 = arith.select %21, %349, %350 : vector<16x128xi1>, vector<16x128xf32>
    %c1_i32_180 = arith.constant 1 : i32
    %352 = tpu.dynamic_rotate %338 by %c1_i32_180 dim 0 : vector<16x128xf32>, i32 -> vector<16x128xf32>
    %cst_181 = arith.constant 0.000000e+00 : f32
    %353 = vector.broadcast %cst_181 : f32 to vector<16x128xf32>
    %354 = arith.select %21, %352, %353 : vector<16x128xi1>, vector<16x128xf32>
    %c1_i32_182 = arith.constant 1 : i32
    %355 = tpu.dynamic_rotate %345 by %c1_i32_182 dim 1 : vector<16x128xf32>, i32 -> vector<16x128xf32>
    %cst_183 = arith.constant 0.000000e+00 : f32
    %356 = vector.broadcast %cst_183 : f32 to vector<16x128xf32>
    %357 = arith.select %25, %355, %356 : vector<16x128xi1>, vector<16x128xf32>
    %358 = vector.broadcast %43 : f32 to vector<16x128xf32>
    %359 = arith.mulf %358, %357 : vector<16x128xf32>
    %360 = arith.addf %339, %359 : vector<16x128xf32>
    %361 = vector.broadcast %79 : f32 to vector<16x128xf32>
    %362 = arith.mulf %361, %357 : vector<16x128xf32>
    %363 = arith.addf %340, %362 : vector<16x128xf32>
    %364 = vector.broadcast %115 : f32 to vector<16x128xf32>
    %365 = arith.mulf %364, %357 : vector<16x128xf32>
    %366 = arith.addf %341, %365 : vector<16x128xf32>
    %367 = vector.broadcast %151 : f32 to vector<16x128xf32>
    %368 = arith.mulf %367, %357 : vector<16x128xf32>
    %369 = arith.addf %342, %368 : vector<16x128xf32>
    %c1_i32_184 = arith.constant 1 : i32
    %370 = tpu.dynamic_rotate %348 by %c1_i32_184 dim 1 : vector<16x128xf32>, i32 -> vector<16x128xf32>
    %cst_185 = arith.constant 0.000000e+00 : f32
    %371 = vector.broadcast %cst_185 : f32 to vector<16x128xf32>
    %372 = arith.select %25, %370, %371 : vector<16x128xi1>, vector<16x128xf32>
    %373 = vector.broadcast %52 : f32 to vector<16x128xf32>
    %374 = arith.mulf %373, %372 : vector<16x128xf32>
    %375 = arith.addf %360, %374 : vector<16x128xf32>
    %376 = vector.broadcast %88 : f32 to vector<16x128xf32>
    %377 = arith.mulf %376, %372 : vector<16x128xf32>
    %378 = arith.addf %363, %377 : vector<16x128xf32>
    %379 = vector.broadcast %124 : f32 to vector<16x128xf32>
    %380 = arith.mulf %379, %372 : vector<16x128xf32>
    %381 = arith.addf %366, %380 : vector<16x128xf32>
    %382 = vector.broadcast %160 : f32 to vector<16x128xf32>
    %383 = arith.mulf %382, %372 : vector<16x128xf32>
    %384 = arith.addf %369, %383 : vector<16x128xf32>
    %c1_i32_186 = arith.constant 1 : i32
    %385 = tpu.dynamic_rotate %351 by %c1_i32_186 dim 1 : vector<16x128xf32>, i32 -> vector<16x128xf32>
    %cst_187 = arith.constant 0.000000e+00 : f32
    %386 = vector.broadcast %cst_187 : f32 to vector<16x128xf32>
    %387 = arith.select %25, %385, %386 : vector<16x128xi1>, vector<16x128xf32>
    %388 = vector.broadcast %61 : f32 to vector<16x128xf32>
    %389 = arith.mulf %388, %387 : vector<16x128xf32>
    %390 = arith.addf %375, %389 : vector<16x128xf32>
    %391 = vector.broadcast %97 : f32 to vector<16x128xf32>
    %392 = arith.mulf %391, %387 : vector<16x128xf32>
    %393 = arith.addf %378, %392 : vector<16x128xf32>
    %394 = vector.broadcast %133 : f32 to vector<16x128xf32>
    %395 = arith.mulf %394, %387 : vector<16x128xf32>
    %396 = arith.addf %381, %395 : vector<16x128xf32>
    %397 = vector.broadcast %169 : f32 to vector<16x128xf32>
    %398 = arith.mulf %397, %387 : vector<16x128xf32>
    %399 = arith.addf %384, %398 : vector<16x128xf32>
    %c1_i32_188 = arith.constant 1 : i32
    %400 = tpu.dynamic_rotate %354 by %c1_i32_188 dim 1 : vector<16x128xf32>, i32 -> vector<16x128xf32>
    %cst_189 = arith.constant 0.000000e+00 : f32
    %401 = vector.broadcast %cst_189 : f32 to vector<16x128xf32>
    %402 = arith.select %25, %400, %401 : vector<16x128xi1>, vector<16x128xf32>
    %403 = vector.broadcast %70 : f32 to vector<16x128xf32>
    %404 = arith.mulf %403, %402 : vector<16x128xf32>
    %405 = arith.addf %390, %404 : vector<16x128xf32>
    %406 = vector.broadcast %106 : f32 to vector<16x128xf32>
    %407 = arith.mulf %406, %402 : vector<16x128xf32>
    %408 = arith.addf %393, %407 : vector<16x128xf32>
    %409 = vector.broadcast %142 : f32 to vector<16x128xf32>
    %410 = arith.mulf %409, %402 : vector<16x128xf32>
    %411 = arith.addf %396, %410 : vector<16x128xf32>
    %412 = vector.broadcast %178 : f32 to vector<16x128xf32>
    %413 = arith.mulf %412, %402 : vector<16x128xf32>
    %414 = arith.addf %399, %413 : vector<16x128xf32>
    %415 = vector.broadcast %44 : f32 to vector<16x128xf32>
    %416 = arith.mulf %415, %345 : vector<16x128xf32>
    %417 = arith.addf %405, %416 : vector<16x128xf32>
    %418 = vector.broadcast %80 : f32 to vector<16x128xf32>
    %419 = arith.mulf %418, %345 : vector<16x128xf32>
    %420 = arith.addf %408, %419 : vector<16x128xf32>
    %421 = vector.broadcast %116 : f32 to vector<16x128xf32>
    %422 = arith.mulf %421, %345 : vector<16x128xf32>
    %423 = arith.addf %411, %422 : vector<16x128xf32>
    %424 = vector.broadcast %152 : f32 to vector<16x128xf32>
    %425 = arith.mulf %424, %345 : vector<16x128xf32>
    %426 = arith.addf %414, %425 : vector<16x128xf32>
    %427 = vector.broadcast %53 : f32 to vector<16x128xf32>
    %428 = arith.mulf %427, %348 : vector<16x128xf32>
    %429 = arith.addf %417, %428 : vector<16x128xf32>
    %430 = vector.broadcast %89 : f32 to vector<16x128xf32>
    %431 = arith.mulf %430, %348 : vector<16x128xf32>
    %432 = arith.addf %420, %431 : vector<16x128xf32>
    %433 = vector.broadcast %125 : f32 to vector<16x128xf32>
    %434 = arith.mulf %433, %348 : vector<16x128xf32>
    %435 = arith.addf %423, %434 : vector<16x128xf32>
    %436 = vector.broadcast %161 : f32 to vector<16x128xf32>
    %437 = arith.mulf %436, %348 : vector<16x128xf32>
    %438 = arith.addf %426, %437 : vector<16x128xf32>
    %439 = vector.broadcast %62 : f32 to vector<16x128xf32>
    %440 = arith.mulf %439, %351 : vector<16x128xf32>
    %441 = arith.addf %429, %440 : vector<16x128xf32>
    %442 = vector.broadcast %98 : f32 to vector<16x128xf32>
    %443 = arith.mulf %442, %351 : vector<16x128xf32>
    %444 = arith.addf %432, %443 : vector<16x128xf32>
    %445 = vector.broadcast %134 : f32 to vector<16x128xf32>
    %446 = arith.mulf %445, %351 : vector<16x128xf32>
    %447 = arith.addf %435, %446 : vector<16x128xf32>
    %448 = vector.broadcast %170 : f32 to vector<16x128xf32>
    %449 = arith.mulf %448, %351 : vector<16x128xf32>
    %450 = arith.addf %438, %449 : vector<16x128xf32>
    %451 = vector.broadcast %71 : f32 to vector<16x128xf32>
    %452 = arith.mulf %451, %354 : vector<16x128xf32>
    %453 = arith.addf %441, %452 : vector<16x128xf32>
    %454 = vector.broadcast %107 : f32 to vector<16x128xf32>
    %455 = arith.mulf %454, %354 : vector<16x128xf32>
    %456 = arith.addf %444, %455 : vector<16x128xf32>
    %457 = vector.broadcast %143 : f32 to vector<16x128xf32>
    %458 = arith.mulf %457, %354 : vector<16x128xf32>
    %459 = arith.addf %447, %458 : vector<16x128xf32>
    %460 = vector.broadcast %179 : f32 to vector<16x128xf32>
    %461 = arith.mulf %460, %354 : vector<16x128xf32>
    %462 = arith.addf %450, %461 : vector<16x128xf32>
    %c127_i32 = arith.constant 127 : i32
    %463 = tpu.dynamic_rotate %345 by %c127_i32 dim 1 : vector<16x128xf32>, i32 -> vector<16x128xf32>
    %cst_190 = arith.constant 0.000000e+00 : f32
    %464 = vector.broadcast %cst_190 : f32 to vector<16x128xf32>
    %465 = arith.select %23, %463, %464 : vector<16x128xi1>, vector<16x128xf32>
    %466 = vector.broadcast %45 : f32 to vector<16x128xf32>
    %467 = arith.mulf %466, %465 : vector<16x128xf32>
    %468 = arith.addf %453, %467 : vector<16x128xf32>
    %469 = vector.broadcast %81 : f32 to vector<16x128xf32>
    %470 = arith.mulf %469, %465 : vector<16x128xf32>
    %471 = arith.addf %456, %470 : vector<16x128xf32>
    %472 = vector.broadcast %117 : f32 to vector<16x128xf32>
    %473 = arith.mulf %472, %465 : vector<16x128xf32>
    %474 = arith.addf %459, %473 : vector<16x128xf32>
    %475 = vector.broadcast %153 : f32 to vector<16x128xf32>
    %476 = arith.mulf %475, %465 : vector<16x128xf32>
    %477 = arith.addf %462, %476 : vector<16x128xf32>
    %c127_i32_191 = arith.constant 127 : i32
    %478 = tpu.dynamic_rotate %348 by %c127_i32_191 dim 1 : vector<16x128xf32>, i32 -> vector<16x128xf32>
    %cst_192 = arith.constant 0.000000e+00 : f32
    %479 = vector.broadcast %cst_192 : f32 to vector<16x128xf32>
    %480 = arith.select %23, %478, %479 : vector<16x128xi1>, vector<16x128xf32>
    %481 = vector.broadcast %54 : f32 to vector<16x128xf32>
    %482 = arith.mulf %481, %480 : vector<16x128xf32>
    %483 = arith.addf %468, %482 : vector<16x128xf32>
    %484 = vector.broadcast %90 : f32 to vector<16x128xf32>
    %485 = arith.mulf %484, %480 : vector<16x128xf32>
    %486 = arith.addf %471, %485 : vector<16x128xf32>
    %487 = vector.broadcast %126 : f32 to vector<16x128xf32>
    %488 = arith.mulf %487, %480 : vector<16x128xf32>
    %489 = arith.addf %474, %488 : vector<16x128xf32>
    %490 = vector.broadcast %162 : f32 to vector<16x128xf32>
    %491 = arith.mulf %490, %480 : vector<16x128xf32>
    %492 = arith.addf %477, %491 : vector<16x128xf32>
    %c127_i32_193 = arith.constant 127 : i32
    %493 = tpu.dynamic_rotate %351 by %c127_i32_193 dim 1 : vector<16x128xf32>, i32 -> vector<16x128xf32>
    %cst_194 = arith.constant 0.000000e+00 : f32
    %494 = vector.broadcast %cst_194 : f32 to vector<16x128xf32>
    %495 = arith.select %23, %493, %494 : vector<16x128xi1>, vector<16x128xf32>
    %496 = vector.broadcast %63 : f32 to vector<16x128xf32>
    %497 = arith.mulf %496, %495 : vector<16x128xf32>
    %498 = arith.addf %483, %497 : vector<16x128xf32>
    %499 = vector.broadcast %99 : f32 to vector<16x128xf32>
    %500 = arith.mulf %499, %495 : vector<16x128xf32>
    %501 = arith.addf %486, %500 : vector<16x128xf32>
    %502 = vector.broadcast %135 : f32 to vector<16x128xf32>
    %503 = arith.mulf %502, %495 : vector<16x128xf32>
    %504 = arith.addf %489, %503 : vector<16x128xf32>
    %505 = vector.broadcast %171 : f32 to vector<16x128xf32>
    %506 = arith.mulf %505, %495 : vector<16x128xf32>
    %507 = arith.addf %492, %506 : vector<16x128xf32>
    %c127_i32_195 = arith.constant 127 : i32
    %508 = tpu.dynamic_rotate %354 by %c127_i32_195 dim 1 : vector<16x128xf32>, i32 -> vector<16x128xf32>
    %cst_196 = arith.constant 0.000000e+00 : f32
    %509 = vector.broadcast %cst_196 : f32 to vector<16x128xf32>
    %510 = arith.select %23, %508, %509 : vector<16x128xi1>, vector<16x128xf32>
    %511 = vector.broadcast %72 : f32 to vector<16x128xf32>
    %512 = arith.mulf %511, %510 : vector<16x128xf32>
    %513 = arith.addf %498, %512 : vector<16x128xf32>
    %514 = vector.broadcast %108 : f32 to vector<16x128xf32>
    %515 = arith.mulf %514, %510 : vector<16x128xf32>
    %516 = arith.addf %501, %515 : vector<16x128xf32>
    %517 = vector.broadcast %144 : f32 to vector<16x128xf32>
    %518 = arith.mulf %517, %510 : vector<16x128xf32>
    %519 = arith.addf %504, %518 : vector<16x128xf32>
    %520 = vector.broadcast %180 : f32 to vector<16x128xf32>
    %521 = arith.mulf %520, %510 : vector<16x128xf32>
    %522 = arith.addf %507, %521 : vector<16x128xf32>
    %c1_i32_197 = arith.constant 1 : i32
    %523 = tpu.dynamic_rotate %332 by %c1_i32_197 dim 1 : vector<16x128xf32>, i32 -> vector<16x128xf32>
    %cst_198 = arith.constant 0.000000e+00 : f32
    %524 = vector.broadcast %cst_198 : f32 to vector<16x128xf32>
    %525 = arith.select %25, %523, %524 : vector<16x128xi1>, vector<16x128xf32>
    %526 = vector.broadcast %46 : f32 to vector<16x128xf32>
    %527 = arith.mulf %526, %525 : vector<16x128xf32>
    %528 = arith.addf %513, %527 : vector<16x128xf32>
    %529 = vector.broadcast %82 : f32 to vector<16x128xf32>
    %530 = arith.mulf %529, %525 : vector<16x128xf32>
    %531 = arith.addf %516, %530 : vector<16x128xf32>
    %532 = vector.broadcast %118 : f32 to vector<16x128xf32>
    %533 = arith.mulf %532, %525 : vector<16x128xf32>
    %534 = arith.addf %519, %533 : vector<16x128xf32>
    %535 = vector.broadcast %154 : f32 to vector<16x128xf32>
    %536 = arith.mulf %535, %525 : vector<16x128xf32>
    %537 = arith.addf %522, %536 : vector<16x128xf32>
    %c1_i32_199 = arith.constant 1 : i32
    %538 = tpu.dynamic_rotate %334 by %c1_i32_199 dim 1 : vector<16x128xf32>, i32 -> vector<16x128xf32>
    %cst_200 = arith.constant 0.000000e+00 : f32
    %539 = vector.broadcast %cst_200 : f32 to vector<16x128xf32>
    %540 = arith.select %25, %538, %539 : vector<16x128xi1>, vector<16x128xf32>
    %541 = vector.broadcast %55 : f32 to vector<16x128xf32>
    %542 = arith.mulf %541, %540 : vector<16x128xf32>
    %543 = arith.addf %528, %542 : vector<16x128xf32>
    %544 = vector.broadcast %91 : f32 to vector<16x128xf32>
    %545 = arith.mulf %544, %540 : vector<16x128xf32>
    %546 = arith.addf %531, %545 : vector<16x128xf32>
    %547 = vector.broadcast %127 : f32 to vector<16x128xf32>
    %548 = arith.mulf %547, %540 : vector<16x128xf32>
    %549 = arith.addf %534, %548 : vector<16x128xf32>
    %550 = vector.broadcast %163 : f32 to vector<16x128xf32>
    %551 = arith.mulf %550, %540 : vector<16x128xf32>
    %552 = arith.addf %537, %551 : vector<16x128xf32>
    %c1_i32_201 = arith.constant 1 : i32
    %553 = tpu.dynamic_rotate %336 by %c1_i32_201 dim 1 : vector<16x128xf32>, i32 -> vector<16x128xf32>
    %cst_202 = arith.constant 0.000000e+00 : f32
    %554 = vector.broadcast %cst_202 : f32 to vector<16x128xf32>
    %555 = arith.select %25, %553, %554 : vector<16x128xi1>, vector<16x128xf32>
    %556 = vector.broadcast %64 : f32 to vector<16x128xf32>
    %557 = arith.mulf %556, %555 : vector<16x128xf32>
    %558 = arith.addf %543, %557 : vector<16x128xf32>
    %559 = vector.broadcast %100 : f32 to vector<16x128xf32>
    %560 = arith.mulf %559, %555 : vector<16x128xf32>
    %561 = arith.addf %546, %560 : vector<16x128xf32>
    %562 = vector.broadcast %136 : f32 to vector<16x128xf32>
    %563 = arith.mulf %562, %555 : vector<16x128xf32>
    %564 = arith.addf %549, %563 : vector<16x128xf32>
    %565 = vector.broadcast %172 : f32 to vector<16x128xf32>
    %566 = arith.mulf %565, %555 : vector<16x128xf32>
    %567 = arith.addf %552, %566 : vector<16x128xf32>
    %c1_i32_203 = arith.constant 1 : i32
    %568 = tpu.dynamic_rotate %338 by %c1_i32_203 dim 1 : vector<16x128xf32>, i32 -> vector<16x128xf32>
    %cst_204 = arith.constant 0.000000e+00 : f32
    %569 = vector.broadcast %cst_204 : f32 to vector<16x128xf32>
    %570 = arith.select %25, %568, %569 : vector<16x128xi1>, vector<16x128xf32>
    %571 = vector.broadcast %73 : f32 to vector<16x128xf32>
    %572 = arith.mulf %571, %570 : vector<16x128xf32>
    %573 = arith.addf %558, %572 : vector<16x128xf32>
    %574 = vector.broadcast %109 : f32 to vector<16x128xf32>
    %575 = arith.mulf %574, %570 : vector<16x128xf32>
    %576 = arith.addf %561, %575 : vector<16x128xf32>
    %577 = vector.broadcast %145 : f32 to vector<16x128xf32>
    %578 = arith.mulf %577, %570 : vector<16x128xf32>
    %579 = arith.addf %564, %578 : vector<16x128xf32>
    %580 = vector.broadcast %181 : f32 to vector<16x128xf32>
    %581 = arith.mulf %580, %570 : vector<16x128xf32>
    %582 = arith.addf %567, %581 : vector<16x128xf32>
    %583 = vector.broadcast %47 : f32 to vector<16x128xf32>
    %584 = arith.mulf %583, %332 : vector<16x128xf32>
    %585 = arith.addf %573, %584 : vector<16x128xf32>
    %586 = vector.broadcast %83 : f32 to vector<16x128xf32>
    %587 = arith.mulf %586, %332 : vector<16x128xf32>
    %588 = arith.addf %576, %587 : vector<16x128xf32>
    %589 = vector.broadcast %119 : f32 to vector<16x128xf32>
    %590 = arith.mulf %589, %332 : vector<16x128xf32>
    %591 = arith.addf %579, %590 : vector<16x128xf32>
    %592 = vector.broadcast %155 : f32 to vector<16x128xf32>
    %593 = arith.mulf %592, %332 : vector<16x128xf32>
    %594 = arith.addf %582, %593 : vector<16x128xf32>
    %595 = vector.broadcast %56 : f32 to vector<16x128xf32>
    %596 = arith.mulf %595, %334 : vector<16x128xf32>
    %597 = arith.addf %585, %596 : vector<16x128xf32>
    %598 = vector.broadcast %92 : f32 to vector<16x128xf32>
    %599 = arith.mulf %598, %334 : vector<16x128xf32>
    %600 = arith.addf %588, %599 : vector<16x128xf32>
    %601 = vector.broadcast %128 : f32 to vector<16x128xf32>
    %602 = arith.mulf %601, %334 : vector<16x128xf32>
    %603 = arith.addf %591, %602 : vector<16x128xf32>
    %604 = vector.broadcast %164 : f32 to vector<16x128xf32>
    %605 = arith.mulf %604, %334 : vector<16x128xf32>
    %606 = arith.addf %594, %605 : vector<16x128xf32>
    %607 = vector.broadcast %65 : f32 to vector<16x128xf32>
    %608 = arith.mulf %607, %336 : vector<16x128xf32>
    %609 = arith.addf %597, %608 : vector<16x128xf32>
    %610 = vector.broadcast %101 : f32 to vector<16x128xf32>
    %611 = arith.mulf %610, %336 : vector<16x128xf32>
    %612 = arith.addf %600, %611 : vector<16x128xf32>
    %613 = vector.broadcast %137 : f32 to vector<16x128xf32>
    %614 = arith.mulf %613, %336 : vector<16x128xf32>
    %615 = arith.addf %603, %614 : vector<16x128xf32>
    %616 = vector.broadcast %173 : f32 to vector<16x128xf32>
    %617 = arith.mulf %616, %336 : vector<16x128xf32>
    %618 = arith.addf %606, %617 : vector<16x128xf32>
    %619 = vector.broadcast %74 : f32 to vector<16x128xf32>
    %620 = arith.mulf %619, %338 : vector<16x128xf32>
    %621 = arith.addf %609, %620 : vector<16x128xf32>
    %622 = vector.broadcast %110 : f32 to vector<16x128xf32>
    %623 = arith.mulf %622, %338 : vector<16x128xf32>
    %624 = arith.addf %612, %623 : vector<16x128xf32>
    %625 = vector.broadcast %146 : f32 to vector<16x128xf32>
    %626 = arith.mulf %625, %338 : vector<16x128xf32>
    %627 = arith.addf %615, %626 : vector<16x128xf32>
    %628 = vector.broadcast %182 : f32 to vector<16x128xf32>
    %629 = arith.mulf %628, %338 : vector<16x128xf32>
    %630 = arith.addf %618, %629 : vector<16x128xf32>
    %c127_i32_205 = arith.constant 127 : i32
    %631 = tpu.dynamic_rotate %332 by %c127_i32_205 dim 1 : vector<16x128xf32>, i32 -> vector<16x128xf32>
    %cst_206 = arith.constant 0.000000e+00 : f32
    %632 = vector.broadcast %cst_206 : f32 to vector<16x128xf32>
    %633 = arith.select %23, %631, %632 : vector<16x128xi1>, vector<16x128xf32>
    %634 = vector.broadcast %48 : f32 to vector<16x128xf32>
    %635 = arith.mulf %634, %633 : vector<16x128xf32>
    %636 = arith.addf %621, %635 : vector<16x128xf32>
    %637 = vector.broadcast %84 : f32 to vector<16x128xf32>
    %638 = arith.mulf %637, %633 : vector<16x128xf32>
    %639 = arith.addf %624, %638 : vector<16x128xf32>
    %640 = vector.broadcast %120 : f32 to vector<16x128xf32>
    %641 = arith.mulf %640, %633 : vector<16x128xf32>
    %642 = arith.addf %627, %641 : vector<16x128xf32>
    %643 = vector.broadcast %156 : f32 to vector<16x128xf32>
    %644 = arith.mulf %643, %633 : vector<16x128xf32>
    %645 = arith.addf %630, %644 : vector<16x128xf32>
    %c127_i32_207 = arith.constant 127 : i32
    %646 = tpu.dynamic_rotate %334 by %c127_i32_207 dim 1 : vector<16x128xf32>, i32 -> vector<16x128xf32>
    %cst_208 = arith.constant 0.000000e+00 : f32
    %647 = vector.broadcast %cst_208 : f32 to vector<16x128xf32>
    %648 = arith.select %23, %646, %647 : vector<16x128xi1>, vector<16x128xf32>
    %649 = vector.broadcast %57 : f32 to vector<16x128xf32>
    %650 = arith.mulf %649, %648 : vector<16x128xf32>
    %651 = arith.addf %636, %650 : vector<16x128xf32>
    %652 = vector.broadcast %93 : f32 to vector<16x128xf32>
    %653 = arith.mulf %652, %648 : vector<16x128xf32>
    %654 = arith.addf %639, %653 : vector<16x128xf32>
    %655 = vector.broadcast %129 : f32 to vector<16x128xf32>
    %656 = arith.mulf %655, %648 : vector<16x128xf32>
    %657 = arith.addf %642, %656 : vector<16x128xf32>
    %658 = vector.broadcast %165 : f32 to vector<16x128xf32>
    %659 = arith.mulf %658, %648 : vector<16x128xf32>
    %660 = arith.addf %645, %659 : vector<16x128xf32>
    %c127_i32_209 = arith.constant 127 : i32
    %661 = tpu.dynamic_rotate %336 by %c127_i32_209 dim 1 : vector<16x128xf32>, i32 -> vector<16x128xf32>
    %cst_210 = arith.constant 0.000000e+00 : f32
    %662 = vector.broadcast %cst_210 : f32 to vector<16x128xf32>
    %663 = arith.select %23, %661, %662 : vector<16x128xi1>, vector<16x128xf32>
    %664 = vector.broadcast %66 : f32 to vector<16x128xf32>
    %665 = arith.mulf %664, %663 : vector<16x128xf32>
    %666 = arith.addf %651, %665 : vector<16x128xf32>
    %667 = vector.broadcast %102 : f32 to vector<16x128xf32>
    %668 = arith.mulf %667, %663 : vector<16x128xf32>
    %669 = arith.addf %654, %668 : vector<16x128xf32>
    %670 = vector.broadcast %138 : f32 to vector<16x128xf32>
    %671 = arith.mulf %670, %663 : vector<16x128xf32>
    %672 = arith.addf %657, %671 : vector<16x128xf32>
    %673 = vector.broadcast %174 : f32 to vector<16x128xf32>
    %674 = arith.mulf %673, %663 : vector<16x128xf32>
    %675 = arith.addf %660, %674 : vector<16x128xf32>
    %c127_i32_211 = arith.constant 127 : i32
    %676 = tpu.dynamic_rotate %338 by %c127_i32_211 dim 1 : vector<16x128xf32>, i32 -> vector<16x128xf32>
    %cst_212 = arith.constant 0.000000e+00 : f32
    %677 = vector.broadcast %cst_212 : f32 to vector<16x128xf32>
    %678 = arith.select %23, %676, %677 : vector<16x128xi1>, vector<16x128xf32>
    %679 = vector.broadcast %75 : f32 to vector<16x128xf32>
    %680 = arith.mulf %679, %678 : vector<16x128xf32>
    %681 = arith.addf %666, %680 : vector<16x128xf32>
    %682 = vector.broadcast %111 : f32 to vector<16x128xf32>
    %683 = arith.mulf %682, %678 : vector<16x128xf32>
    %684 = arith.addf %669, %683 : vector<16x128xf32>
    %685 = vector.broadcast %147 : f32 to vector<16x128xf32>
    %686 = arith.mulf %685, %678 : vector<16x128xf32>
    %687 = arith.addf %672, %686 : vector<16x128xf32>
    %688 = vector.broadcast %183 : f32 to vector<16x128xf32>
    %689 = arith.mulf %688, %678 : vector<16x128xf32>
    %690 = arith.addf %675, %689 : vector<16x128xf32>
    %c15_i32_213 = arith.constant 15 : i32
    %691 = tpu.dynamic_rotate %332 by %c15_i32_213 dim 0 : vector<16x128xf32>, i32 -> vector<16x128xf32>
    %cst_214 = arith.constant 0.000000e+00 : f32
    %692 = vector.broadcast %cst_214 : f32 to vector<16x128xf32>
    %693 = arith.select %19, %691, %692 : vector<16x128xi1>, vector<16x128xf32>
    %c15_i32_215 = arith.constant 15 : i32
    %694 = tpu.dynamic_rotate %334 by %c15_i32_215 dim 0 : vector<16x128xf32>, i32 -> vector<16x128xf32>
    %cst_216 = arith.constant 0.000000e+00 : f32
    %695 = vector.broadcast %cst_216 : f32 to vector<16x128xf32>
    %696 = arith.select %19, %694, %695 : vector<16x128xi1>, vector<16x128xf32>
    %c15_i32_217 = arith.constant 15 : i32
    %697 = tpu.dynamic_rotate %336 by %c15_i32_217 dim 0 : vector<16x128xf32>, i32 -> vector<16x128xf32>
    %cst_218 = arith.constant 0.000000e+00 : f32
    %698 = vector.broadcast %cst_218 : f32 to vector<16x128xf32>
    %699 = arith.select %19, %697, %698 : vector<16x128xi1>, vector<16x128xf32>
    %c15_i32_219 = arith.constant 15 : i32
    %700 = tpu.dynamic_rotate %338 by %c15_i32_219 dim 0 : vector<16x128xf32>, i32 -> vector<16x128xf32>
    %cst_220 = arith.constant 0.000000e+00 : f32
    %701 = vector.broadcast %cst_220 : f32 to vector<16x128xf32>
    %702 = arith.select %19, %700, %701 : vector<16x128xi1>, vector<16x128xf32>
    %c1_i32_221 = arith.constant 1 : i32
    %703 = tpu.dynamic_rotate %693 by %c1_i32_221 dim 1 : vector<16x128xf32>, i32 -> vector<16x128xf32>
    %cst_222 = arith.constant 0.000000e+00 : f32
    %704 = vector.broadcast %cst_222 : f32 to vector<16x128xf32>
    %705 = arith.select %25, %703, %704 : vector<16x128xi1>, vector<16x128xf32>
    %706 = vector.broadcast %49 : f32 to vector<16x128xf32>
    %707 = arith.mulf %706, %705 : vector<16x128xf32>
    %708 = arith.addf %681, %707 : vector<16x128xf32>
    %709 = vector.broadcast %85 : f32 to vector<16x128xf32>
    %710 = arith.mulf %709, %705 : vector<16x128xf32>
    %711 = arith.addf %684, %710 : vector<16x128xf32>
    %712 = vector.broadcast %121 : f32 to vector<16x128xf32>
    %713 = arith.mulf %712, %705 : vector<16x128xf32>
    %714 = arith.addf %687, %713 : vector<16x128xf32>
    %715 = vector.broadcast %157 : f32 to vector<16x128xf32>
    %716 = arith.mulf %715, %705 : vector<16x128xf32>
    %717 = arith.addf %690, %716 : vector<16x128xf32>
    %c1_i32_223 = arith.constant 1 : i32
    %718 = tpu.dynamic_rotate %696 by %c1_i32_223 dim 1 : vector<16x128xf32>, i32 -> vector<16x128xf32>
    %cst_224 = arith.constant 0.000000e+00 : f32
    %719 = vector.broadcast %cst_224 : f32 to vector<16x128xf32>
    %720 = arith.select %25, %718, %719 : vector<16x128xi1>, vector<16x128xf32>
    %721 = vector.broadcast %58 : f32 to vector<16x128xf32>
    %722 = arith.mulf %721, %720 : vector<16x128xf32>
    %723 = arith.addf %708, %722 : vector<16x128xf32>
    %724 = vector.broadcast %94 : f32 to vector<16x128xf32>
    %725 = arith.mulf %724, %720 : vector<16x128xf32>
    %726 = arith.addf %711, %725 : vector<16x128xf32>
    %727 = vector.broadcast %130 : f32 to vector<16x128xf32>
    %728 = arith.mulf %727, %720 : vector<16x128xf32>
    %729 = arith.addf %714, %728 : vector<16x128xf32>
    %730 = vector.broadcast %166 : f32 to vector<16x128xf32>
    %731 = arith.mulf %730, %720 : vector<16x128xf32>
    %732 = arith.addf %717, %731 : vector<16x128xf32>
    %c1_i32_225 = arith.constant 1 : i32
    %733 = tpu.dynamic_rotate %699 by %c1_i32_225 dim 1 : vector<16x128xf32>, i32 -> vector<16x128xf32>
    %cst_226 = arith.constant 0.000000e+00 : f32
    %734 = vector.broadcast %cst_226 : f32 to vector<16x128xf32>
    %735 = arith.select %25, %733, %734 : vector<16x128xi1>, vector<16x128xf32>
    %736 = vector.broadcast %67 : f32 to vector<16x128xf32>
    %737 = arith.mulf %736, %735 : vector<16x128xf32>
    %738 = arith.addf %723, %737 : vector<16x128xf32>
    %739 = vector.broadcast %103 : f32 to vector<16x128xf32>
    %740 = arith.mulf %739, %735 : vector<16x128xf32>
    %741 = arith.addf %726, %740 : vector<16x128xf32>
    %742 = vector.broadcast %139 : f32 to vector<16x128xf32>
    %743 = arith.mulf %742, %735 : vector<16x128xf32>
    %744 = arith.addf %729, %743 : vector<16x128xf32>
    %745 = vector.broadcast %175 : f32 to vector<16x128xf32>
    %746 = arith.mulf %745, %735 : vector<16x128xf32>
    %747 = arith.addf %732, %746 : vector<16x128xf32>
    %c1_i32_227 = arith.constant 1 : i32
    %748 = tpu.dynamic_rotate %702 by %c1_i32_227 dim 1 : vector<16x128xf32>, i32 -> vector<16x128xf32>
    %cst_228 = arith.constant 0.000000e+00 : f32
    %749 = vector.broadcast %cst_228 : f32 to vector<16x128xf32>
    %750 = arith.select %25, %748, %749 : vector<16x128xi1>, vector<16x128xf32>
    %751 = vector.broadcast %76 : f32 to vector<16x128xf32>
    %752 = arith.mulf %751, %750 : vector<16x128xf32>
    %753 = arith.addf %738, %752 : vector<16x128xf32>
    %754 = vector.broadcast %112 : f32 to vector<16x128xf32>
    %755 = arith.mulf %754, %750 : vector<16x128xf32>
    %756 = arith.addf %741, %755 : vector<16x128xf32>
    %757 = vector.broadcast %148 : f32 to vector<16x128xf32>
    %758 = arith.mulf %757, %750 : vector<16x128xf32>
    %759 = arith.addf %744, %758 : vector<16x128xf32>
    %760 = vector.broadcast %184 : f32 to vector<16x128xf32>
    %761 = arith.mulf %760, %750 : vector<16x128xf32>
    %762 = arith.addf %747, %761 : vector<16x128xf32>
    %763 = vector.broadcast %50 : f32 to vector<16x128xf32>
    %764 = arith.mulf %763, %693 : vector<16x128xf32>
    %765 = arith.addf %753, %764 : vector<16x128xf32>
    %766 = vector.broadcast %86 : f32 to vector<16x128xf32>
    %767 = arith.mulf %766, %693 : vector<16x128xf32>
    %768 = arith.addf %756, %767 : vector<16x128xf32>
    %769 = vector.broadcast %122 : f32 to vector<16x128xf32>
    %770 = arith.mulf %769, %693 : vector<16x128xf32>
    %771 = arith.addf %759, %770 : vector<16x128xf32>
    %772 = vector.broadcast %158 : f32 to vector<16x128xf32>
    %773 = arith.mulf %772, %693 : vector<16x128xf32>
    %774 = arith.addf %762, %773 : vector<16x128xf32>
    %775 = vector.broadcast %59 : f32 to vector<16x128xf32>
    %776 = arith.mulf %775, %696 : vector<16x128xf32>
    %777 = arith.addf %765, %776 : vector<16x128xf32>
    %778 = vector.broadcast %95 : f32 to vector<16x128xf32>
    %779 = arith.mulf %778, %696 : vector<16x128xf32>
    %780 = arith.addf %768, %779 : vector<16x128xf32>
    %781 = vector.broadcast %131 : f32 to vector<16x128xf32>
    %782 = arith.mulf %781, %696 : vector<16x128xf32>
    %783 = arith.addf %771, %782 : vector<16x128xf32>
    %784 = vector.broadcast %167 : f32 to vector<16x128xf32>
    %785 = arith.mulf %784, %696 : vector<16x128xf32>
    %786 = arith.addf %774, %785 : vector<16x128xf32>
    %787 = vector.broadcast %68 : f32 to vector<16x128xf32>
    %788 = arith.mulf %787, %699 : vector<16x128xf32>
    %789 = arith.addf %777, %788 : vector<16x128xf32>
    %790 = vector.broadcast %104 : f32 to vector<16x128xf32>
    %791 = arith.mulf %790, %699 : vector<16x128xf32>
    %792 = arith.addf %780, %791 : vector<16x128xf32>
    %793 = vector.broadcast %140 : f32 to vector<16x128xf32>
    %794 = arith.mulf %793, %699 : vector<16x128xf32>
    %795 = arith.addf %783, %794 : vector<16x128xf32>
    %796 = vector.broadcast %176 : f32 to vector<16x128xf32>
    %797 = arith.mulf %796, %699 : vector<16x128xf32>
    %798 = arith.addf %786, %797 : vector<16x128xf32>
    %799 = vector.broadcast %77 : f32 to vector<16x128xf32>
    %800 = arith.mulf %799, %702 : vector<16x128xf32>
    %801 = arith.addf %789, %800 : vector<16x128xf32>
    %802 = vector.broadcast %113 : f32 to vector<16x128xf32>
    %803 = arith.mulf %802, %702 : vector<16x128xf32>
    %804 = arith.addf %792, %803 : vector<16x128xf32>
    %805 = vector.broadcast %149 : f32 to vector<16x128xf32>
    %806 = arith.mulf %805, %702 : vector<16x128xf32>
    %807 = arith.addf %795, %806 : vector<16x128xf32>
    %808 = vector.broadcast %185 : f32 to vector<16x128xf32>
    %809 = arith.mulf %808, %702 : vector<16x128xf32>
    %810 = arith.addf %798, %809 : vector<16x128xf32>
    %c127_i32_229 = arith.constant 127 : i32
    %811 = tpu.dynamic_rotate %693 by %c127_i32_229 dim 1 : vector<16x128xf32>, i32 -> vector<16x128xf32>
    %cst_230 = arith.constant 0.000000e+00 : f32
    %812 = vector.broadcast %cst_230 : f32 to vector<16x128xf32>
    %813 = arith.select %23, %811, %812 : vector<16x128xi1>, vector<16x128xf32>
    %814 = vector.broadcast %51 : f32 to vector<16x128xf32>
    %815 = arith.mulf %814, %813 : vector<16x128xf32>
    %816 = arith.addf %801, %815 : vector<16x128xf32>
    %817 = vector.broadcast %87 : f32 to vector<16x128xf32>
    %818 = arith.mulf %817, %813 : vector<16x128xf32>
    %819 = arith.addf %804, %818 : vector<16x128xf32>
    %820 = vector.broadcast %123 : f32 to vector<16x128xf32>
    %821 = arith.mulf %820, %813 : vector<16x128xf32>
    %822 = arith.addf %807, %821 : vector<16x128xf32>
    %823 = vector.broadcast %159 : f32 to vector<16x128xf32>
    %824 = arith.mulf %823, %813 : vector<16x128xf32>
    %825 = arith.addf %810, %824 : vector<16x128xf32>
    %c127_i32_231 = arith.constant 127 : i32
    %826 = tpu.dynamic_rotate %696 by %c127_i32_231 dim 1 : vector<16x128xf32>, i32 -> vector<16x128xf32>
    %cst_232 = arith.constant 0.000000e+00 : f32
    %827 = vector.broadcast %cst_232 : f32 to vector<16x128xf32>
    %828 = arith.select %23, %826, %827 : vector<16x128xi1>, vector<16x128xf32>
    %829 = vector.broadcast %60 : f32 to vector<16x128xf32>
    %830 = arith.mulf %829, %828 : vector<16x128xf32>
    %831 = arith.addf %816, %830 : vector<16x128xf32>
    %832 = vector.broadcast %96 : f32 to vector<16x128xf32>
    %833 = arith.mulf %832, %828 : vector<16x128xf32>
    %834 = arith.addf %819, %833 : vector<16x128xf32>
    %835 = vector.broadcast %132 : f32 to vector<16x128xf32>
    %836 = arith.mulf %835, %828 : vector<16x128xf32>
    %837 = arith.addf %822, %836 : vector<16x128xf32>
    %838 = vector.broadcast %168 : f32 to vector<16x128xf32>
    %839 = arith.mulf %838, %828 : vector<16x128xf32>
    %840 = arith.addf %825, %839 : vector<16x128xf32>
    %c127_i32_233 = arith.constant 127 : i32
    %841 = tpu.dynamic_rotate %699 by %c127_i32_233 dim 1 : vector<16x128xf32>, i32 -> vector<16x128xf32>
    %cst_234 = arith.constant 0.000000e+00 : f32
    %842 = vector.broadcast %cst_234 : f32 to vector<16x128xf32>
    %843 = arith.select %23, %841, %842 : vector<16x128xi1>, vector<16x128xf32>
    %844 = vector.broadcast %69 : f32 to vector<16x128xf32>
    %845 = arith.mulf %844, %843 : vector<16x128xf32>
    %846 = arith.addf %831, %845 : vector<16x128xf32>
    %847 = vector.broadcast %105 : f32 to vector<16x128xf32>
    %848 = arith.mulf %847, %843 : vector<16x128xf32>
    %849 = arith.addf %834, %848 : vector<16x128xf32>
    %850 = vector.broadcast %141 : f32 to vector<16x128xf32>
    %851 = arith.mulf %850, %843 : vector<16x128xf32>
    %852 = arith.addf %837, %851 : vector<16x128xf32>
    %853 = vector.broadcast %177 : f32 to vector<16x128xf32>
    %854 = arith.mulf %853, %843 : vector<16x128xf32>
    %855 = arith.addf %840, %854 : vector<16x128xf32>
    %c127_i32_235 = arith.constant 127 : i32
    %856 = tpu.dynamic_rotate %702 by %c127_i32_235 dim 1 : vector<16x128xf32>, i32 -> vector<16x128xf32>
    %cst_236 = arith.constant 0.000000e+00 : f32
    %857 = vector.broadcast %cst_236 : f32 to vector<16x128xf32>
    %858 = arith.select %23, %856, %857 : vector<16x128xi1>, vector<16x128xf32>
    %859 = vector.broadcast %78 : f32 to vector<16x128xf32>
    %860 = arith.mulf %859, %858 : vector<16x128xf32>
    %861 = arith.addf %846, %860 : vector<16x128xf32>
    %862 = vector.broadcast %114 : f32 to vector<16x128xf32>
    %863 = arith.mulf %862, %858 : vector<16x128xf32>
    %864 = arith.addf %849, %863 : vector<16x128xf32>
    %865 = vector.broadcast %150 : f32 to vector<16x128xf32>
    %866 = arith.mulf %865, %858 : vector<16x128xf32>
    %867 = arith.addf %852, %866 : vector<16x128xf32>
    %868 = vector.broadcast %186 : f32 to vector<16x128xf32>
    %869 = arith.mulf %868, %858 : vector<16x128xf32>
    %870 = arith.addf %855, %869 : vector<16x128xf32>
    %cst_237 = arith.constant dense<0.000000e+00> : vector<128xf32>
    %871 = vector.multi_reduction <add>, %861, %cst_237 [0] : vector<16x128xf32> to vector<128xf32>
    %872 = vector.shape_cast %871 : vector<128xf32> to vector<1x128xf32>
    %cst_238 = arith.constant dense<0.000000e+00> : vector<128xf32>
    %873 = vector.multi_reduction <add>, %864, %cst_238 [0] : vector<16x128xf32> to vector<128xf32>
    %874 = vector.shape_cast %873 : vector<128xf32> to vector<1x128xf32>
    %cst_239 = arith.constant dense<0.000000e+00> : vector<128xf32>
    %875 = vector.multi_reduction <add>, %867, %cst_239 [0] : vector<16x128xf32> to vector<128xf32>
    %876 = vector.shape_cast %875 : vector<128xf32> to vector<1x128xf32>
    %cst_240 = arith.constant dense<0.000000e+00> : vector<128xf32>
    %877 = vector.multi_reduction <add>, %870, %cst_240 [0] : vector<16x128xf32> to vector<128xf32>
    %878 = vector.shape_cast %877 : vector<128xf32> to vector<1x128xf32>
    %879 = arith.mulf %861, %861 : vector<16x128xf32>
    %cst_241 = arith.constant dense<0.000000e+00> : vector<128xf32>
    %880 = vector.multi_reduction <add>, %879, %cst_241 [0] : vector<16x128xf32> to vector<128xf32>
    %881 = vector.shape_cast %880 : vector<128xf32> to vector<1x128xf32>
    %882 = arith.mulf %864, %864 : vector<16x128xf32>
    %cst_242 = arith.constant dense<0.000000e+00> : vector<128xf32>
    %883 = vector.multi_reduction <add>, %882, %cst_242 [0] : vector<16x128xf32> to vector<128xf32>
    %884 = vector.shape_cast %883 : vector<128xf32> to vector<1x128xf32>
    %885 = arith.mulf %867, %867 : vector<16x128xf32>
    %cst_243 = arith.constant dense<0.000000e+00> : vector<128xf32>
    %886 = vector.multi_reduction <add>, %885, %cst_243 [0] : vector<16x128xf32> to vector<128xf32>
    %887 = vector.shape_cast %886 : vector<128xf32> to vector<1x128xf32>
    %888 = arith.mulf %870, %870 : vector<16x128xf32>
    %cst_244 = arith.constant dense<0.000000e+00> : vector<128xf32>
    %889 = vector.multi_reduction <add>, %888, %cst_244 [0] : vector<16x128xf32> to vector<128xf32>
    %890 = vector.shape_cast %889 : vector<128xf32> to vector<1x128xf32>
    %891 = tpu.concatenate %872, %874, %876, %878, %881, %884, %887, %890 in 0 : vector<1x128xf32>, vector<1x128xf32>, vector<1x128xf32>, vector<1x128xf32>, vector<1x128xf32>, vector<1x128xf32>, vector<1x128xf32>, vector<1x128xf32> -> vector<8x128xf32>
    %c127_i32_245 = arith.constant 127 : i32
    %892 = tpu.dynamic_rotate %891 by %c127_i32_245 dim 1 : vector<8x128xf32>, i32 -> vector<8x128xf32>
    %c1_i32_246 = arith.constant 1 : i32
    %893 = tpu.dynamic_rotate %891 by %c1_i32_246 dim 1 : vector<8x128xf32>, i32 -> vector<8x128xf32>
    %894 = vector.shape_cast %30 : vector<1x128xi1> to vector<1x128xi1>
    %895 = vector.broadcast %894 : vector<1x128xi1> to vector<8x128xi1>
    %896 = arith.select %895, %892, %893 : vector<8x128xi1>, vector<8x128xf32>
    %897 = arith.addf %891, %896 : vector<8x128xf32>
    %c126_i32 = arith.constant 126 : i32
    %898 = tpu.dynamic_rotate %897 by %c126_i32 dim 1 : vector<8x128xf32>, i32 -> vector<8x128xf32>
    %c2_i32_247 = arith.constant 2 : i32
    %899 = tpu.dynamic_rotate %897 by %c2_i32_247 dim 1 : vector<8x128xf32>, i32 -> vector<8x128xf32>
    %900 = vector.shape_cast %34 : vector<1x128xi1> to vector<1x128xi1>
    %901 = vector.broadcast %900 : vector<1x128xi1> to vector<8x128xi1>
    %902 = arith.select %901, %898, %899 : vector<8x128xi1>, vector<8x128xf32>
    %903 = arith.addf %897, %902 : vector<8x128xf32>
    %c124_i32 = arith.constant 124 : i32
    %904 = tpu.dynamic_rotate %903 by %c124_i32 dim 1 : vector<8x128xf32>, i32 -> vector<8x128xf32>
    %c4_i32_248 = arith.constant 4 : i32
    %905 = tpu.dynamic_rotate %903 by %c4_i32_248 dim 1 : vector<8x128xf32>, i32 -> vector<8x128xf32>
    %906 = vector.shape_cast %38 : vector<1x128xi1> to vector<1x128xi1>
    %907 = vector.broadcast %906 : vector<1x128xi1> to vector<8x128xi1>
    %908 = arith.select %907, %904, %905 : vector<8x128xi1>, vector<8x128xf32>
    %909 = arith.addf %903, %908 : vector<8x128xf32>
    %c120_i32 = arith.constant 120 : i32
    %910 = tpu.dynamic_rotate %909 by %c120_i32 dim 1 : vector<8x128xf32>, i32 -> vector<8x128xf32>
    %c8_i32_249 = arith.constant 8 : i32
    %911 = tpu.dynamic_rotate %909 by %c8_i32_249 dim 1 : vector<8x128xf32>, i32 -> vector<8x128xf32>
    %912 = vector.shape_cast %42 : vector<1x128xi1> to vector<1x128xi1>
    %913 = vector.broadcast %912 : vector<1x128xi1> to vector<8x128xi1>
    %914 = arith.select %913, %910, %911 : vector<8x128xi1>, vector<8x128xf32>
    %915 = arith.addf %909, %914 : vector<8x128xf32>
    %cst_250 = arith.constant 3.906250e-03 : f32
    %916 = vector.broadcast %cst_250 : f32 to vector<8x128xf32>
    %917 = arith.mulf %915, %916 : vector<8x128xf32>
    %918 = vector.extract_strided_slice %917 {offsets = [0, 0], sizes = [4, 128], strides = [1, 1]} : vector<8x128xf32> to vector<4x128xf32>
    %919 = vector.extract_strided_slice %917 {offsets = [4, 0], sizes = [4, 128], strides = [1, 1]} : vector<8x128xf32> to vector<4x128xf32>
    %920 = arith.mulf %918, %918 : vector<4x128xf32>
    %921 = arith.subf %919, %920 : vector<4x128xf32>
    %cst_251 = arith.constant 0.000000e+00 : f32
    %922 = vector.broadcast %cst_251 : f32 to vector<4x128xf32>
    %923 = arith.maximumf %921, %922 : vector<4x128xf32>
    %cst_252 = arith.constant 9.99999974E-6 : f32
    %924 = vector.broadcast %cst_252 : f32 to vector<4x128xf32>
    %925 = arith.addf %923, %924 : vector<4x128xf32>
    %926 = math.rsqrt %925 : vector<4x128xf32>
    %927 = vector.extract_strided_slice %918 {offsets = [0, 0], sizes = [1, 128], strides = [1, 1]} : vector<4x128xf32> to vector<1x128xf32>
    %928 = vector.broadcast %927 : vector<1x128xf32> to vector<16x128xf32>
    %929 = arith.subf %861, %928 : vector<16x128xf32>
    %930 = vector.extract_strided_slice %926 {offsets = [0, 0], sizes = [1, 128], strides = [1, 1]} : vector<4x128xf32> to vector<1x128xf32>
    %931 = vector.broadcast %930 : vector<1x128xf32> to vector<16x128xf32>
    %932 = arith.mulf %929, %931 : vector<16x128xf32>
    %cst_253 = arith.constant 0.000000e+00 : f32
    %933 = vector.broadcast %cst_253 : f32 to vector<16x128xf32>
    %934 = arith.maximumf %932, %933 : vector<16x128xf32>
    %935 = vector.extract_strided_slice %918 {offsets = [1, 0], sizes = [1, 128], strides = [1, 1]} : vector<4x128xf32> to vector<1x128xf32>
    %936 = vector.broadcast %935 : vector<1x128xf32> to vector<16x128xf32>
    %937 = arith.subf %864, %936 : vector<16x128xf32>
    %938 = vector.extract_strided_slice %926 {offsets = [1, 0], sizes = [1, 128], strides = [1, 1]} : vector<4x128xf32> to vector<1x128xf32>
    %939 = vector.broadcast %938 : vector<1x128xf32> to vector<16x128xf32>
    %940 = arith.mulf %937, %939 : vector<16x128xf32>
    %cst_254 = arith.constant 0.000000e+00 : f32
    %941 = vector.broadcast %cst_254 : f32 to vector<16x128xf32>
    %942 = arith.maximumf %940, %941 : vector<16x128xf32>
    %943 = vector.extract_strided_slice %918 {offsets = [2, 0], sizes = [1, 128], strides = [1, 1]} : vector<4x128xf32> to vector<1x128xf32>
    %944 = vector.broadcast %943 : vector<1x128xf32> to vector<16x128xf32>
    %945 = arith.subf %867, %944 : vector<16x128xf32>
    %946 = vector.extract_strided_slice %926 {offsets = [2, 0], sizes = [1, 128], strides = [1, 1]} : vector<4x128xf32> to vector<1x128xf32>
    %947 = vector.broadcast %946 : vector<1x128xf32> to vector<16x128xf32>
    %948 = arith.mulf %945, %947 : vector<16x128xf32>
    %cst_255 = arith.constant 0.000000e+00 : f32
    %949 = vector.broadcast %cst_255 : f32 to vector<16x128xf32>
    %950 = arith.maximumf %948, %949 : vector<16x128xf32>
    %951 = vector.extract_strided_slice %918 {offsets = [3, 0], sizes = [1, 128], strides = [1, 1]} : vector<4x128xf32> to vector<1x128xf32>
    %952 = vector.broadcast %951 : vector<1x128xf32> to vector<16x128xf32>
    %953 = arith.subf %870, %952 : vector<16x128xf32>
    %954 = vector.extract_strided_slice %926 {offsets = [3, 0], sizes = [1, 128], strides = [1, 1]} : vector<4x128xf32> to vector<1x128xf32>
    %955 = vector.broadcast %954 : vector<1x128xf32> to vector<16x128xf32>
    %956 = arith.mulf %953, %955 : vector<16x128xf32>
    %cst_256 = arith.constant 0.000000e+00 : f32
    %957 = vector.broadcast %cst_256 : f32 to vector<16x128xf32>
    %958 = arith.maximumf %956, %957 : vector<16x128xf32>
    %cst_257 = arith.constant 0.000000e+00 : f32
    %959 = vector.broadcast %cst_257 : f32 to vector<16x128xf32>
    %cst_258 = arith.constant 0.000000e+00 : f32
    %960 = vector.broadcast %cst_258 : f32 to vector<16x128xf32>
    %cst_259 = arith.constant 0.000000e+00 : f32
    %961 = vector.broadcast %cst_259 : f32 to vector<16x128xf32>
    %cst_260 = arith.constant 0.000000e+00 : f32
    %962 = vector.broadcast %cst_260 : f32 to vector<16x128xf32>
    %c1_i32_261 = arith.constant 1 : i32
    %963 = tpu.dynamic_rotate %934 by %c1_i32_261 dim 0 : vector<16x128xf32>, i32 -> vector<16x128xf32>
    %cst_262 = arith.constant 0.000000e+00 : f32
    %964 = vector.broadcast %cst_262 : f32 to vector<16x128xf32>
    %965 = arith.select %21, %963, %964 : vector<16x128xi1>, vector<16x128xf32>
    %c1_i32_263 = arith.constant 1 : i32
    %966 = tpu.dynamic_rotate %942 by %c1_i32_263 dim 0 : vector<16x128xf32>, i32 -> vector<16x128xf32>
    %cst_264 = arith.constant 0.000000e+00 : f32
    %967 = vector.broadcast %cst_264 : f32 to vector<16x128xf32>
    %968 = arith.select %21, %966, %967 : vector<16x128xi1>, vector<16x128xf32>
    %c1_i32_265 = arith.constant 1 : i32
    %969 = tpu.dynamic_rotate %950 by %c1_i32_265 dim 0 : vector<16x128xf32>, i32 -> vector<16x128xf32>
    %cst_266 = arith.constant 0.000000e+00 : f32
    %970 = vector.broadcast %cst_266 : f32 to vector<16x128xf32>
    %971 = arith.select %21, %969, %970 : vector<16x128xi1>, vector<16x128xf32>
    %c1_i32_267 = arith.constant 1 : i32
    %972 = tpu.dynamic_rotate %958 by %c1_i32_267 dim 0 : vector<16x128xf32>, i32 -> vector<16x128xf32>
    %cst_268 = arith.constant 0.000000e+00 : f32
    %973 = vector.broadcast %cst_268 : f32 to vector<16x128xf32>
    %974 = arith.select %21, %972, %973 : vector<16x128xi1>, vector<16x128xf32>
    %c1_i32_269 = arith.constant 1 : i32
    %975 = tpu.dynamic_rotate %965 by %c1_i32_269 dim 1 : vector<16x128xf32>, i32 -> vector<16x128xf32>
    %cst_270 = arith.constant 0.000000e+00 : f32
    %976 = vector.broadcast %cst_270 : f32 to vector<16x128xf32>
    %977 = arith.select %25, %975, %976 : vector<16x128xi1>, vector<16x128xf32>
    %978 = vector.broadcast %187 : f32 to vector<16x128xf32>
    %979 = arith.mulf %978, %977 : vector<16x128xf32>
    %980 = arith.addf %959, %979 : vector<16x128xf32>
    %981 = vector.broadcast %223 : f32 to vector<16x128xf32>
    %982 = arith.mulf %981, %977 : vector<16x128xf32>
    %983 = arith.addf %960, %982 : vector<16x128xf32>
    %984 = vector.broadcast %259 : f32 to vector<16x128xf32>
    %985 = arith.mulf %984, %977 : vector<16x128xf32>
    %986 = arith.addf %961, %985 : vector<16x128xf32>
    %987 = vector.broadcast %295 : f32 to vector<16x128xf32>
    %988 = arith.mulf %987, %977 : vector<16x128xf32>
    %989 = arith.addf %962, %988 : vector<16x128xf32>
    %c1_i32_271 = arith.constant 1 : i32
    %990 = tpu.dynamic_rotate %968 by %c1_i32_271 dim 1 : vector<16x128xf32>, i32 -> vector<16x128xf32>
    %cst_272 = arith.constant 0.000000e+00 : f32
    %991 = vector.broadcast %cst_272 : f32 to vector<16x128xf32>
    %992 = arith.select %25, %990, %991 : vector<16x128xi1>, vector<16x128xf32>
    %993 = vector.broadcast %196 : f32 to vector<16x128xf32>
    %994 = arith.mulf %993, %992 : vector<16x128xf32>
    %995 = arith.addf %980, %994 : vector<16x128xf32>
    %996 = vector.broadcast %232 : f32 to vector<16x128xf32>
    %997 = arith.mulf %996, %992 : vector<16x128xf32>
    %998 = arith.addf %983, %997 : vector<16x128xf32>
    %999 = vector.broadcast %268 : f32 to vector<16x128xf32>
    %1000 = arith.mulf %999, %992 : vector<16x128xf32>
    %1001 = arith.addf %986, %1000 : vector<16x128xf32>
    %1002 = vector.broadcast %304 : f32 to vector<16x128xf32>
    %1003 = arith.mulf %1002, %992 : vector<16x128xf32>
    %1004 = arith.addf %989, %1003 : vector<16x128xf32>
    %c1_i32_273 = arith.constant 1 : i32
    %1005 = tpu.dynamic_rotate %971 by %c1_i32_273 dim 1 : vector<16x128xf32>, i32 -> vector<16x128xf32>
    %cst_274 = arith.constant 0.000000e+00 : f32
    %1006 = vector.broadcast %cst_274 : f32 to vector<16x128xf32>
    %1007 = arith.select %25, %1005, %1006 : vector<16x128xi1>, vector<16x128xf32>
    %1008 = vector.broadcast %205 : f32 to vector<16x128xf32>
    %1009 = arith.mulf %1008, %1007 : vector<16x128xf32>
    %1010 = arith.addf %995, %1009 : vector<16x128xf32>
    %1011 = vector.broadcast %241 : f32 to vector<16x128xf32>
    %1012 = arith.mulf %1011, %1007 : vector<16x128xf32>
    %1013 = arith.addf %998, %1012 : vector<16x128xf32>
    %1014 = vector.broadcast %277 : f32 to vector<16x128xf32>
    %1015 = arith.mulf %1014, %1007 : vector<16x128xf32>
    %1016 = arith.addf %1001, %1015 : vector<16x128xf32>
    %1017 = vector.broadcast %313 : f32 to vector<16x128xf32>
    %1018 = arith.mulf %1017, %1007 : vector<16x128xf32>
    %1019 = arith.addf %1004, %1018 : vector<16x128xf32>
    %c1_i32_275 = arith.constant 1 : i32
    %1020 = tpu.dynamic_rotate %974 by %c1_i32_275 dim 1 : vector<16x128xf32>, i32 -> vector<16x128xf32>
    %cst_276 = arith.constant 0.000000e+00 : f32
    %1021 = vector.broadcast %cst_276 : f32 to vector<16x128xf32>
    %1022 = arith.select %25, %1020, %1021 : vector<16x128xi1>, vector<16x128xf32>
    %1023 = vector.broadcast %214 : f32 to vector<16x128xf32>
    %1024 = arith.mulf %1023, %1022 : vector<16x128xf32>
    %1025 = arith.addf %1010, %1024 : vector<16x128xf32>
    %1026 = vector.broadcast %250 : f32 to vector<16x128xf32>
    %1027 = arith.mulf %1026, %1022 : vector<16x128xf32>
    %1028 = arith.addf %1013, %1027 : vector<16x128xf32>
    %1029 = vector.broadcast %286 : f32 to vector<16x128xf32>
    %1030 = arith.mulf %1029, %1022 : vector<16x128xf32>
    %1031 = arith.addf %1016, %1030 : vector<16x128xf32>
    %1032 = vector.broadcast %322 : f32 to vector<16x128xf32>
    %1033 = arith.mulf %1032, %1022 : vector<16x128xf32>
    %1034 = arith.addf %1019, %1033 : vector<16x128xf32>
    %1035 = vector.broadcast %188 : f32 to vector<16x128xf32>
    %1036 = arith.mulf %1035, %965 : vector<16x128xf32>
    %1037 = arith.addf %1025, %1036 : vector<16x128xf32>
    %1038 = vector.broadcast %224 : f32 to vector<16x128xf32>
    %1039 = arith.mulf %1038, %965 : vector<16x128xf32>
    %1040 = arith.addf %1028, %1039 : vector<16x128xf32>
    %1041 = vector.broadcast %260 : f32 to vector<16x128xf32>
    %1042 = arith.mulf %1041, %965 : vector<16x128xf32>
    %1043 = arith.addf %1031, %1042 : vector<16x128xf32>
    %1044 = vector.broadcast %296 : f32 to vector<16x128xf32>
    %1045 = arith.mulf %1044, %965 : vector<16x128xf32>
    %1046 = arith.addf %1034, %1045 : vector<16x128xf32>
    %1047 = vector.broadcast %197 : f32 to vector<16x128xf32>
    %1048 = arith.mulf %1047, %968 : vector<16x128xf32>
    %1049 = arith.addf %1037, %1048 : vector<16x128xf32>
    %1050 = vector.broadcast %233 : f32 to vector<16x128xf32>
    %1051 = arith.mulf %1050, %968 : vector<16x128xf32>
    %1052 = arith.addf %1040, %1051 : vector<16x128xf32>
    %1053 = vector.broadcast %269 : f32 to vector<16x128xf32>
    %1054 = arith.mulf %1053, %968 : vector<16x128xf32>
    %1055 = arith.addf %1043, %1054 : vector<16x128xf32>
    %1056 = vector.broadcast %305 : f32 to vector<16x128xf32>
    %1057 = arith.mulf %1056, %968 : vector<16x128xf32>
    %1058 = arith.addf %1046, %1057 : vector<16x128xf32>
    %1059 = vector.broadcast %206 : f32 to vector<16x128xf32>
    %1060 = arith.mulf %1059, %971 : vector<16x128xf32>
    %1061 = arith.addf %1049, %1060 : vector<16x128xf32>
    %1062 = vector.broadcast %242 : f32 to vector<16x128xf32>
    %1063 = arith.mulf %1062, %971 : vector<16x128xf32>
    %1064 = arith.addf %1052, %1063 : vector<16x128xf32>
    %1065 = vector.broadcast %278 : f32 to vector<16x128xf32>
    %1066 = arith.mulf %1065, %971 : vector<16x128xf32>
    %1067 = arith.addf %1055, %1066 : vector<16x128xf32>
    %1068 = vector.broadcast %314 : f32 to vector<16x128xf32>
    %1069 = arith.mulf %1068, %971 : vector<16x128xf32>
    %1070 = arith.addf %1058, %1069 : vector<16x128xf32>
    %1071 = vector.broadcast %215 : f32 to vector<16x128xf32>
    %1072 = arith.mulf %1071, %974 : vector<16x128xf32>
    %1073 = arith.addf %1061, %1072 : vector<16x128xf32>
    %1074 = vector.broadcast %251 : f32 to vector<16x128xf32>
    %1075 = arith.mulf %1074, %974 : vector<16x128xf32>
    %1076 = arith.addf %1064, %1075 : vector<16x128xf32>
    %1077 = vector.broadcast %287 : f32 to vector<16x128xf32>
    %1078 = arith.mulf %1077, %974 : vector<16x128xf32>
    %1079 = arith.addf %1067, %1078 : vector<16x128xf32>
    %1080 = vector.broadcast %323 : f32 to vector<16x128xf32>
    %1081 = arith.mulf %1080, %974 : vector<16x128xf32>
    %1082 = arith.addf %1070, %1081 : vector<16x128xf32>
    %c127_i32_277 = arith.constant 127 : i32
    %1083 = tpu.dynamic_rotate %965 by %c127_i32_277 dim 1 : vector<16x128xf32>, i32 -> vector<16x128xf32>
    %cst_278 = arith.constant 0.000000e+00 : f32
    %1084 = vector.broadcast %cst_278 : f32 to vector<16x128xf32>
    %1085 = arith.select %23, %1083, %1084 : vector<16x128xi1>, vector<16x128xf32>
    %1086 = vector.broadcast %189 : f32 to vector<16x128xf32>
    %1087 = arith.mulf %1086, %1085 : vector<16x128xf32>
    %1088 = arith.addf %1073, %1087 : vector<16x128xf32>
    %1089 = vector.broadcast %225 : f32 to vector<16x128xf32>
    %1090 = arith.mulf %1089, %1085 : vector<16x128xf32>
    %1091 = arith.addf %1076, %1090 : vector<16x128xf32>
    %1092 = vector.broadcast %261 : f32 to vector<16x128xf32>
    %1093 = arith.mulf %1092, %1085 : vector<16x128xf32>
    %1094 = arith.addf %1079, %1093 : vector<16x128xf32>
    %1095 = vector.broadcast %297 : f32 to vector<16x128xf32>
    %1096 = arith.mulf %1095, %1085 : vector<16x128xf32>
    %1097 = arith.addf %1082, %1096 : vector<16x128xf32>
    %c127_i32_279 = arith.constant 127 : i32
    %1098 = tpu.dynamic_rotate %968 by %c127_i32_279 dim 1 : vector<16x128xf32>, i32 -> vector<16x128xf32>
    %cst_280 = arith.constant 0.000000e+00 : f32
    %1099 = vector.broadcast %cst_280 : f32 to vector<16x128xf32>
    %1100 = arith.select %23, %1098, %1099 : vector<16x128xi1>, vector<16x128xf32>
    %1101 = vector.broadcast %198 : f32 to vector<16x128xf32>
    %1102 = arith.mulf %1101, %1100 : vector<16x128xf32>
    %1103 = arith.addf %1088, %1102 : vector<16x128xf32>
    %1104 = vector.broadcast %234 : f32 to vector<16x128xf32>
    %1105 = arith.mulf %1104, %1100 : vector<16x128xf32>
    %1106 = arith.addf %1091, %1105 : vector<16x128xf32>
    %1107 = vector.broadcast %270 : f32 to vector<16x128xf32>
    %1108 = arith.mulf %1107, %1100 : vector<16x128xf32>
    %1109 = arith.addf %1094, %1108 : vector<16x128xf32>
    %1110 = vector.broadcast %306 : f32 to vector<16x128xf32>
    %1111 = arith.mulf %1110, %1100 : vector<16x128xf32>
    %1112 = arith.addf %1097, %1111 : vector<16x128xf32>
    %c127_i32_281 = arith.constant 127 : i32
    %1113 = tpu.dynamic_rotate %971 by %c127_i32_281 dim 1 : vector<16x128xf32>, i32 -> vector<16x128xf32>
    %cst_282 = arith.constant 0.000000e+00 : f32
    %1114 = vector.broadcast %cst_282 : f32 to vector<16x128xf32>
    %1115 = arith.select %23, %1113, %1114 : vector<16x128xi1>, vector<16x128xf32>
    %1116 = vector.broadcast %207 : f32 to vector<16x128xf32>
    %1117 = arith.mulf %1116, %1115 : vector<16x128xf32>
    %1118 = arith.addf %1103, %1117 : vector<16x128xf32>
    %1119 = vector.broadcast %243 : f32 to vector<16x128xf32>
    %1120 = arith.mulf %1119, %1115 : vector<16x128xf32>
    %1121 = arith.addf %1106, %1120 : vector<16x128xf32>
    %1122 = vector.broadcast %279 : f32 to vector<16x128xf32>
    %1123 = arith.mulf %1122, %1115 : vector<16x128xf32>
    %1124 = arith.addf %1109, %1123 : vector<16x128xf32>
    %1125 = vector.broadcast %315 : f32 to vector<16x128xf32>
    %1126 = arith.mulf %1125, %1115 : vector<16x128xf32>
    %1127 = arith.addf %1112, %1126 : vector<16x128xf32>
    %c127_i32_283 = arith.constant 127 : i32
    %1128 = tpu.dynamic_rotate %974 by %c127_i32_283 dim 1 : vector<16x128xf32>, i32 -> vector<16x128xf32>
    %cst_284 = arith.constant 0.000000e+00 : f32
    %1129 = vector.broadcast %cst_284 : f32 to vector<16x128xf32>
    %1130 = arith.select %23, %1128, %1129 : vector<16x128xi1>, vector<16x128xf32>
    %1131 = vector.broadcast %216 : f32 to vector<16x128xf32>
    %1132 = arith.mulf %1131, %1130 : vector<16x128xf32>
    %1133 = arith.addf %1118, %1132 : vector<16x128xf32>
    %1134 = vector.broadcast %252 : f32 to vector<16x128xf32>
    %1135 = arith.mulf %1134, %1130 : vector<16x128xf32>
    %1136 = arith.addf %1121, %1135 : vector<16x128xf32>
    %1137 = vector.broadcast %288 : f32 to vector<16x128xf32>
    %1138 = arith.mulf %1137, %1130 : vector<16x128xf32>
    %1139 = arith.addf %1124, %1138 : vector<16x128xf32>
    %1140 = vector.broadcast %324 : f32 to vector<16x128xf32>
    %1141 = arith.mulf %1140, %1130 : vector<16x128xf32>
    %1142 = arith.addf %1127, %1141 : vector<16x128xf32>
    %c1_i32_285 = arith.constant 1 : i32
    %1143 = tpu.dynamic_rotate %934 by %c1_i32_285 dim 1 : vector<16x128xf32>, i32 -> vector<16x128xf32>
    %cst_286 = arith.constant 0.000000e+00 : f32
    %1144 = vector.broadcast %cst_286 : f32 to vector<16x128xf32>
    %1145 = arith.select %25, %1143, %1144 : vector<16x128xi1>, vector<16x128xf32>
    %1146 = vector.broadcast %190 : f32 to vector<16x128xf32>
    %1147 = arith.mulf %1146, %1145 : vector<16x128xf32>
    %1148 = arith.addf %1133, %1147 : vector<16x128xf32>
    %1149 = vector.broadcast %226 : f32 to vector<16x128xf32>
    %1150 = arith.mulf %1149, %1145 : vector<16x128xf32>
    %1151 = arith.addf %1136, %1150 : vector<16x128xf32>
    %1152 = vector.broadcast %262 : f32 to vector<16x128xf32>
    %1153 = arith.mulf %1152, %1145 : vector<16x128xf32>
    %1154 = arith.addf %1139, %1153 : vector<16x128xf32>
    %1155 = vector.broadcast %298 : f32 to vector<16x128xf32>
    %1156 = arith.mulf %1155, %1145 : vector<16x128xf32>
    %1157 = arith.addf %1142, %1156 : vector<16x128xf32>
    %c1_i32_287 = arith.constant 1 : i32
    %1158 = tpu.dynamic_rotate %942 by %c1_i32_287 dim 1 : vector<16x128xf32>, i32 -> vector<16x128xf32>
    %cst_288 = arith.constant 0.000000e+00 : f32
    %1159 = vector.broadcast %cst_288 : f32 to vector<16x128xf32>
    %1160 = arith.select %25, %1158, %1159 : vector<16x128xi1>, vector<16x128xf32>
    %1161 = vector.broadcast %199 : f32 to vector<16x128xf32>
    %1162 = arith.mulf %1161, %1160 : vector<16x128xf32>
    %1163 = arith.addf %1148, %1162 : vector<16x128xf32>
    %1164 = vector.broadcast %235 : f32 to vector<16x128xf32>
    %1165 = arith.mulf %1164, %1160 : vector<16x128xf32>
    %1166 = arith.addf %1151, %1165 : vector<16x128xf32>
    %1167 = vector.broadcast %271 : f32 to vector<16x128xf32>
    %1168 = arith.mulf %1167, %1160 : vector<16x128xf32>
    %1169 = arith.addf %1154, %1168 : vector<16x128xf32>
    %1170 = vector.broadcast %307 : f32 to vector<16x128xf32>
    %1171 = arith.mulf %1170, %1160 : vector<16x128xf32>
    %1172 = arith.addf %1157, %1171 : vector<16x128xf32>
    %c1_i32_289 = arith.constant 1 : i32
    %1173 = tpu.dynamic_rotate %950 by %c1_i32_289 dim 1 : vector<16x128xf32>, i32 -> vector<16x128xf32>
    %cst_290 = arith.constant 0.000000e+00 : f32
    %1174 = vector.broadcast %cst_290 : f32 to vector<16x128xf32>
    %1175 = arith.select %25, %1173, %1174 : vector<16x128xi1>, vector<16x128xf32>
    %1176 = vector.broadcast %208 : f32 to vector<16x128xf32>
    %1177 = arith.mulf %1176, %1175 : vector<16x128xf32>
    %1178 = arith.addf %1163, %1177 : vector<16x128xf32>
    %1179 = vector.broadcast %244 : f32 to vector<16x128xf32>
    %1180 = arith.mulf %1179, %1175 : vector<16x128xf32>
    %1181 = arith.addf %1166, %1180 : vector<16x128xf32>
    %1182 = vector.broadcast %280 : f32 to vector<16x128xf32>
    %1183 = arith.mulf %1182, %1175 : vector<16x128xf32>
    %1184 = arith.addf %1169, %1183 : vector<16x128xf32>
    %1185 = vector.broadcast %316 : f32 to vector<16x128xf32>
    %1186 = arith.mulf %1185, %1175 : vector<16x128xf32>
    %1187 = arith.addf %1172, %1186 : vector<16x128xf32>
    %c1_i32_291 = arith.constant 1 : i32
    %1188 = tpu.dynamic_rotate %958 by %c1_i32_291 dim 1 : vector<16x128xf32>, i32 -> vector<16x128xf32>
    %cst_292 = arith.constant 0.000000e+00 : f32
    %1189 = vector.broadcast %cst_292 : f32 to vector<16x128xf32>
    %1190 = arith.select %25, %1188, %1189 : vector<16x128xi1>, vector<16x128xf32>
    %1191 = vector.broadcast %217 : f32 to vector<16x128xf32>
    %1192 = arith.mulf %1191, %1190 : vector<16x128xf32>
    %1193 = arith.addf %1178, %1192 : vector<16x128xf32>
    %1194 = vector.broadcast %253 : f32 to vector<16x128xf32>
    %1195 = arith.mulf %1194, %1190 : vector<16x128xf32>
    %1196 = arith.addf %1181, %1195 : vector<16x128xf32>
    %1197 = vector.broadcast %289 : f32 to vector<16x128xf32>
    %1198 = arith.mulf %1197, %1190 : vector<16x128xf32>
    %1199 = arith.addf %1184, %1198 : vector<16x128xf32>
    %1200 = vector.broadcast %325 : f32 to vector<16x128xf32>
    %1201 = arith.mulf %1200, %1190 : vector<16x128xf32>
    %1202 = arith.addf %1187, %1201 : vector<16x128xf32>
    %1203 = vector.broadcast %191 : f32 to vector<16x128xf32>
    %1204 = arith.mulf %1203, %934 : vector<16x128xf32>
    %1205 = arith.addf %1193, %1204 : vector<16x128xf32>
    %1206 = vector.broadcast %227 : f32 to vector<16x128xf32>
    %1207 = arith.mulf %1206, %934 : vector<16x128xf32>
    %1208 = arith.addf %1196, %1207 : vector<16x128xf32>
    %1209 = vector.broadcast %263 : f32 to vector<16x128xf32>
    %1210 = arith.mulf %1209, %934 : vector<16x128xf32>
    %1211 = arith.addf %1199, %1210 : vector<16x128xf32>
    %1212 = vector.broadcast %299 : f32 to vector<16x128xf32>
    %1213 = arith.mulf %1212, %934 : vector<16x128xf32>
    %1214 = arith.addf %1202, %1213 : vector<16x128xf32>
    %1215 = vector.broadcast %200 : f32 to vector<16x128xf32>
    %1216 = arith.mulf %1215, %942 : vector<16x128xf32>
    %1217 = arith.addf %1205, %1216 : vector<16x128xf32>
    %1218 = vector.broadcast %236 : f32 to vector<16x128xf32>
    %1219 = arith.mulf %1218, %942 : vector<16x128xf32>
    %1220 = arith.addf %1208, %1219 : vector<16x128xf32>
    %1221 = vector.broadcast %272 : f32 to vector<16x128xf32>
    %1222 = arith.mulf %1221, %942 : vector<16x128xf32>
    %1223 = arith.addf %1211, %1222 : vector<16x128xf32>
    %1224 = vector.broadcast %308 : f32 to vector<16x128xf32>
    %1225 = arith.mulf %1224, %942 : vector<16x128xf32>
    %1226 = arith.addf %1214, %1225 : vector<16x128xf32>
    %1227 = vector.broadcast %209 : f32 to vector<16x128xf32>
    %1228 = arith.mulf %1227, %950 : vector<16x128xf32>
    %1229 = arith.addf %1217, %1228 : vector<16x128xf32>
    %1230 = vector.broadcast %245 : f32 to vector<16x128xf32>
    %1231 = arith.mulf %1230, %950 : vector<16x128xf32>
    %1232 = arith.addf %1220, %1231 : vector<16x128xf32>
    %1233 = vector.broadcast %281 : f32 to vector<16x128xf32>
    %1234 = arith.mulf %1233, %950 : vector<16x128xf32>
    %1235 = arith.addf %1223, %1234 : vector<16x128xf32>
    %1236 = vector.broadcast %317 : f32 to vector<16x128xf32>
    %1237 = arith.mulf %1236, %950 : vector<16x128xf32>
    %1238 = arith.addf %1226, %1237 : vector<16x128xf32>
    %1239 = vector.broadcast %218 : f32 to vector<16x128xf32>
    %1240 = arith.mulf %1239, %958 : vector<16x128xf32>
    %1241 = arith.addf %1229, %1240 : vector<16x128xf32>
    %1242 = vector.broadcast %254 : f32 to vector<16x128xf32>
    %1243 = arith.mulf %1242, %958 : vector<16x128xf32>
    %1244 = arith.addf %1232, %1243 : vector<16x128xf32>
    %1245 = vector.broadcast %290 : f32 to vector<16x128xf32>
    %1246 = arith.mulf %1245, %958 : vector<16x128xf32>
    %1247 = arith.addf %1235, %1246 : vector<16x128xf32>
    %1248 = vector.broadcast %326 : f32 to vector<16x128xf32>
    %1249 = arith.mulf %1248, %958 : vector<16x128xf32>
    %1250 = arith.addf %1238, %1249 : vector<16x128xf32>
    %c127_i32_293 = arith.constant 127 : i32
    %1251 = tpu.dynamic_rotate %934 by %c127_i32_293 dim 1 : vector<16x128xf32>, i32 -> vector<16x128xf32>
    %cst_294 = arith.constant 0.000000e+00 : f32
    %1252 = vector.broadcast %cst_294 : f32 to vector<16x128xf32>
    %1253 = arith.select %23, %1251, %1252 : vector<16x128xi1>, vector<16x128xf32>
    %1254 = vector.broadcast %192 : f32 to vector<16x128xf32>
    %1255 = arith.mulf %1254, %1253 : vector<16x128xf32>
    %1256 = arith.addf %1241, %1255 : vector<16x128xf32>
    %1257 = vector.broadcast %228 : f32 to vector<16x128xf32>
    %1258 = arith.mulf %1257, %1253 : vector<16x128xf32>
    %1259 = arith.addf %1244, %1258 : vector<16x128xf32>
    %1260 = vector.broadcast %264 : f32 to vector<16x128xf32>
    %1261 = arith.mulf %1260, %1253 : vector<16x128xf32>
    %1262 = arith.addf %1247, %1261 : vector<16x128xf32>
    %1263 = vector.broadcast %300 : f32 to vector<16x128xf32>
    %1264 = arith.mulf %1263, %1253 : vector<16x128xf32>
    %1265 = arith.addf %1250, %1264 : vector<16x128xf32>
    %c127_i32_295 = arith.constant 127 : i32
    %1266 = tpu.dynamic_rotate %942 by %c127_i32_295 dim 1 : vector<16x128xf32>, i32 -> vector<16x128xf32>
    %cst_296 = arith.constant 0.000000e+00 : f32
    %1267 = vector.broadcast %cst_296 : f32 to vector<16x128xf32>
    %1268 = arith.select %23, %1266, %1267 : vector<16x128xi1>, vector<16x128xf32>
    %1269 = vector.broadcast %201 : f32 to vector<16x128xf32>
    %1270 = arith.mulf %1269, %1268 : vector<16x128xf32>
    %1271 = arith.addf %1256, %1270 : vector<16x128xf32>
    %1272 = vector.broadcast %237 : f32 to vector<16x128xf32>
    %1273 = arith.mulf %1272, %1268 : vector<16x128xf32>
    %1274 = arith.addf %1259, %1273 : vector<16x128xf32>
    %1275 = vector.broadcast %273 : f32 to vector<16x128xf32>
    %1276 = arith.mulf %1275, %1268 : vector<16x128xf32>
    %1277 = arith.addf %1262, %1276 : vector<16x128xf32>
    %1278 = vector.broadcast %309 : f32 to vector<16x128xf32>
    %1279 = arith.mulf %1278, %1268 : vector<16x128xf32>
    %1280 = arith.addf %1265, %1279 : vector<16x128xf32>
    %c127_i32_297 = arith.constant 127 : i32
    %1281 = tpu.dynamic_rotate %950 by %c127_i32_297 dim 1 : vector<16x128xf32>, i32 -> vector<16x128xf32>
    %cst_298 = arith.constant 0.000000e+00 : f32
    %1282 = vector.broadcast %cst_298 : f32 to vector<16x128xf32>
    %1283 = arith.select %23, %1281, %1282 : vector<16x128xi1>, vector<16x128xf32>
    %1284 = vector.broadcast %210 : f32 to vector<16x128xf32>
    %1285 = arith.mulf %1284, %1283 : vector<16x128xf32>
    %1286 = arith.addf %1271, %1285 : vector<16x128xf32>
    %1287 = vector.broadcast %246 : f32 to vector<16x128xf32>
    %1288 = arith.mulf %1287, %1283 : vector<16x128xf32>
    %1289 = arith.addf %1274, %1288 : vector<16x128xf32>
    %1290 = vector.broadcast %282 : f32 to vector<16x128xf32>
    %1291 = arith.mulf %1290, %1283 : vector<16x128xf32>
    %1292 = arith.addf %1277, %1291 : vector<16x128xf32>
    %1293 = vector.broadcast %318 : f32 to vector<16x128xf32>
    %1294 = arith.mulf %1293, %1283 : vector<16x128xf32>
    %1295 = arith.addf %1280, %1294 : vector<16x128xf32>
    %c127_i32_299 = arith.constant 127 : i32
    %1296 = tpu.dynamic_rotate %958 by %c127_i32_299 dim 1 : vector<16x128xf32>, i32 -> vector<16x128xf32>
    %cst_300 = arith.constant 0.000000e+00 : f32
    %1297 = vector.broadcast %cst_300 : f32 to vector<16x128xf32>
    %1298 = arith.select %23, %1296, %1297 : vector<16x128xi1>, vector<16x128xf32>
    %1299 = vector.broadcast %219 : f32 to vector<16x128xf32>
    %1300 = arith.mulf %1299, %1298 : vector<16x128xf32>
    %1301 = arith.addf %1286, %1300 : vector<16x128xf32>
    %1302 = vector.broadcast %255 : f32 to vector<16x128xf32>
    %1303 = arith.mulf %1302, %1298 : vector<16x128xf32>
    %1304 = arith.addf %1289, %1303 : vector<16x128xf32>
    %1305 = vector.broadcast %291 : f32 to vector<16x128xf32>
    %1306 = arith.mulf %1305, %1298 : vector<16x128xf32>
    %1307 = arith.addf %1292, %1306 : vector<16x128xf32>
    %1308 = vector.broadcast %327 : f32 to vector<16x128xf32>
    %1309 = arith.mulf %1308, %1298 : vector<16x128xf32>
    %1310 = arith.addf %1295, %1309 : vector<16x128xf32>
    %c15_i32_301 = arith.constant 15 : i32
    %1311 = tpu.dynamic_rotate %934 by %c15_i32_301 dim 0 : vector<16x128xf32>, i32 -> vector<16x128xf32>
    %cst_302 = arith.constant 0.000000e+00 : f32
    %1312 = vector.broadcast %cst_302 : f32 to vector<16x128xf32>
    %1313 = arith.select %19, %1311, %1312 : vector<16x128xi1>, vector<16x128xf32>
    %c15_i32_303 = arith.constant 15 : i32
    %1314 = tpu.dynamic_rotate %942 by %c15_i32_303 dim 0 : vector<16x128xf32>, i32 -> vector<16x128xf32>
    %cst_304 = arith.constant 0.000000e+00 : f32
    %1315 = vector.broadcast %cst_304 : f32 to vector<16x128xf32>
    %1316 = arith.select %19, %1314, %1315 : vector<16x128xi1>, vector<16x128xf32>
    %c15_i32_305 = arith.constant 15 : i32
    %1317 = tpu.dynamic_rotate %950 by %c15_i32_305 dim 0 : vector<16x128xf32>, i32 -> vector<16x128xf32>
    %cst_306 = arith.constant 0.000000e+00 : f32
    %1318 = vector.broadcast %cst_306 : f32 to vector<16x128xf32>
    %1319 = arith.select %19, %1317, %1318 : vector<16x128xi1>, vector<16x128xf32>
    %c15_i32_307 = arith.constant 15 : i32
    %1320 = tpu.dynamic_rotate %958 by %c15_i32_307 dim 0 : vector<16x128xf32>, i32 -> vector<16x128xf32>
    %cst_308 = arith.constant 0.000000e+00 : f32
    %1321 = vector.broadcast %cst_308 : f32 to vector<16x128xf32>
    %1322 = arith.select %19, %1320, %1321 : vector<16x128xi1>, vector<16x128xf32>
    %c1_i32_309 = arith.constant 1 : i32
    %1323 = tpu.dynamic_rotate %1313 by %c1_i32_309 dim 1 : vector<16x128xf32>, i32 -> vector<16x128xf32>
    %cst_310 = arith.constant 0.000000e+00 : f32
    %1324 = vector.broadcast %cst_310 : f32 to vector<16x128xf32>
    %1325 = arith.select %25, %1323, %1324 : vector<16x128xi1>, vector<16x128xf32>
    %1326 = vector.broadcast %193 : f32 to vector<16x128xf32>
    %1327 = arith.mulf %1326, %1325 : vector<16x128xf32>
    %1328 = arith.addf %1301, %1327 : vector<16x128xf32>
    %1329 = vector.broadcast %229 : f32 to vector<16x128xf32>
    %1330 = arith.mulf %1329, %1325 : vector<16x128xf32>
    %1331 = arith.addf %1304, %1330 : vector<16x128xf32>
    %1332 = vector.broadcast %265 : f32 to vector<16x128xf32>
    %1333 = arith.mulf %1332, %1325 : vector<16x128xf32>
    %1334 = arith.addf %1307, %1333 : vector<16x128xf32>
    %1335 = vector.broadcast %301 : f32 to vector<16x128xf32>
    %1336 = arith.mulf %1335, %1325 : vector<16x128xf32>
    %1337 = arith.addf %1310, %1336 : vector<16x128xf32>
    %c1_i32_311 = arith.constant 1 : i32
    %1338 = tpu.dynamic_rotate %1316 by %c1_i32_311 dim 1 : vector<16x128xf32>, i32 -> vector<16x128xf32>
    %cst_312 = arith.constant 0.000000e+00 : f32
    %1339 = vector.broadcast %cst_312 : f32 to vector<16x128xf32>
    %1340 = arith.select %25, %1338, %1339 : vector<16x128xi1>, vector<16x128xf32>
    %1341 = vector.broadcast %202 : f32 to vector<16x128xf32>
    %1342 = arith.mulf %1341, %1340 : vector<16x128xf32>
    %1343 = arith.addf %1328, %1342 : vector<16x128xf32>
    %1344 = vector.broadcast %238 : f32 to vector<16x128xf32>
    %1345 = arith.mulf %1344, %1340 : vector<16x128xf32>
    %1346 = arith.addf %1331, %1345 : vector<16x128xf32>
    %1347 = vector.broadcast %274 : f32 to vector<16x128xf32>
    %1348 = arith.mulf %1347, %1340 : vector<16x128xf32>
    %1349 = arith.addf %1334, %1348 : vector<16x128xf32>
    %1350 = vector.broadcast %310 : f32 to vector<16x128xf32>
    %1351 = arith.mulf %1350, %1340 : vector<16x128xf32>
    %1352 = arith.addf %1337, %1351 : vector<16x128xf32>
    %c1_i32_313 = arith.constant 1 : i32
    %1353 = tpu.dynamic_rotate %1319 by %c1_i32_313 dim 1 : vector<16x128xf32>, i32 -> vector<16x128xf32>
    %cst_314 = arith.constant 0.000000e+00 : f32
    %1354 = vector.broadcast %cst_314 : f32 to vector<16x128xf32>
    %1355 = arith.select %25, %1353, %1354 : vector<16x128xi1>, vector<16x128xf32>
    %1356 = vector.broadcast %211 : f32 to vector<16x128xf32>
    %1357 = arith.mulf %1356, %1355 : vector<16x128xf32>
    %1358 = arith.addf %1343, %1357 : vector<16x128xf32>
    %1359 = vector.broadcast %247 : f32 to vector<16x128xf32>
    %1360 = arith.mulf %1359, %1355 : vector<16x128xf32>
    %1361 = arith.addf %1346, %1360 : vector<16x128xf32>
    %1362 = vector.broadcast %283 : f32 to vector<16x128xf32>
    %1363 = arith.mulf %1362, %1355 : vector<16x128xf32>
    %1364 = arith.addf %1349, %1363 : vector<16x128xf32>
    %1365 = vector.broadcast %319 : f32 to vector<16x128xf32>
    %1366 = arith.mulf %1365, %1355 : vector<16x128xf32>
    %1367 = arith.addf %1352, %1366 : vector<16x128xf32>
    %c1_i32_315 = arith.constant 1 : i32
    %1368 = tpu.dynamic_rotate %1322 by %c1_i32_315 dim 1 : vector<16x128xf32>, i32 -> vector<16x128xf32>
    %cst_316 = arith.constant 0.000000e+00 : f32
    %1369 = vector.broadcast %cst_316 : f32 to vector<16x128xf32>
    %1370 = arith.select %25, %1368, %1369 : vector<16x128xi1>, vector<16x128xf32>
    %1371 = vector.broadcast %220 : f32 to vector<16x128xf32>
    %1372 = arith.mulf %1371, %1370 : vector<16x128xf32>
    %1373 = arith.addf %1358, %1372 : vector<16x128xf32>
    %1374 = vector.broadcast %256 : f32 to vector<16x128xf32>
    %1375 = arith.mulf %1374, %1370 : vector<16x128xf32>
    %1376 = arith.addf %1361, %1375 : vector<16x128xf32>
    %1377 = vector.broadcast %292 : f32 to vector<16x128xf32>
    %1378 = arith.mulf %1377, %1370 : vector<16x128xf32>
    %1379 = arith.addf %1364, %1378 : vector<16x128xf32>
    %1380 = vector.broadcast %328 : f32 to vector<16x128xf32>
    %1381 = arith.mulf %1380, %1370 : vector<16x128xf32>
    %1382 = arith.addf %1367, %1381 : vector<16x128xf32>
    %1383 = vector.broadcast %194 : f32 to vector<16x128xf32>
    %1384 = arith.mulf %1383, %1313 : vector<16x128xf32>
    %1385 = arith.addf %1373, %1384 : vector<16x128xf32>
    %1386 = vector.broadcast %230 : f32 to vector<16x128xf32>
    %1387 = arith.mulf %1386, %1313 : vector<16x128xf32>
    %1388 = arith.addf %1376, %1387 : vector<16x128xf32>
    %1389 = vector.broadcast %266 : f32 to vector<16x128xf32>
    %1390 = arith.mulf %1389, %1313 : vector<16x128xf32>
    %1391 = arith.addf %1379, %1390 : vector<16x128xf32>
    %1392 = vector.broadcast %302 : f32 to vector<16x128xf32>
    %1393 = arith.mulf %1392, %1313 : vector<16x128xf32>
    %1394 = arith.addf %1382, %1393 : vector<16x128xf32>
    %1395 = vector.broadcast %203 : f32 to vector<16x128xf32>
    %1396 = arith.mulf %1395, %1316 : vector<16x128xf32>
    %1397 = arith.addf %1385, %1396 : vector<16x128xf32>
    %1398 = vector.broadcast %239 : f32 to vector<16x128xf32>
    %1399 = arith.mulf %1398, %1316 : vector<16x128xf32>
    %1400 = arith.addf %1388, %1399 : vector<16x128xf32>
    %1401 = vector.broadcast %275 : f32 to vector<16x128xf32>
    %1402 = arith.mulf %1401, %1316 : vector<16x128xf32>
    %1403 = arith.addf %1391, %1402 : vector<16x128xf32>
    %1404 = vector.broadcast %311 : f32 to vector<16x128xf32>
    %1405 = arith.mulf %1404, %1316 : vector<16x128xf32>
    %1406 = arith.addf %1394, %1405 : vector<16x128xf32>
    %1407 = vector.broadcast %212 : f32 to vector<16x128xf32>
    %1408 = arith.mulf %1407, %1319 : vector<16x128xf32>
    %1409 = arith.addf %1397, %1408 : vector<16x128xf32>
    %1410 = vector.broadcast %248 : f32 to vector<16x128xf32>
    %1411 = arith.mulf %1410, %1319 : vector<16x128xf32>
    %1412 = arith.addf %1400, %1411 : vector<16x128xf32>
    %1413 = vector.broadcast %284 : f32 to vector<16x128xf32>
    %1414 = arith.mulf %1413, %1319 : vector<16x128xf32>
    %1415 = arith.addf %1403, %1414 : vector<16x128xf32>
    %1416 = vector.broadcast %320 : f32 to vector<16x128xf32>
    %1417 = arith.mulf %1416, %1319 : vector<16x128xf32>
    %1418 = arith.addf %1406, %1417 : vector<16x128xf32>
    %1419 = vector.broadcast %221 : f32 to vector<16x128xf32>
    %1420 = arith.mulf %1419, %1322 : vector<16x128xf32>
    %1421 = arith.addf %1409, %1420 : vector<16x128xf32>
    %1422 = vector.broadcast %257 : f32 to vector<16x128xf32>
    %1423 = arith.mulf %1422, %1322 : vector<16x128xf32>
    %1424 = arith.addf %1412, %1423 : vector<16x128xf32>
    %1425 = vector.broadcast %293 : f32 to vector<16x128xf32>
    %1426 = arith.mulf %1425, %1322 : vector<16x128xf32>
    %1427 = arith.addf %1415, %1426 : vector<16x128xf32>
    %1428 = vector.broadcast %329 : f32 to vector<16x128xf32>
    %1429 = arith.mulf %1428, %1322 : vector<16x128xf32>
    %1430 = arith.addf %1418, %1429 : vector<16x128xf32>
    %c127_i32_317 = arith.constant 127 : i32
    %1431 = tpu.dynamic_rotate %1313 by %c127_i32_317 dim 1 : vector<16x128xf32>, i32 -> vector<16x128xf32>
    %cst_318 = arith.constant 0.000000e+00 : f32
    %1432 = vector.broadcast %cst_318 : f32 to vector<16x128xf32>
    %1433 = arith.select %23, %1431, %1432 : vector<16x128xi1>, vector<16x128xf32>
    %1434 = vector.broadcast %195 : f32 to vector<16x128xf32>
    %1435 = arith.mulf %1434, %1433 : vector<16x128xf32>
    %1436 = arith.addf %1421, %1435 : vector<16x128xf32>
    %1437 = vector.broadcast %231 : f32 to vector<16x128xf32>
    %1438 = arith.mulf %1437, %1433 : vector<16x128xf32>
    %1439 = arith.addf %1424, %1438 : vector<16x128xf32>
    %1440 = vector.broadcast %267 : f32 to vector<16x128xf32>
    %1441 = arith.mulf %1440, %1433 : vector<16x128xf32>
    %1442 = arith.addf %1427, %1441 : vector<16x128xf32>
    %1443 = vector.broadcast %303 : f32 to vector<16x128xf32>
    %1444 = arith.mulf %1443, %1433 : vector<16x128xf32>
    %1445 = arith.addf %1430, %1444 : vector<16x128xf32>
    %c127_i32_319 = arith.constant 127 : i32
    %1446 = tpu.dynamic_rotate %1316 by %c127_i32_319 dim 1 : vector<16x128xf32>, i32 -> vector<16x128xf32>
    %cst_320 = arith.constant 0.000000e+00 : f32
    %1447 = vector.broadcast %cst_320 : f32 to vector<16x128xf32>
    %1448 = arith.select %23, %1446, %1447 : vector<16x128xi1>, vector<16x128xf32>
    %1449 = vector.broadcast %204 : f32 to vector<16x128xf32>
    %1450 = arith.mulf %1449, %1448 : vector<16x128xf32>
    %1451 = arith.addf %1436, %1450 : vector<16x128xf32>
    %1452 = vector.broadcast %240 : f32 to vector<16x128xf32>
    %1453 = arith.mulf %1452, %1448 : vector<16x128xf32>
    %1454 = arith.addf %1439, %1453 : vector<16x128xf32>
    %1455 = vector.broadcast %276 : f32 to vector<16x128xf32>
    %1456 = arith.mulf %1455, %1448 : vector<16x128xf32>
    %1457 = arith.addf %1442, %1456 : vector<16x128xf32>
    %1458 = vector.broadcast %312 : f32 to vector<16x128xf32>
    %1459 = arith.mulf %1458, %1448 : vector<16x128xf32>
    %1460 = arith.addf %1445, %1459 : vector<16x128xf32>
    %c127_i32_321 = arith.constant 127 : i32
    %1461 = tpu.dynamic_rotate %1319 by %c127_i32_321 dim 1 : vector<16x128xf32>, i32 -> vector<16x128xf32>
    %cst_322 = arith.constant 0.000000e+00 : f32
    %1462 = vector.broadcast %cst_322 : f32 to vector<16x128xf32>
    %1463 = arith.select %23, %1461, %1462 : vector<16x128xi1>, vector<16x128xf32>
    %1464 = vector.broadcast %213 : f32 to vector<16x128xf32>
    %1465 = arith.mulf %1464, %1463 : vector<16x128xf32>
    %1466 = arith.addf %1451, %1465 : vector<16x128xf32>
    %1467 = vector.broadcast %249 : f32 to vector<16x128xf32>
    %1468 = arith.mulf %1467, %1463 : vector<16x128xf32>
    %1469 = arith.addf %1454, %1468 : vector<16x128xf32>
    %1470 = vector.broadcast %285 : f32 to vector<16x128xf32>
    %1471 = arith.mulf %1470, %1463 : vector<16x128xf32>
    %1472 = arith.addf %1457, %1471 : vector<16x128xf32>
    %1473 = vector.broadcast %321 : f32 to vector<16x128xf32>
    %1474 = arith.mulf %1473, %1463 : vector<16x128xf32>
    %1475 = arith.addf %1460, %1474 : vector<16x128xf32>
    %c127_i32_323 = arith.constant 127 : i32
    %1476 = tpu.dynamic_rotate %1322 by %c127_i32_323 dim 1 : vector<16x128xf32>, i32 -> vector<16x128xf32>
    %cst_324 = arith.constant 0.000000e+00 : f32
    %1477 = vector.broadcast %cst_324 : f32 to vector<16x128xf32>
    %1478 = arith.select %23, %1476, %1477 : vector<16x128xi1>, vector<16x128xf32>
    %1479 = vector.broadcast %222 : f32 to vector<16x128xf32>
    %1480 = arith.mulf %1479, %1478 : vector<16x128xf32>
    %1481 = arith.addf %1466, %1480 : vector<16x128xf32>
    %1482 = vector.broadcast %258 : f32 to vector<16x128xf32>
    %1483 = arith.mulf %1482, %1478 : vector<16x128xf32>
    %1484 = arith.addf %1469, %1483 : vector<16x128xf32>
    %1485 = vector.broadcast %294 : f32 to vector<16x128xf32>
    %1486 = arith.mulf %1485, %1478 : vector<16x128xf32>
    %1487 = arith.addf %1472, %1486 : vector<16x128xf32>
    %1488 = vector.broadcast %330 : f32 to vector<16x128xf32>
    %1489 = arith.mulf %1488, %1478 : vector<16x128xf32>
    %1490 = arith.addf %1475, %1489 : vector<16x128xf32>
    %cst_325 = arith.constant dense<0.000000e+00> : vector<128xf32>
    %1491 = vector.multi_reduction <add>, %1481, %cst_325 [0] : vector<16x128xf32> to vector<128xf32>
    %1492 = vector.shape_cast %1491 : vector<128xf32> to vector<1x128xf32>
    %cst_326 = arith.constant dense<0.000000e+00> : vector<128xf32>
    %1493 = vector.multi_reduction <add>, %1484, %cst_326 [0] : vector<16x128xf32> to vector<128xf32>
    %1494 = vector.shape_cast %1493 : vector<128xf32> to vector<1x128xf32>
    %cst_327 = arith.constant dense<0.000000e+00> : vector<128xf32>
    %1495 = vector.multi_reduction <add>, %1487, %cst_327 [0] : vector<16x128xf32> to vector<128xf32>
    %1496 = vector.shape_cast %1495 : vector<128xf32> to vector<1x128xf32>
    %cst_328 = arith.constant dense<0.000000e+00> : vector<128xf32>
    %1497 = vector.multi_reduction <add>, %1490, %cst_328 [0] : vector<16x128xf32> to vector<128xf32>
    %1498 = vector.shape_cast %1497 : vector<128xf32> to vector<1x128xf32>
    %1499 = arith.mulf %1481, %1481 : vector<16x128xf32>
    %cst_329 = arith.constant dense<0.000000e+00> : vector<128xf32>
    %1500 = vector.multi_reduction <add>, %1499, %cst_329 [0] : vector<16x128xf32> to vector<128xf32>
    %1501 = vector.shape_cast %1500 : vector<128xf32> to vector<1x128xf32>
    %1502 = arith.mulf %1484, %1484 : vector<16x128xf32>
    %cst_330 = arith.constant dense<0.000000e+00> : vector<128xf32>
    %1503 = vector.multi_reduction <add>, %1502, %cst_330 [0] : vector<16x128xf32> to vector<128xf32>
    %1504 = vector.shape_cast %1503 : vector<128xf32> to vector<1x128xf32>
    %1505 = arith.mulf %1487, %1487 : vector<16x128xf32>
    %cst_331 = arith.constant dense<0.000000e+00> : vector<128xf32>
    %1506 = vector.multi_reduction <add>, %1505, %cst_331 [0] : vector<16x128xf32> to vector<128xf32>
    %1507 = vector.shape_cast %1506 : vector<128xf32> to vector<1x128xf32>
    %1508 = arith.mulf %1490, %1490 : vector<16x128xf32>
    %cst_332 = arith.constant dense<0.000000e+00> : vector<128xf32>
    %1509 = vector.multi_reduction <add>, %1508, %cst_332 [0] : vector<16x128xf32> to vector<128xf32>
    %1510 = vector.shape_cast %1509 : vector<128xf32> to vector<1x128xf32>
    %1511 = tpu.concatenate %1492, %1494, %1496, %1498, %1501, %1504, %1507, %1510 in 0 : vector<1x128xf32>, vector<1x128xf32>, vector<1x128xf32>, vector<1x128xf32>, vector<1x128xf32>, vector<1x128xf32>, vector<1x128xf32>, vector<1x128xf32> -> vector<8x128xf32>
    %c127_i32_333 = arith.constant 127 : i32
    %1512 = tpu.dynamic_rotate %1511 by %c127_i32_333 dim 1 : vector<8x128xf32>, i32 -> vector<8x128xf32>
    %c1_i32_334 = arith.constant 1 : i32
    %1513 = tpu.dynamic_rotate %1511 by %c1_i32_334 dim 1 : vector<8x128xf32>, i32 -> vector<8x128xf32>
    %1514 = vector.shape_cast %30 : vector<1x128xi1> to vector<1x128xi1>
    %1515 = vector.broadcast %1514 : vector<1x128xi1> to vector<8x128xi1>
    %1516 = arith.select %1515, %1512, %1513 : vector<8x128xi1>, vector<8x128xf32>
    %1517 = arith.addf %1511, %1516 : vector<8x128xf32>
    %c126_i32_335 = arith.constant 126 : i32
    %1518 = tpu.dynamic_rotate %1517 by %c126_i32_335 dim 1 : vector<8x128xf32>, i32 -> vector<8x128xf32>
    %c2_i32_336 = arith.constant 2 : i32
    %1519 = tpu.dynamic_rotate %1517 by %c2_i32_336 dim 1 : vector<8x128xf32>, i32 -> vector<8x128xf32>
    %1520 = vector.shape_cast %34 : vector<1x128xi1> to vector<1x128xi1>
    %1521 = vector.broadcast %1520 : vector<1x128xi1> to vector<8x128xi1>
    %1522 = arith.select %1521, %1518, %1519 : vector<8x128xi1>, vector<8x128xf32>
    %1523 = arith.addf %1517, %1522 : vector<8x128xf32>
    %c124_i32_337 = arith.constant 124 : i32
    %1524 = tpu.dynamic_rotate %1523 by %c124_i32_337 dim 1 : vector<8x128xf32>, i32 -> vector<8x128xf32>
    %c4_i32_338 = arith.constant 4 : i32
    %1525 = tpu.dynamic_rotate %1523 by %c4_i32_338 dim 1 : vector<8x128xf32>, i32 -> vector<8x128xf32>
    %1526 = vector.shape_cast %38 : vector<1x128xi1> to vector<1x128xi1>
    %1527 = vector.broadcast %1526 : vector<1x128xi1> to vector<8x128xi1>
    %1528 = arith.select %1527, %1524, %1525 : vector<8x128xi1>, vector<8x128xf32>
    %1529 = arith.addf %1523, %1528 : vector<8x128xf32>
    %c120_i32_339 = arith.constant 120 : i32
    %1530 = tpu.dynamic_rotate %1529 by %c120_i32_339 dim 1 : vector<8x128xf32>, i32 -> vector<8x128xf32>
    %c8_i32_340 = arith.constant 8 : i32
    %1531 = tpu.dynamic_rotate %1529 by %c8_i32_340 dim 1 : vector<8x128xf32>, i32 -> vector<8x128xf32>
    %1532 = vector.shape_cast %42 : vector<1x128xi1> to vector<1x128xi1>
    %1533 = vector.broadcast %1532 : vector<1x128xi1> to vector<8x128xi1>
    %1534 = arith.select %1533, %1530, %1531 : vector<8x128xi1>, vector<8x128xf32>
    %1535 = arith.addf %1529, %1534 : vector<8x128xf32>
    %cst_341 = arith.constant 3.906250e-03 : f32
    %1536 = vector.broadcast %cst_341 : f32 to vector<8x128xf32>
    %1537 = arith.mulf %1535, %1536 : vector<8x128xf32>
    %1538 = vector.extract_strided_slice %1537 {offsets = [0, 0], sizes = [4, 128], strides = [1, 1]} : vector<8x128xf32> to vector<4x128xf32>
    %1539 = vector.extract_strided_slice %1537 {offsets = [4, 0], sizes = [4, 128], strides = [1, 1]} : vector<8x128xf32> to vector<4x128xf32>
    %1540 = arith.mulf %1538, %1538 : vector<4x128xf32>
    %1541 = arith.subf %1539, %1540 : vector<4x128xf32>
    %cst_342 = arith.constant 0.000000e+00 : f32
    %1542 = vector.broadcast %cst_342 : f32 to vector<4x128xf32>
    %1543 = arith.maximumf %1541, %1542 : vector<4x128xf32>
    %cst_343 = arith.constant 9.99999974E-6 : f32
    %1544 = vector.broadcast %cst_343 : f32 to vector<4x128xf32>
    %1545 = arith.addf %1543, %1544 : vector<4x128xf32>
    %1546 = math.rsqrt %1545 : vector<4x128xf32>
    %1547 = vector.extract_strided_slice %1538 {offsets = [0, 0], sizes = [1, 128], strides = [1, 1]} : vector<4x128xf32> to vector<1x128xf32>
    %1548 = vector.broadcast %1547 : vector<1x128xf32> to vector<16x128xf32>
    %1549 = arith.subf %1481, %1548 : vector<16x128xf32>
    %1550 = vector.extract_strided_slice %1546 {offsets = [0, 0], sizes = [1, 128], strides = [1, 1]} : vector<4x128xf32> to vector<1x128xf32>
    %1551 = vector.broadcast %1550 : vector<1x128xf32> to vector<16x128xf32>
    %1552 = arith.mulf %1549, %1551 : vector<16x128xf32>
    %1553 = vector.extract_strided_slice %1538 {offsets = [1, 0], sizes = [1, 128], strides = [1, 1]} : vector<4x128xf32> to vector<1x128xf32>
    %1554 = vector.broadcast %1553 : vector<1x128xf32> to vector<16x128xf32>
    %1555 = arith.subf %1484, %1554 : vector<16x128xf32>
    %1556 = vector.extract_strided_slice %1546 {offsets = [1, 0], sizes = [1, 128], strides = [1, 1]} : vector<4x128xf32> to vector<1x128xf32>
    %1557 = vector.broadcast %1556 : vector<1x128xf32> to vector<16x128xf32>
    %1558 = arith.mulf %1555, %1557 : vector<16x128xf32>
    %1559 = vector.extract_strided_slice %1538 {offsets = [2, 0], sizes = [1, 128], strides = [1, 1]} : vector<4x128xf32> to vector<1x128xf32>
    %1560 = vector.broadcast %1559 : vector<1x128xf32> to vector<16x128xf32>
    %1561 = arith.subf %1487, %1560 : vector<16x128xf32>
    %1562 = vector.extract_strided_slice %1546 {offsets = [2, 0], sizes = [1, 128], strides = [1, 1]} : vector<4x128xf32> to vector<1x128xf32>
    %1563 = vector.broadcast %1562 : vector<1x128xf32> to vector<16x128xf32>
    %1564 = arith.mulf %1561, %1563 : vector<16x128xf32>
    %1565 = vector.extract_strided_slice %1538 {offsets = [3, 0], sizes = [1, 128], strides = [1, 1]} : vector<4x128xf32> to vector<1x128xf32>
    %1566 = vector.broadcast %1565 : vector<1x128xf32> to vector<16x128xf32>
    %1567 = arith.subf %1490, %1566 : vector<16x128xf32>
    %1568 = vector.extract_strided_slice %1546 {offsets = [3, 0], sizes = [1, 128], strides = [1, 1]} : vector<4x128xf32> to vector<1x128xf32>
    %1569 = vector.broadcast %1568 : vector<1x128xf32> to vector<16x128xf32>
    %1570 = arith.mulf %1567, %1569 : vector<16x128xf32>
    %1571 = arith.addf %332, %1552 : vector<16x128xf32>
    %c0_344 = arith.constant 0 : index
    %c0_345 = arith.constant 0 : index
    %c0_346 = arith.constant 0 : index
    %c0_347 = arith.constant 0 : index
    %1572 = vector.load %arg4[%c0_344, %c0_345, %c0_346, %c0_347] : memref<1x4x16x128xf32, #tpu.memory_space<vmem>>, vector<1x1x16x128xf32>
    %1573 = vector.shape_cast %1572 : vector<1x1x16x128xf32> to vector<16x128xf32>
    %1574 = vector.shape_cast %1571 : vector<16x128xf32> to vector<1x1x16x128xf32>
    tpu.vector_store %arg4[%c0_344, %c0_345, %c0_346, %c0_347], %1574 {strides = array<i32>} : memref<1x4x16x128xf32, #tpu.memory_space<vmem>>, vector<1x1x16x128xf32>,
    %1575 = arith.addf %334, %1558 : vector<16x128xf32>
    %c0_348 = arith.constant 0 : index
    %c1_349 = arith.constant 1 : index
    %c0_350 = arith.constant 0 : index
    %c0_351 = arith.constant 0 : index
    %1576 = vector.load %arg4[%c0_348, %c1_349, %c0_350, %c0_351] : memref<1x4x16x128xf32, #tpu.memory_space<vmem>>, vector<1x1x16x128xf32>
    %1577 = vector.shape_cast %1576 : vector<1x1x16x128xf32> to vector<16x128xf32>
    %1578 = vector.shape_cast %1575 : vector<16x128xf32> to vector<1x1x16x128xf32>
    tpu.vector_store %arg4[%c0_348, %c1_349, %c0_350, %c0_351], %1578 {strides = array<i32>} : memref<1x4x16x128xf32, #tpu.memory_space<vmem>>, vector<1x1x16x128xf32>,
    %1579 = arith.addf %336, %1564 : vector<16x128xf32>
    %c0_352 = arith.constant 0 : index
    %c2_353 = arith.constant 2 : index
    %c0_354 = arith.constant 0 : index
    %c0_355 = arith.constant 0 : index
    %1580 = vector.load %arg4[%c0_352, %c2_353, %c0_354, %c0_355] : memref<1x4x16x128xf32, #tpu.memory_space<vmem>>, vector<1x1x16x128xf32>
    %1581 = vector.shape_cast %1580 : vector<1x1x16x128xf32> to vector<16x128xf32>
    %1582 = vector.shape_cast %1579 : vector<16x128xf32> to vector<1x1x16x128xf32>
    tpu.vector_store %arg4[%c0_352, %c2_353, %c0_354, %c0_355], %1582 {strides = array<i32>} : memref<1x4x16x128xf32, #tpu.memory_space<vmem>>, vector<1x1x16x128xf32>,
    %1583 = arith.addf %338, %1570 : vector<16x128xf32>
    %c0_356 = arith.constant 0 : index
    %c3_357 = arith.constant 3 : index
    %c0_358 = arith.constant 0 : index
    %c0_359 = arith.constant 0 : index
    %1584 = vector.load %arg4[%c0_356, %c3_357, %c0_358, %c0_359] : memref<1x4x16x128xf32, #tpu.memory_space<vmem>>, vector<1x1x16x128xf32>
    %1585 = vector.shape_cast %1584 : vector<1x1x16x128xf32> to vector<16x128xf32>
    %1586 = vector.shape_cast %1583 : vector<16x128xf32> to vector<1x1x16x128xf32>
    tpu.vector_store %arg4[%c0_356, %c3_357, %c0_358, %c0_359], %1586 {strides = array<i32>} : memref<1x4x16x128xf32, #tpu.memory_space<vmem>>, vector<1x1x16x128xf32>,
    return
  }
  func.func @transform_0(%arg0: i32) -> (i32, i32, i32, i32) {
    %c0_i32 = arith.constant 0 : i32
    %c0_i32_0 = arith.constant 0 : i32
    %c0_i32_1 = arith.constant 0 : i32
    %c0_i32_2 = arith.constant 0 : i32
    return %arg0, %c0_i32, %c0_i32_0, %c0_i32_1 : i32, i32, i32, i32
  }
  func.func @transform_1(%arg0: i32) -> i32 {
    %c0_i32 = arith.constant 0 : i32
    %c0_i32_0 = arith.constant 0 : i32
    return %c0_i32 : i32
  }
  func.func @transform_2(%arg0: i32) -> i32 {
    %c0_i32 = arith.constant 0 : i32
    %c0_i32_0 = arith.constant 0 : i32
    return %c0_i32 : i32
  }
  func.func @transform_3(%arg0: i32) -> (i32, i32, i32, i32) {
    %c0_i32 = arith.constant 0 : i32
    %c0_i32_0 = arith.constant 0 : i32
    %c0_i32_1 = arith.constant 0 : i32
    %c0_i32_2 = arith.constant 0 : i32
    return %arg0, %c0_i32, %c0_i32_0, %c0_i32_1 : i32, i32, i32, i32
  }
}

</mosaic_0001>

<llo_original>
// kernel: _resconv_forward.1
$region0: #{_resconv_forward.1}
  #allocation0 [shape = 'u32[]', space=smem, size = 0x4, offset = 0x4, fixed_abs, tag = 'smem constant byte address 0x4 - core index']
  #allocation1 [shape = 'u32[72,128]{1,0:T(1,128)}', space=vmem, size = 0x9000, scoped, tag = 'internal scratch']
  %s0 = inlined_call_operand.vmem [shape: f32[1,4,16,128], index: 0, kind: input, shape index: {}]
  %s1 = inlined_call_operand.vmem [shape: f32[144], index: 1, kind: input, shape index: {}]
  %s2 = inlined_call_operand.vmem [shape: f32[144], index: 2, kind: input, shape index: {}]
  %s3 = inlined_call_operand.vmem [shape: f32[1,4,16,128], index: 3, kind: output, shape index: {}]
  %s4 = sld [smem:[#allocation0]]
  $region30: #{_resconv_forward.1} parent=0
    _
  %s6 = ssub.s32 1, %s4
  %s7 = scalar_select 0, %s6, %s4
  $region1: #{_resconv_forward.1} parent=0
    #allocation2 [shape = 'u8[1024]{0}', space=smem, size = 0x400, scoped, tag = 'input window, operand 1, single buffered']
    #allocation3 [shape = 's32[1]{0}', space=sflag, size = 0x4, scoped, tag = 'scoped memory for _resconv_forward.1']
    #allocation4 [shape = 'u8[1024]{0}', space=smem, size = 0x400, scoped, tag = 'input window, operand 2, single buffered']
    #allocation5 [shape = 's32[1]{0}', space=sflag, size = 0x4, scoped, tag = 'scoped memory for _resconv_forward.1']
    %8 = vsyncpa [#allocation3], 0
    %9 = vsyncpa [#allocation5], 0
    // Predicated region
    $region2: #{_resconv_forward.1} parent=1 // pred_check
      _
    $region3: #{_resconv_forward.1} parent=1 // pred_check_branch
      %11 = sbr.rel (0) target = $region5
    $region4: #{_resconv_forward.1} parent=1 // pred_region
      _
    $region5: #{_resconv_forward.1} parent=1 // pred_fallthru
      _
    // Predicated region
    $region6: #{_resconv_forward.1} parent=1 // pred_check
      _
    $region7: #{_resconv_forward.1} parent=1 // pred_check_branch
      %13 = sbr.rel (0) target = $region9
    $region8: #{_resconv_forward.1} parent=1 // pred_region
      %15 = vsyncadd [#allocation3], 0
      %s17 = sshll.u32 %s1, 4
      %s18 = int_to_ptr.vmem [resolvable:$true] %s17
      %20 = dma.vmem_to_smem %s18, 32, [#allocation2], [#allocation3]
    $region9: #{_resconv_forward.1} parent=1 // pred_fallthru
      _
    // Predicated region
    $region10: #{_resconv_forward.1} parent=1 // pred_check
      _
    $region11: #{_resconv_forward.1} parent=1 // pred_check_branch
      %22 = sbr.rel (0) target = $region13
    $region12: #{_resconv_forward.1} parent=1 // pred_region
      %24 = vsyncadd [#allocation5], 0
      %s26 = sshll.u32 %s2, 4
      %s27 = int_to_ptr.vmem [resolvable:$true] %s26
      %29 = dma.vmem_to_smem %s27, 32, [#allocation4], [#allocation5]
    $region13: #{_resconv_forward.1} parent=1 // pred_fallthru
      _
    // Predicated region
    $region14: #{_resconv_forward.1} parent=1 // pred_check
      _
    $region15: #{_resconv_forward.1} parent=1 // pred_check_branch
      %31 = sbr.rel (0) target = $region17
    $region16: #{_resconv_forward.1} parent=1 // pred_region
      %33 = dma.done [#allocation3], 32
    $region17: #{_resconv_forward.1} parent=1 // pred_fallthru
      _
    // Predicated region
    $region18: #{_resconv_forward.1} parent=1 // pred_check
      _
    $region19: #{_resconv_forward.1} parent=1 // pred_check_branch
      %35 = sbr.rel (0) target = $region21
    $region20: #{_resconv_forward.1} parent=1 // pred_region
      %37 = dma.done [#allocation5], 32
    $region21: #{_resconv_forward.1} parent=1 // pred_fallthru
      _
    %38 = sfence
    %v39 = vlaneseq
    %v40 = vshrl.u32 %v39, 7
    %v41 = vadd.s32 %v40, 8
    %v42 = vlaneseq
    %v43 = vand.u32 %v42, 127
    %vm44 = vcmp.lt.s32.totalorder %v43, 0
    %v45 = vsub.s32 0, %v43
    %v46 = vsel %vm44, %v45, %v43
    %v47 = vshrl.u32 %v46, 4
    %v48 = vand.u32 %v46, 15
    %v49 = vsub.s32 0, %v48
    %v50 = vsel %vm44, %v49, %v48
    %vm51 = vcmp.ne.s32.totalorder %v50, 0
    %vm52 = vcmp.lt.s32.totalorder %v50, 0
    %vm53 = vmand %vm52, %vm51
    %v54 = vadd.s32 %v50, 16
    %v55 = vsel %vm53, %v54, %v50
    %vm56 = vcmp.lt.s32.totalorder %v40, 15
    %vm57 = vcmp.lt.s32.totalorder %v41, 15
    %vm58 = vcmp.gt.s32.totalorder %v40, 0
    %vm59 = vcmp.gt.s32.totalorder %v41, 0
    %vm60 = vcmp.lt.s32.totalorder %v55, 15
    %vm61 = vcmp.gt.s32.totalorder %v55, 0
    %v62 = vand.u32 %v43, 1
    %vm63 = vcmp.eq.s32.totalorder %v62, 0
    %v64 = vand.u32 %v43, 2
    %vm65 = vcmp.eq.s32.totalorder %v64, 0
    %v66 = vand.u32 %v43, 4
    %vm67 = vcmp.eq.s32.totalorder %v66, 0
    %v68 = vand.u32 %v43, 8
    %vm69 = vcmp.eq.s32.totalorder %v68, 0
    %s70 = sld [smem:[#allocation2]]
    %s71 = sld [smem:[#allocation2 + $0x1]]
    %s72 = sld [smem:[#allocation2 + $0x2]]
    %s73 = sld [smem:[#allocation2 + $0x3]]
    %s74 = sld [smem:[#allocation2 + $0x4]]
    %s75 = sld [smem:[#allocation2 + $0x5]]
    %s76 = sld [smem:[#allocation2 + $0x6]]
    %s77 = sld [smem:[#allocation2 + $0x7]]
    %s78 = sld [smem:[#allocation2 + $0x8]]
    %s79 = sld [smem:[#allocation2 + $0x9]]
    %s80 = sld [smem:[#allocation2 + $0xa]]
    %s81 = sld [smem:[#allocation2 + $0xb]]
    %s82 = sld [smem:[#allocation2 + $0xc]]
    %s83 = sld [smem:[#allocation2 + $0xd]]
    %s84 = sld [smem:[#allocation2 + $0xe]]
    %s85 = sld [smem:[#allocation2 + $0xf]]
    %s86 = sld [smem:[#allocation2 + $0x10]]
    %s87 = sld [smem:[#allocation2 + $0x11]]
    %s88 = sld [smem:[#allocation2 + $0x12]]
    %s89 = sld [smem:[#allocation2 + $0x13]]
    %s90 = sld [smem:[#allocation2 + $0x14]]
    %s91 = sld [smem:[#allocation2 + $0x15]]
    %s92 = sld [smem:[#allocation2 + $0x16]]
    %s93 = sld [smem:[#allocation2 + $0x17]]
    %s94 = sld [smem:[#allocation2 + $0x18]]
    %s95 = sld [smem:[#allocation2 + $0x19]]
    %s96 = sld [smem:[#allocation2 + $0x1a]]
    %s97 = sld [smem:[#allocation2 + $0x1b]]
    %s98 = sld [smem:[#allocation2 + $0x1c]]
    %s99 = sld [smem:[#allocation2 + $0x1d]]
    %s100 = sld [smem:[#allocation2 + $0x1e]]
    %s101 = sld [smem:[#allocation2 + $0x1f]]
    %s102 = sld [smem:[#allocation2 + $0x20]]
    %s103 = sld [smem:[#allocation2 + $0x21]]
    %s104 = sld [smem:[#allocation2 + $0x22]]
    %s105 = sld [smem:[#allocation2 + $0x23]]
    %s106 = sld [smem:[#allocation2 + $0x24]]
    %s107 = sld [smem:[#allocation2 + $0x25]]
    %s108 = sld [smem:[#allocation2 + $0x26]]
    %s109 = sld [smem:[#allocation2 + $0x27]]
    %s110 = sld [smem:[#allocation2 + $0x28]]
    %s111 = sld [smem:[#allocation2 + $0x29]]
    %s112 = sld [smem:[#allocation2 + $0x2a]]
    %s113 = sld [smem:[#allocation2 + $0x2b]]
    %s114 = sld [smem:[#allocation2 + $0x2c]]
    %s115 = sld [smem:[#allocation2 + $0x2d]]
    %s116 = sld [smem:[#allocation2 + $0x2e]]
    %s117 = sld [smem:[#allocation2 + $0x2f]]
    %s118 = sld [smem:[#allocation2 + $0x30]]
    %s119 = sld [smem:[#allocation2 + $0x31]]
    %s120 = sld [smem:[#allocation2 + $0x32]]
    %s121 = sld [smem:[#allocation2 + $0x33]]
    %s122 = sld [smem:[#allocation2 + $0x34]]
    %s123 = sld [smem:[#allocation2 + $0x35]]
    %s124 = sld [smem:[#allocation2 + $0x36]]
    %s125 = sld [smem:[#allocation2 + $0x37]]
    %s126 = sld [smem:[#allocation2 + $0x38]]
    %s127 = sld [smem:[#allocation2 + $0x39]]
    %s128 = sld [smem:[#allocation2 + $0x3a]]
    %s129 = sld [smem:[#allocation2 + $0x3b]]
    %s130 = sld [smem:[#allocation2 + $0x3c]]
    %s131 = sld [smem:[#allocation2 + $0x3d]]
    %s132 = sld [smem:[#allocation2 + $0x3e]]
    %s133 = sld [smem:[#allocation2 + $0x3f]]
    %s134 = sld [smem:[#allocation2 + $0x40]]
    %s135 = sld [smem:[#allocation2 + $0x41]]
    %s136 = sld [smem:[#allocation2 + $0x42]]
    %s137 = sld [smem:[#allocation2 + $0x43]]
    %s138 = sld [smem:[#allocation2 + $0x44]]
    %s139 = sld [smem:[#allocation2 + $0x45]]
    %s140 = sld [smem:[#allocation2 + $0x46]]
    %s141 = sld [smem:[#allocation2 + $0x47]]
    %s142 = sld [smem:[#allocation2 + $0x48]]
    %s143 = sld [smem:[#allocation2 + $0x49]]
    %s144 = sld [smem:[#allocation2 + $0x4a]]
    %s145 = sld [smem:[#allocation2 + $0x4b]]
    %s146 = sld [smem:[#allocation2 + $0x4c]]
    %s147 = sld [smem:[#allocation2 + $0x4d]]
    %s148 = sld [smem:[#allocation2 + $0x4e]]
    %s149 = sld [smem:[#allocation2 + $0x4f]]
    %s150 = sld [smem:[#allocation2 + $0x50]]
    %s151 = sld [smem:[#allocation2 + $0x51]]
    %s152 = sld [smem:[#allocation2 + $0x52]]
    %s153 = sld [smem:[#allocation2 + $0x53]]
    %s154 = sld [smem:[#allocation2 + $0x54]]
    %s155 = sld [smem:[#allocation2 + $0x55]]
    %s156 = sld [smem:[#allocation2 + $0x56]]
    %s157 = sld [smem:[#allocation2 + $0x57]]
    %s158 = sld [smem:[#allocation2 + $0x58]]
    %s159 = sld [smem:[#allocation2 + $0x59]]
    %s160 = sld [smem:[#allocation2 + $0x5a]]
    %s161 = sld [smem:[#allocation2 + $0x5b]]
    %s162 = sld [smem:[#allocation2 + $0x5c]]
    %s163 = sld [smem:[#allocation2 + $0x5d]]
    %s164 = sld [smem:[#allocation2 + $0x5e]]
    %s165 = sld [smem:[#allocation2 + $0x5f]]
    %s166 = sld [smem:[#allocation2 + $0x60]]
    %s167 = sld [smem:[#allocation2 + $0x61]]
    %s168 = sld [smem:[#allocation2 + $0x62]]
    %s169 = sld [smem:[#allocation2 + $0x63]]
    %s170 = sld [smem:[#allocation2 + $0x64]]
    %s171 = sld [smem:[#allocation2 + $0x65]]
    %s172 = sld [smem:[#allocation2 + $0x66]]
    %s173 = sld [smem:[#allocation2 + $0x67]]
    %s174 = sld [smem:[#allocation2 + $0x68]]
    %s175 = sld [smem:[#allocation2 + $0x69]]
    %s176 = sld [smem:[#allocation2 + $0x6a]]
    %s177 = sld [smem:[#allocation2 + $0x6b]]
    %s178 = sld [smem:[#allocation2 + $0x6c]]
    %s179 = sld [smem:[#allocation2 + $0x6d]]
    %s180 = sld [smem:[#allocation2 + $0x6e]]
    %s181 = sld [smem:[#allocation2 + $0x6f]]
    %s182 = sld [smem:[#allocation2 + $0x70]]
    %s183 = sld [smem:[#allocation2 + $0x71]]
    %s184 = sld [smem:[#allocation2 + $0x72]]
    %s185 = sld [smem:[#allocation2 + $0x73]]
    %s186 = sld [smem:[#allocation2 + $0x74]]
    %s187 = sld [smem:[#allocation2 + $0x75]]
    %s188 = sld [smem:[#allocation2 + $0x76]]
    %s189 = sld [smem:[#allocation2 + $0x77]]
    %s190 = sld [smem:[#allocation2 + $0x78]]
    %s191 = sld [smem:[#allocation2 + $0x79]]
    %s192 = sld [smem:[#allocation2 + $0x7a]]
    %s193 = sld [smem:[#allocation2 + $0x7b]]
    %s194 = sld [smem:[#allocation2 + $0x7c]]
    %s195 = sld [smem:[#allocation2 + $0x7d]]
    %s196 = sld [smem:[#allocation2 + $0x7e]]
    %s197 = sld [smem:[#allocation2 + $0x7f]]
    %s198 = sld [smem:[#allocation2 + $0x80]]
    %s199 = sld [smem:[#allocation2 + $0x81]]
    %s200 = sld [smem:[#allocation2 + $0x82]]
    %s201 = sld [smem:[#allocation2 + $0x83]]
    %s202 = sld [smem:[#allocation2 + $0x84]]
    %s203 = sld [smem:[#allocation2 + $0x85]]
    %s204 = sld [smem:[#allocation2 + $0x86]]
    %s205 = sld [smem:[#allocation2 + $0x87]]
    %s206 = sld [smem:[#allocation2 + $0x88]]
    %s207 = sld [smem:[#allocation2 + $0x89]]
    %s208 = sld [smem:[#allocation2 + $0x8a]]
    %s209 = sld [smem:[#allocation2 + $0x8b]]
    %s210 = sld [smem:[#allocation2 + $0x8c]]
    %s211 = sld [smem:[#allocation2 + $0x8d]]
    %s212 = sld [smem:[#allocation2 + $0x8e]]
    %s213 = sld [smem:[#allocation2 + $0x8f]]
    %s214 = sld [smem:[#allocation4]]
    %s215 = sld [smem:[#allocation4 + $0x1]]
    %s216 = sld [smem:[#allocation4 + $0x2]]
    %s217 = sld [smem:[#allocation4 + $0x3]]
    %s218 = sld [smem:[#allocation4 + $0x4]]
    %s219 = sld [smem:[#allocation4 + $0x5]]
    %s220 = sld [smem:[#allocation4 + $0x6]]
    %s221 = sld [smem:[#allocation4 + $0x7]]
    %s222 = sld [smem:[#allocation4 + $0x8]]
    %s223 = sld [smem:[#allocation4 + $0x9]]
    %s224 = sld [smem:[#allocation4 + $0xa]]
    %s225 = sld [smem:[#allocation4 + $0xb]]
    %s226 = sld [smem:[#allocation4 + $0xc]]
    %s227 = sld [smem:[#allocation4 + $0xd]]
    %s228 = sld [smem:[#allocation4 + $0xe]]
    %s229 = sld [smem:[#allocation4 + $0xf]]
    %s230 = sld [smem:[#allocation4 + $0x10]]
    %s231 = sld [smem:[#allocation4 + $0x11]]
    %s232 = sld [smem:[#allocation4 + $0x12]]
    %s233 = sld [smem:[#allocation4 + $0x13]]
    %s234 = sld [smem:[#allocation4 + $0x14]]
    %s235 = sld [smem:[#allocation4 + $0x15]]
    %s236 = sld [smem:[#allocation4 + $0x16]]
    %s237 = sld [smem:[#allocation4 + $0x17]]
    %s238 = sld [smem:[#allocation4 + $0x18]]
    %s239 = sld [smem:[#allocation4 + $0x19]]
    %s240 = sld [smem:[#allocation4 + $0x1a]]
    %s241 = sld [smem:[#allocation4 + $0x1b]]
    %s242 = sld [smem:[#allocation4 + $0x1c]]
    %s243 = sld [smem:[#allocation4 + $0x1d]]
    %s244 = sld [smem:[#allocation4 + $0x1e]]
    %s245 = sld [smem:[#allocation4 + $0x1f]]
    %s246 = sld [smem:[#allocation4 + $0x20]]
    %s247 = sld [smem:[#allocation4 + $0x21]]
    %s248 = sld [smem:[#allocation4 + $0x22]]
    %s249 = sld [smem:[#allocation4 + $0x23]]
    %s250 = sld [smem:[#allocation4 + $0x24]]
    %s251 = sld [smem:[#allocation4 + $0x25]]
    %s252 = sld [smem:[#allocation4 + $0x26]]
    %s253 = sld [smem:[#allocation4 + $0x27]]
    %s254 = sld [smem:[#allocation4 + $0x28]]
    %s255 = sld [smem:[#allocation4 + $0x29]]
    %s256 = sld [smem:[#allocation4 + $0x2a]]
    %s257 = sld [smem:[#allocation4 + $0x2b]]
    %s258 = sld [smem:[#allocation4 + $0x2c]]
    %s259 = sld [smem:[#allocation4 + $0x2d]]
    %s260 = sld [smem:[#allocation4 + $0x2e]]
    %s261 = sld [smem:[#allocation4 + $0x2f]]
    %s262 = sld [smem:[#allocation4 + $0x30]]
    %s263 = sld [smem:[#allocation4 + $0x31]]
    %s264 = sld [smem:[#allocation4 + $0x32]]
    %s265 = sld [smem:[#allocation4 + $0x33]]
    %s266 = sld [smem:[#allocation4 + $0x34]]
    %s267 = sld [smem:[#allocation4 + $0x35]]
    %s268 = sld [smem:[#allocation4 + $0x36]]
    %s269 = sld [smem:[#allocation4 + $0x37]]
    %s270 = sld [smem:[#allocation4 + $0x38]]
    %s271 = sld [smem:[#allocation4 + $0x39]]
    %s272 = sld [smem:[#allocation4 + $0x3a]]
    %s273 = sld [smem:[#allocation4 + $0x3b]]
    %s274 = sld [smem:[#allocation4 + $0x3c]]
    %s275 = sld [smem:[#allocation4 + $0x3d]]
    %s276 = sld [smem:[#allocation4 + $0x3e]]
    %s277 = sld [smem:[#allocation4 + $0x3f]]
    %s278 = sld [smem:[#allocation4 + $0x40]]
    %s279 = sld [smem:[#allocation4 + $0x41]]
    %s280 = sld [smem:[#allocation4 + $0x42]]
    %s281 = sld [smem:[#allocation4 + $0x43]]
    %s282 = sld [smem:[#allocation4 + $0x44]]
    %s283 = sld [smem:[#allocation4 + $0x45]]
    %s284 = sld [smem:[#allocation4 + $0x46]]
    %s285 = sld [smem:[#allocation4 + $0x47]]
    %s286 = sld [smem:[#allocation4 + $0x48]]
    %s287 = sld [smem:[#allocation4 + $0x49]]
    %s288 = sld [smem:[#allocation4 + $0x4a]]
    %s289 = sld [smem:[#allocation4 + $0x4b]]
    %s290 = sld [smem:[#allocation4 + $0x4c]]
    %s291 = sld [smem:[#allocation4 + $0x4d]]
    %s292 = sld [smem:[#allocation4 + $0x4e]]
    %s293 = sld [smem:[#allocation4 + $0x4f]]
    %s294 = sld [smem:[#allocation4 + $0x50]]
    %s295 = sld [smem:[#allocation4 + $0x51]]
    %s296 = sld [smem:[#allocation4 + $0x52]]
    %s297 = sld [smem:[#allocation4 + $0x53]]
    %s298 = sld [smem:[#allocation4 + $0x54]]
    %s299 = sld [smem:[#allocation4 + $0x55]]
    %s300 = sld [smem:[#allocation4 + $0x56]]
    %s301 = sld [smem:[#allocation4 + $0x57]]
    %s302 = sld [smem:[#allocation4 + $0x58]]
    %s303 = sld [smem:[#allocation4 + $0x59]]
    %s304 = sld [smem:[#allocation4 + $0x5a]]
    %s305 = sld [smem:[#allocation4 + $0x5b]]
    %s306 = sld [smem:[#allocation4 + $0x5c]]
    %s307 = sld [smem:[#allocation4 + $0x5d]]
    %s308 = sld [smem:[#allocation4 + $0x5e]]
    %s309 = sld [smem:[#allocation4 + $0x5f]]
    %s310 = sld [smem:[#allocation4 + $0x60]]
    %s311 = sld [smem:[#allocation4 + $0x61]]
    %s312 = sld [smem:[#allocation4 + $0x62]]
    %s313 = sld [smem:[#allocation4 + $0x63]]
    %s314 = sld [smem:[#allocation4 + $0x64]]
    %s315 = sld [smem:[#allocation4 + $0x65]]
    %s316 = sld [smem:[#allocation4 + $0x66]]
    %s317 = sld [smem:[#allocation4 + $0x67]]
    %s318 = sld [smem:[#allocation4 + $0x68]]
    %s319 = sld [smem:[#allocation4 + $0x69]]
    %s320 = sld [smem:[#allocation4 + $0x6a]]
    %s321 = sld [smem:[#allocation4 + $0x6b]]
    %s322 = sld [smem:[#allocation4 + $0x6c]]
    %s323 = sld [smem:[#allocation4 + $0x6d]]
    %s324 = sld [smem:[#allocation4 + $0x6e]]
    %s325 = sld [smem:[#allocation4 + $0x6f]]
    %s326 = sld [smem:[#allocation4 + $0x70]]
    %s327 = sld [smem:[#allocation4 + $0x71]]
    %s328 = sld [smem:[#allocation4 + $0x72]]
    %s329 = sld [smem:[#allocation4 + $0x73]]
    %s330 = sld [smem:[#allocation4 + $0x74]]
    %s331 = sld [smem:[#allocation4 + $0x75]]
    %s332 = sld [smem:[#allocation4 + $0x76]]
    %s333 = sld [smem:[#allocation4 + $0x77]]
    %s334 = sld [smem:[#allocation4 + $0x78]]
    %s335 = sld [smem:[#allocation4 + $0x79]]
    %s336 = sld [smem:[#allocation4 + $0x7a]]
    %s337 = sld [smem:[#allocation4 + $0x7b]]
    %s338 = sld [smem:[#allocation4 + $0x7c]]
    %s339 = sld [smem:[#allocation4 + $0x7d]]
    %s340 = sld [smem:[#allocation4 + $0x7e]]
    %s341 = sld [smem:[#allocation4 + $0x7f]]
    %s342 = sld [smem:[#allocation4 + $0x80]]
    %s343 = sld [smem:[#allocation4 + $0x81]]
    %s344 = sld [smem:[#allocation4 + $0x82]]
    %s345 = sld [smem:[#allocation4 + $0x83]]
    %s346 = sld [smem:[#allocation4 + $0x84]]
    %s347 = sld [smem:[#allocation4 + $0x85]]
    %s348 = sld [smem:[#allocation4 + $0x86]]
    %s349 = sld [smem:[#allocation4 + $0x87]]
    %s350 = sld [smem:[#allocation4 + $0x88]]
    %s351 = sld [smem:[#allocation4 + $0x89]]
    %s352 = sld [smem:[#allocation4 + $0x8a]]
    %s353 = sld [smem:[#allocation4 + $0x8b]]
    %s354 = sld [smem:[#allocation4 + $0x8c]]
    %s355 = sld [smem:[#allocation4 + $0x8d]]
    %s356 = sld [smem:[#allocation4 + $0x8e]]
    %s357 = sld [smem:[#allocation4 + $0x8f]]
    %v358 = vld [vmem:[%s0] sm:$0xff]
    %v359 = vld [vmem:[%s0 + $0x8] sm:$0xff]
    %s360 = scalar_lea.vmem %s0, 16
    %v361 = vld [vmem:[%s360] sm:$0xff]
    %v362 = vld [vmem:[%s360 + $0x8] sm:$0xff]
    %s363 = scalar_lea.vmem %s0, 32
    %v364 = vld [vmem:[%s363] sm:$0xff]
    %v365 = vld [vmem:[%s363 + $0x8] sm:$0xff]
    %s366 = scalar_lea.vmem %s0, 48
    %v367 = vld [vmem:[%s366] sm:$0xff]
    %v368 = vld [vmem:[%s366 + $0x8] sm:$0xff]
    %v369 = vrot.slane %v358, 7
    %v370 = vrot.slane %v359, 7
    %vm371 = vcmp.lt.s32.totalorder %v40, 1
    %v372 = vsel %vm371, %v369, %v370
    %v373 = vsel %vm371, %v370, %v369
    %v374 = vsel %vm58, %v373, 0.0
    %v375 = vsel %vm59, %v372, 0.0
    %v376 = vrot.slane %v361, 7
    %v377 = vrot.slane %v362, 7
    %v378 = vsel %vm371, %v376, %v377
    %v379 = vsel %vm371, %v377, %v376
    %v380 = vsel %vm58, %v379, 0.0
    %v381 = vsel %vm59, %v378, 0.0
    %v382 = vrot.slane %v364, 7
    %v383 = vrot.slane %v365, 7
    %v384 = vsel %vm371, %v382, %v383
    %v385 = vsel %vm371, %v383, %v382
    %v386 = vsel %vm58, %v385, 0.0
    %v387 = vsel %vm59, %v384, 0.0
    %v388 = vrot.slane %v367, 7
    %v389 = vrot.slane %v368, 7
    %v390 = vsel %vm371, %v388, %v389
    %v391 = vsel %vm371, %v389, %v388
    %v392 = vsel %vm58, %v391, 0.0
    %v393 = vsel %vm59, %v390, 0.0
    %394 = vrot.lane.b32.xlu0 %v374, 1
    %v395 = vpop.permute.xlu0 %394
    %396 = vrot.lane.b32.xlu0 %v375, 1
    %v397 = vpop.permute.xlu0 %396
    %v398 = vsel %vm61, %v395, 0.0
    %v399 = vsel %vm61, %v397, 0.0
    %v400 = vstv %s70
    %v401 = vmul.f32 %v400, %v398
    %v402 = vmul.f32 %v400, %v399
    %v403 = vadd.f32 %v401, 0.0
    %v404 = vadd.f32 %v402, 0.0
    %v405 = vstv %s106
    %v406 = vmul.f32 %v405, %v398
    %v407 = vmul.f32 %v405, %v399
    %v408 = vadd.f32 %v406, 0.0
    %v409 = vadd.f32 %v407, 0.0
    %v410 = vstv %s142
    %v411 = vmul.f32 %v410, %v398
    %v412 = vmul.f32 %v410, %v399
    %v413 = vadd.f32 %v411, 0.0
    %v414 = vadd.f32 %v412, 0.0
    %v415 = vstv %s178
    %v416 = vmul.f32 %v415, %v398
    %v417 = vmul.f32 %v415, %v399
    %v418 = vadd.f32 %v416, 0.0
    %v419 = vadd.f32 %v417, 0.0
    %420 = vrot.lane.b32.xlu0 %v380, 1
    %v421 = vpop.permute.xlu0 %420
    %422 = vrot.lane.b32.xlu0 %v381, 1
    %v423 = vpop.permute.xlu0 %422
    %v424 = vsel %vm61, %v421, 0.0
    %v425 = vsel %vm61, %v423, 0.0
    %v426 = vstv %s79
    %v427 = vmul.f32 %v426, %v424
    %v428 = vmul.f32 %v426, %v425
    %v429 = vadd.f32 %v403, %v427
    %v430 = vadd.f32 %v404, %v428
    %v431 = vstv %s115
    %v432 = vmul.f32 %v431, %v424
    %v433 = vmul.f32 %v431, %v425
    %v434 = vadd.f32 %v408, %v432
    %v435 = vadd.f32 %v409, %v433
    %v436 = vstv %s151
    %v437 = vmul.f32 %v436, %v424
    %v438 = vmul.f32 %v436, %v425
    %v439 = vadd.f32 %v413, %v437
    %v440 = vadd.f32 %v414, %v438
    %v441 = vstv %s187
    %v442 = vmul.f32 %v441, %v424
    %v443 = vmul.f32 %v441, %v425
    %v444 = vadd.f32 %v418, %v442
    %v445 = vadd.f32 %v419, %v443
    %446 = vrot.lane.b32.xlu0 %v386, 1
    %v447 = vpop.permute.xlu0 %446
    %448 = vrot.lane.b32.xlu0 %v387, 1
    %v449 = vpop.permute.xlu0 %448
    %v450 = vsel %vm61, %v447, 0.0
    %v451 = vsel %vm61, %v449, 0.0
    %v452 = vstv %s88
    %v453 = vmul.f32 %v452, %v450
    %v454 = vmul.f32 %v452, %v451
    %v455 = vadd.f32 %v429, %v453
    %v456 = vadd.f32 %v430, %v454
    %v457 = vstv %s124
    %v458 = vmul.f32 %v457, %v450
    %v459 = vmul.f32 %v457, %v451
    %v460 = vadd.f32 %v434, %v458
    %v461 = vadd.f32 %v435, %v459
    %v462 = vstv %s160
    %v463 = vmul.f32 %v462, %v450
    %v464 = vmul.f32 %v462, %v451
    %v465 = vadd.f32 %v439, %v463
    %v466 = vadd.f32 %v440, %v464
    %v467 = vstv %s196
    %v468 = vmul.f32 %v467, %v450
    %v469 = vmul.f32 %v467, %v451
    %v470 = vadd.f32 %v444, %v468
    %v471 = vadd.f32 %v445, %v469
    %472 = vrot.lane.b32.xlu0 %v392, 1
    %v473 = vpop.permute.xlu0 %472
    %474 = vrot.lane.b32.xlu0 %v393, 1
    %v475 = vpop.permute.xlu0 %474
    %v476 = vsel %vm61, %v473, 0.0
    %v477 = vsel %vm61, %v475, 0.0
    %v478 = vstv %s97
    %v479 = vmul.f32 %v478, %v476
    %v480 = vmul.f32 %v478, %v477
    %v481 = vadd.f32 %v455, %v479
    %v482 = vadd.f32 %v456, %v480
    %v483 = vstv %s133
    %v484 = vmul.f32 %v483, %v476
    %v485 = vmul.f32 %v483, %v477
    %v486 = vadd.f32 %v460, %v484
    %v487 = vadd.f32 %v461, %v485
    %v488 = vstv %s169
    %v489 = vmul.f32 %v488, %v476
    %v490 = vmul.f32 %v488, %v477
    %v491 = vadd.f32 %v465, %v489
    %v492 = vadd.f32 %v466, %v490
    %v493 = vstv %s205
    %v494 = vmul.f32 %v493, %v476
    %v495 = vmul.f32 %v493, %v477
    %v496 = vadd.f32 %v470, %v494
    %v497 = vadd.f32 %v471, %v495
    %v498 = vstv %s71
    %v499 = vmul.f32 %v498, %v374
    %v500 = vmul.f32 %v498, %v375
    %v501 = vadd.f32 %v481, %v499
    %v502 = vadd.f32 %v482, %v500
    %v503 = vstv %s107
    %v504 = vmul.f32 %v503, %v374
    %v505 = vmul.f32 %v503, %v375
    %v506 = vadd.f32 %v486, %v504
    %v507 = vadd.f32 %v487, %v505
    %v508 = vstv %s143
    %v509 = vmul.f32 %v508, %v374
    %v510 = vmul.f32 %v508, %v375
    %v511 = vadd.f32 %v491, %v509
    %v512 = vadd.f32 %v492, %v510
    %v513 = vstv %s179
    %v514 = vmul.f32 %v513, %v374
    %v515 = vmul.f32 %v513, %v375
    %v516 = vadd.f32 %v496, %v514
    %v517 = vadd.f32 %v497, %v515
    %v518 = vstv %s80
    %v519 = vmul.f32 %v518, %v380
    %v520 = vmul.f32 %v518, %v381
    %v521 = vadd.f32 %v501, %v519
    %v522 = vadd.f32 %v502, %v520
    %v523 = vstv %s116
    %v524 = vmul.f32 %v523, %v380
    %v525 = vmul.f32 %v523, %v381
    %v526 = vadd.f32 %v506, %v524
    %v527 = vadd.f32 %v507, %v525
    %v528 = vstv %s152
    %v529 = vmul.f32 %v528, %v380
    %v530 = vmul.f32 %v528, %v381
    %v531 = vadd.f32 %v511, %v529
    %v532 = vadd.f32 %v512, %v530
    %v533 = vstv %s188
    %v534 = vmul.f32 %v533, %v380
    %v535 = vmul.f32 %v533, %v381
    %v536 = vadd.f32 %v516, %v534
    %v537 = vadd.f32 %v517, %v535
    %v538 = vstv %s89
    %v539 = vmul.f32 %v538, %v386
    %v540 = vmul.f32 %v538, %v387
    %v541 = vadd.f32 %v521, %v539
    %v542 = vadd.f32 %v522, %v540
    %v543 = vstv %s125
    %v544 = vmul.f32 %v543, %v386
    %v545 = vmul.f32 %v543, %v387
    %v546 = vadd.f32 %v526, %v544
    %v547 = vadd.f32 %v527, %v545
    %v548 = vstv %s161
    %v549 = vmul.f32 %v548, %v386
    %v550 = vmul.f32 %v548, %v387
    %v551 = vadd.f32 %v531, %v549
    %v552 = vadd.f32 %v532, %v550
    %v553 = vstv %s197
    %v554 = vmul.f32 %v553, %v386
    %v555 = vmul.f32 %v553, %v387
    %v556 = vadd.f32 %v536, %v554
    %v557 = vadd.f32 %v537, %v555
    %v558 = vstv %s98
    %v559 = vmul.f32 %v558, %v392
    %v560 = vmul.f32 %v558, %v393
    %v561 = vadd.f32 %v541, %v559
    %v562 = vadd.f32 %v542, %v560
    %v563 = vstv %s134
    %v564 = vmul.f32 %v563, %v392
    %v565 = vmul.f32 %v563, %v393
    %v566 = vadd.f32 %v546, %v564
    %v567 = vadd.f32 %v547, %v565
    %v568 = vstv %s170
    %v569 = vmul.f32 %v568, %v392
    %v570 = vmul.f32 %v568, %v393
    %v571 = vadd.f32 %v551, %v569
    %v572 = vadd.f32 %v552, %v570
    %v573 = vstv %s206
    %v574 = vmul.f32 %v573, %v392
    %v575 = vmul.f32 %v573, %v393
    %v576 = vadd.f32 %v556, %v574
    %v577 = vadd.f32 %v557, %v575
    %578 = vrot.lane.b32.xlu0 %v374, 127
    %v579 = vpop.permute.xlu0 %578
    %580 = vrot.lane.b32.xlu0 %v375, 127
    %v581 = vpop.permute.xlu0 %580
    %v582 = vsel %vm60, %v579, 0.0
    %v583 = vsel %vm60, %v581, 0.0
    %v584 = vstv %s72
    %v585 = vmul.f32 %v584, %v582
    %v586 = vmul.f32 %v584, %v583
    %v587 = vadd.f32 %v561, %v585
    %v588 = vadd.f32 %v562, %v586
    %v589 = vstv %s108
    %v590 = vmul.f32 %v589, %v582
    %v591 = vmul.f32 %v589, %v583
    %v592 = vadd.f32 %v566, %v590
    %v593 = vadd.f32 %v567, %v591
    %v594 = vstv %s144
    %v595 = vmul.f32 %v594, %v582
    %v596 = vmul.f32 %v594, %v583
    %v597 = vadd.f32 %v571, %v595
    %v598 = vadd.f32 %v572, %v596
    %v599 = vstv %s180
    %v600 = vmul.f32 %v599, %v582
    %v601 = vmul.f32 %v599, %v583
    %v602 = vadd.f32 %v576, %v600
    %v603 = vadd.f32 %v577, %v601
    %604 = vrot.lane.b32.xlu0 %v380, 127
    %v605 = vpop.permute.xlu0 %604
    %606 = vrot.lane.b32.xlu0 %v381, 127
    %v607 = vpop.permute.xlu0 %606
    %v608 = vsel %vm60, %v605, 0.0
    %v609 = vsel %vm60, %v607, 0.0
    %v610 = vstv %s81
    %v611 = vmul.f32 %v610, %v608
    %v612 = vmul.f32 %v610, %v609
    %v613 = vadd.f32 %v587, %v611
    %v614 = vadd.f32 %v588, %v612
    %v615 = vstv %s117
    %v616 = vmul.f32 %v615, %v608
    %v617 = vmul.f32 %v615, %v609
    %v618 = vadd.f32 %v592, %v616
    %v619 = vadd.f32 %v593, %v617
    %v620 = vstv %s153
    %v621 = vmul.f32 %v620, %v608
    %v622 = vmul.f32 %v620, %v609
    %v623 = vadd.f32 %v597, %v621
    %v624 = vadd.f32 %v598, %v622
    %v625 = vstv %s189
    %v626 = vmul.f32 %v625, %v608
    %v627 = vmul.f32 %v625, %v609
    %v628 = vadd.f32 %v602, %v626
    %v629 = vadd.f32 %v603, %v627
    %630 = vrot.lane.b32.xlu0 %v386, 127
    %v631 = vpop.permute.xlu0 %630
    %632 = vrot.lane.b32.xlu0 %v387, 127
    %v633 = vpop.permute.xlu0 %632
    %v634 = vsel %vm60, %v631, 0.0
    %v635 = vsel %vm60, %v633, 0.0
    %v636 = vstv %s90
    %v637 = vmul.f32 %v636, %v634
    %v638 = vmul.f32 %v636, %v635
    %v639 = vadd.f32 %v613, %v637
    %v640 = vadd.f32 %v614, %v638
    %v641 = vstv %s126
    %v642 = vmul.f32 %v641, %v634
    %v643 = vmul.f32 %v641, %v635
    %v644 = vadd.f32 %v618, %v642
    %v645 = vadd.f32 %v619, %v643
    %v646 = vstv %s162
    %v647 = vmul.f32 %v646, %v634
    %v648 = vmul.f32 %v646, %v635
    %v649 = vadd.f32 %v623, %v647
    %v650 = vadd.f32 %v624, %v648
    %v651 = vstv %s198
    %v652 = vmul.f32 %v651, %v634
    %v653 = vmul.f32 %v651, %v635
    %v654 = vadd.f32 %v628, %v652
    %v655 = vadd.f32 %v629, %v653
    %656 = vrot.lane.b32.xlu0 %v392, 127
    %v657 = vpop.permute.xlu0 %656
    %658 = vrot.lane.b32.xlu0 %v393, 127
    %v659 = vpop.permute.xlu0 %658
    %v660 = vsel %vm60, %v657, 0.0
    %v661 = vsel %vm60, %v659, 0.0
    %v662 = vstv %s99
    %v663 = vmul.f32 %v662, %v660
    %v664 = vmul.f32 %v662, %v661
    %v665 = vadd.f32 %v639, %v663
    %v666 = vadd.f32 %v640, %v664
    %v667 = vstv %s135
    %v668 = vmul.f32 %v667, %v660
    %v669 = vmul.f32 %v667, %v661
    %v670 = vadd.f32 %v644, %v668
    %v671 = vadd.f32 %v645, %v669
    %v672 = vstv %s171
    %v673 = vmul.f32 %v672, %v660
    %v674 = vmul.f32 %v672, %v661
    %v675 = vadd.f32 %v649, %v673
    %v676 = vadd.f32 %v650, %v674
    %v677 = vstv %s207
    %v678 = vmul.f32 %v677, %v660
    %v679 = vmul.f32 %v677, %v661
    %v680 = vadd.f32 %v654, %v678
    %v681 = vadd.f32 %v655, %v679
    %682 = vrot.lane.b32.xlu0 %v358, 1
    %v683 = vpop.permute.xlu0 %682
    %684 = vrot.lane.b32.xlu0 %v359, 1
    %v685 = vpop.permute.xlu0 %684
    %v686 = vsel %vm61, %v683, 0.0
    %v687 = vsel %vm61, %v685, 0.0
    %v688 = vstv %s73
    %v689 = vmul.f32 %v688, %v686
    %v690 = vmul.f32 %v688, %v687
    %v691 = vadd.f32 %v665, %v689
    %v692 = vadd.f32 %v666, %v690
    %v693 = vstv %s109
    %v694 = vmul.f32 %v693, %v686
    %v695 = vmul.f32 %v693, %v687
    %v696 = vadd.f32 %v670, %v694
    %v697 = vadd.f32 %v671, %v695
    %v698 = vstv %s145
    %v699 = vmul.f32 %v698, %v686
    %v700 = vmul.f32 %v698, %v687
    %v701 = vadd.f32 %v675, %v699
    %v702 = vadd.f32 %v676, %v700
    %v703 = vstv %s181
    %v704 = vmul.f32 %v703, %v686
    %v705 = vmul.f32 %v703, %v687
    %v706 = vadd.f32 %v680, %v704
    %v707 = vadd.f32 %v681, %v705
    %708 = vrot.lane.b32.xlu0 %v361, 1
    %v709 = vpop.permute.xlu0 %708
    %710 = vrot.lane.b32.xlu0 %v362, 1
    %v711 = vpop.permute.xlu0 %710
    %v712 = vsel %vm61, %v709, 0.0
    %v713 = vsel %vm61, %v711, 0.0
    %v714 = vstv %s82
    %v715 = vmul.f32 %v714, %v712
    %v716 = vmul.f32 %v714, %v713
    %v717 = vadd.f32 %v691, %v715
    %v718 = vadd.f32 %v692, %v716
    %v719 = vstv %s118
    %v720 = vmul.f32 %v719, %v712
    %v721 = vmul.f32 %v719, %v713
    %v722 = vadd.f32 %v696, %v720
    %v723 = vadd.f32 %v697, %v721
    %v724 = vstv %s154
    %v725 = vmul.f32 %v724, %v712
    %v726 = vmul.f32 %v724, %v713
    %v727 = vadd.f32 %v701, %v725
    %v728 = vadd.f32 %v702, %v726
    %v729 = vstv %s190
    %v730 = vmul.f32 %v729, %v712
    %v731 = vmul.f32 %v729, %v713
    %v732 = vadd.f32 %v706, %v730
    %v733 = vadd.f32 %v707, %v731
    %734 = vrot.lane.b32.xlu0 %v364, 1
    %v735 = vpop.permute.xlu0 %734
    %736 = vrot.lane.b32.xlu0 %v365, 1
    %v737 = vpop.permute.xlu0 %736
    %v738 = vsel %vm61, %v735, 0.0
    %v739 = vsel %vm61, %v737, 0.0
    %v740 = vstv %s91
    %v741 = vmul.f32 %v740, %v738
    %v742 = vmul.f32 %v740, %v739
    %v743 = vadd.f32 %v717, %v741
    %v744 = vadd.f32 %v718, %v742
    %v745 = vstv %s127
    %v746 = vmul.f32 %v745, %v738
    %v747 = vmul.f32 %v745, %v739
    %v748 = vadd.f32 %v722, %v746
    %v749 = vadd.f32 %v723, %v747
    %v750 = vstv %s163
    %v751 = vmul.f32 %v750, %v738
    %v752 = vmul.f32 %v750, %v739
    %v753 = vadd.f32 %v727, %v751
    %v754 = vadd.f32 %v728, %v752
    %v755 = vstv %s199
    %v756 = vmul.f32 %v755, %v738
    %v757 = vmul.f32 %v755, %v739
    %v758 = vadd.f32 %v732, %v756
    %v759 = vadd.f32 %v733, %v757
    %760 = vrot.lane.b32.xlu0 %v367, 1
    %v761 = vpop.permute.xlu0 %760
    %762 = vrot.lane.b32.xlu0 %v368, 1
    %v763 = vpop.permute.xlu0 %762
    %v764 = vsel %vm61, %v761, 0.0
    %v765 = vsel %vm61, %v763, 0.0
    %v766 = vstv %s100
    %v767 = vmul.f32 %v766, %v764
    %v768 = vmul.f32 %v766, %v765
    %v769 = vadd.f32 %v743, %v767
    %v770 = vadd.f32 %v744, %v768
    %v771 = vstv %s136
    %v772 = vmul.f32 %v771, %v764
    %v773 = vmul.f32 %v771, %v765
    %v774 = vadd.f32 %v748, %v772
    %v775 = vadd.f32 %v749, %v773
    %v776 = vstv %s172
    %v777 = vmul.f32 %v776, %v764
    %v778 = vmul.f32 %v776, %v765
    %v779 = vadd.f32 %v753, %v777
    %v780 = vadd.f32 %v754, %v778
    %v781 = vstv %s208
    %v782 = vmul.f32 %v781, %v764
    %v783 = vmul.f32 %v781, %v765
    %v784 = vadd.f32 %v758, %v782
    %v785 = vadd.f32 %v759, %v783
    %v786 = vstv %s74
    %v787 = vmul.f32 %v786, %v358
    %v788 = vmul.f32 %v786, %v359
    %v789 = vadd.f32 %v769, %v787
    %v790 = vadd.f32 %v770, %v788
    %v791 = vstv %s110
    %v792 = vmul.f32 %v791, %v358
    %v793 = vmul.f32 %v791, %v359
    %v794 = vadd.f32 %v774, %v792
    %v795 = vadd.f32 %v775, %v793
    %v796 = vstv %s146
    %v797 = vmul.f32 %v796, %v358
    %v798 = vmul.f32 %v796, %v359
    %v799 = vadd.f32 %v779, %v797
    %v800 = vadd.f32 %v780, %v798
    %v801 = vstv %s182
    %v802 = vmul.f32 %v801, %v358
    %v803 = vmul.f32 %v801, %v359
    %v804 = vadd.f32 %v784, %v802
    %v805 = vadd.f32 %v785, %v803
    %v806 = vstv %s83
    %v807 = vmul.f32 %v806, %v361
    %v808 = vmul.f32 %v806, %v362
    %v809 = vadd.f32 %v789, %v807
    %v810 = vadd.f32 %v790, %v808
    %v811 = vstv %s119
    %v812 = vmul.f32 %v811, %v361
    %v813 = vmul.f32 %v811, %v362
    %v814 = vadd.f32 %v794, %v812
    %v815 = vadd.f32 %v795, %v813
    %v816 = vstv %s155
    %v817 = vmul.f32 %v816, %v361
    %v818 = vmul.f32 %v816, %v362
    %v819 = vadd.f32 %v799, %v817
    %v820 = vadd.f32 %v800, %v818
    %v821 = vstv %s191
    %v822 = vmul.f32 %v821, %v361
    %v823 = vmul.f32 %v821, %v362
    %v824 = vadd.f32 %v804, %v822
    %v825 = vadd.f32 %v805, %v823
    %v826 = vstv %s92
    %v827 = vmul.f32 %v826, %v364
    %v828 = vmul.f32 %v826, %v365
    %v829 = vadd.f32 %v809, %v827
    %v830 = vadd.f32 %v810, %v828
    %v831 = vstv %s128
    %v832 = vmul.f32 %v831, %v364
    %v833 = vmul.f32 %v831, %v365
    %v834 = vadd.f32 %v814, %v832
    %v835 = vadd.f32 %v815, %v833
    %v836 = vstv %s164
    %v837 = vmul.f32 %v836, %v364
    %v838 = vmul.f32 %v836, %v365
    %v839 = vadd.f32 %v819, %v837
    %v840 = vadd.f32 %v820, %v838
    %v841 = vstv %s200
    %v842 = vmul.f32 %v841, %v364
    %v843 = vmul.f32 %v841, %v365
    %v844 = vadd.f32 %v824, %v842
    %v845 = vadd.f32 %v825, %v843
    %v846 = vstv %s101
    %v847 = vmul.f32 %v846, %v367
    %v848 = vmul.f32 %v846, %v368
    %v849 = vadd.f32 %v829, %v847
    %v850 = vadd.f32 %v830, %v848
    %v851 = vstv %s137
    %v852 = vmul.f32 %v851, %v367
    %v853 = vmul.f32 %v851, %v368
    %v854 = vadd.f32 %v834, %v852
    %v855 = vadd.f32 %v835, %v853
    %v856 = vstv %s173
    %v857 = vmul.f32 %v856, %v367
    %v858 = vmul.f32 %v856, %v368
    %v859 = vadd.f32 %v839, %v857
    %v860 = vadd.f32 %v840, %v858
    %v861 = vstv %s209
    %v862 = vmul.f32 %v861, %v367
    %v863 = vmul.f32 %v861, %v368
    %v864 = vadd.f32 %v844, %v862
    %v865 = vadd.f32 %v845, %v863
    %866 = vrot.lane.b32.xlu0 %v358, 127
    %v867 = vpop.permute.xlu0 %866
    %868 = vrot.lane.b32.xlu0 %v359, 127
    %v869 = vpop.permute.xlu0 %868
    %v870 = vsel %vm60, %v867, 0.0
    %v871 = vsel %vm60, %v869, 0.0
    %v872 = vstv %s75
    %v873 = vmul.f32 %v872, %v870
    %v874 = vmul.f32 %v872, %v871
    %v875 = vadd.f32 %v849, %v873
    %v876 = vadd.f32 %v850, %v874
    %v877 = vstv %s111
    %v878 = vmul.f32 %v877, %v870
    %v879 = vmul.f32 %v877, %v871
    %v880 = vadd.f32 %v854, %v878
    %v881 = vadd.f32 %v855, %v879
    %v882 = vstv %s147
    %v883 = vmul.f32 %v882, %v870
    %v884 = vmul.f32 %v882, %v871
    %v885 = vadd.f32 %v859, %v883
    %v886 = vadd.f32 %v860, %v884
    %v887 = vstv %s183
    %v888 = vmul.f32 %v887, %v870
    %v889 = vmul.f32 %v887, %v871
    %v890 = vadd.f32 %v864, %v888
    %v891 = vadd.f32 %v865, %v889
    %892 = vrot.lane.b32.xlu0 %v361, 127
    %v893 = vpop.permute.xlu0 %892
    %894 = vrot.lane.b32.xlu0 %v362, 127
    %v895 = vpop.permute.xlu0 %894
    %v896 = vsel %vm60, %v893, 0.0
    %v897 = vsel %vm60, %v895, 0.0
    %v898 = vstv %s84
    %v899 = vmul.f32 %v898, %v896
    %v900 = vmul.f32 %v898, %v897
    %v901 = vadd.f32 %v875, %v899
    %v902 = vadd.f32 %v876, %v900
    %v903 = vstv %s120
    %v904 = vmul.f32 %v903, %v896
    %v905 = vmul.f32 %v903, %v897
    %v906 = vadd.f32 %v880, %v904
    %v907 = vadd.f32 %v881, %v905
    %v908 = vstv %s156
    %v909 = vmul.f32 %v908, %v896
    %v910 = vmul.f32 %v908, %v897
    %v911 = vadd.f32 %v885, %v909
    %v912 = vadd.f32 %v886, %v910
    %v913 = vstv %s192
    %v914 = vmul.f32 %v913, %v896
    %v915 = vmul.f32 %v913, %v897
    %v916 = vadd.f32 %v890, %v914
    %v917 = vadd.f32 %v891, %v915
    %918 = vrot.lane.b32.xlu0 %v364, 127
    %v919 = vpop.permute.xlu0 %918
    %920 = vrot.lane.b32.xlu0 %v365, 127
    %v921 = vpop.permute.xlu0 %920
    %v922 = vsel %vm60, %v919, 0.0
    %v923 = vsel %vm60, %v921, 0.0
    %v924 = vstv %s93
    %v925 = vmul.f32 %v924, %v922
    %v926 = vmul.f32 %v924, %v923
    %v927 = vadd.f32 %v901, %v925
    %v928 = vadd.f32 %v902, %v926
    %v929 = vstv %s129
    %v930 = vmul.f32 %v929, %v922
    %v931 = vmul.f32 %v929, %v923
    %v932 = vadd.f32 %v906, %v930
    %v933 = vadd.f32 %v907, %v931
    %v934 = vstv %s165
    %v935 = vmul.f32 %v934, %v922
    %v936 = vmul.f32 %v934, %v923
    %v937 = vadd.f32 %v911, %v935
    %v938 = vadd.f32 %v912, %v936
    %v939 = vstv %s201
    %v940 = vmul.f32 %v939, %v922
    %v941 = vmul.f32 %v939, %v923
    %v942 = vadd.f32 %v916, %v940
    %v943 = vadd.f32 %v917, %v941
    %944 = vrot.lane.b32.xlu0 %v367, 127
    %v945 = vpop.permute.xlu0 %944
    %946 = vrot.lane.b32.xlu0 %v368, 127
    %v947 = vpop.permute.xlu0 %946
    %v948 = vsel %vm60, %v945, 0.0
    %v949 = vsel %vm60, %v947, 0.0
    %v950 = vstv %s102
    %v951 = vmul.f32 %v950, %v948
    %v952 = vmul.f32 %v950, %v949
    %v953 = vadd.f32 %v927, %v951
    %v954 = vadd.f32 %v928, %v952
    %v955 = vstv %s138
    %v956 = vmul.f32 %v955, %v948
    %v957 = vmul.f32 %v955, %v949
    %v958 = vadd.f32 %v932, %v956
    %v959 = vadd.f32 %v933, %v957
    %v960 = vstv %s174
    %v961 = vmul.f32 %v960, %v948
    %v962 = vmul.f32 %v960, %v949
    %v963 = vadd.f32 %v937, %v961
    %v964 = vadd.f32 %v938, %v962
    %v965 = vstv %s210
    %v966 = vmul.f32 %v965, %v948
    %v967 = vmul.f32 %v965, %v949
    %v968 = vadd.f32 %v942, %v966
    %v969 = vadd.f32 %v943, %v967
    %v970 = vrot.slane %v358, 1
    %v971 = vrot.slane %v359, 1
    %vm972 = vcmp.lt.s32.totalorder %v40, 7
    %v973 = vsel %vm972, %v970, %v971
    %v974 = vsel %vm972, %v971, %v970
    %v975 = vsel %vm56, %v973, 0.0
    %v976 = vsel %vm57, %v974, 0.0
    %v977 = vrot.slane %v361, 1
    %v978 = vrot.slane %v362, 1
    %v979 = vsel %vm972, %v977, %v978
    %v980 = vsel %vm972, %v978, %v977
    %v981 = vsel %vm56, %v979, 0.0
    %v982 = vsel %vm57, %v980, 0.0
    %v983 = vrot.slane %v364, 1
    %v984 = vrot.slane %v365, 1
    %v985 = vsel %vm972, %v983, %v984
    %v986 = vsel %vm972, %v984, %v983
    %v987 = vsel %vm56, %v985, 0.0
    %v988 = vsel %vm57, %v986, 0.0
    %v989 = vrot.slane %v367, 1
    %v990 = vrot.slane %v368, 1
    %v991 = vsel %vm972, %v989, %v990
    %v992 = vsel %vm972, %v990, %v989
    %v993 = vsel %vm56, %v991, 0.0
    %v994 = vsel %vm57, %v992, 0.0
    %995 = vrot.lane.b32.xlu0 %v975, 1
    %v996 = vpop.permute.xlu0 %995
    %997 = vrot.lane.b32.xlu0 %v976, 1
    %v998 = vpop.permute.xlu0 %997
    %v999 = vsel %vm61, %v996, 0.0
    %v1000 = vsel %vm61, %v998, 0.0
    %v1001 = vstv %s76
    %v1002 = vmul.f32 %v1001, %v999
    %v1003 = vmul.f32 %v1001, %v1000
    %v1004 = vadd.f32 %v953, %v1002
    %v1005 = vadd.f32 %v954, %v1003
    %v1006 = vstv %s112
    %v1007 = vmul.f32 %v1006, %v999
    %v1008 = vmul.f32 %v1006, %v1000
    %v1009 = vadd.f32 %v958, %v1007
    %v1010 = vadd.f32 %v959, %v1008
    %v1011 = vstv %s148
    %v1012 = vmul.f32 %v1011, %v999
    %v1013 = vmul.f32 %v1011, %v1000
    %v1014 = vadd.f32 %v963, %v1012
    %v1015 = vadd.f32 %v964, %v1013
    %v1016 = vstv %s184
    %v1017 = vmul.f32 %v1016, %v999
    %v1018 = vmul.f32 %v1016, %v1000
    %v1019 = vadd.f32 %v968, %v1017
    %v1020 = vadd.f32 %v969, %v1018
    %1021 = vrot.lane.b32.xlu0 %v981, 1
    %v1022 = vpop.permute.xlu0 %1021
    %1023 = vrot.lane.b32.xlu0 %v982, 1
    %v1024 = vpop.permute.xlu0 %1023
    %v1025 = vsel %vm61, %v1022, 0.0
    %v1026 = vsel %vm61, %v1024, 0.0
    %v1027 = vstv %s85
    %v1028 = vmul.f32 %v1027, %v1025
    %v1029 = vmul.f32 %v1027, %v1026
    %v1030 = vadd.f32 %v1004, %v1028
    %v1031 = vadd.f32 %v1005, %v1029
    %v1032 = vstv %s121
    %v1033 = vmul.f32 %v1032, %v1025
    %v1034 = vmul.f32 %v1032, %v1026
    %v1035 = vadd.f32 %v1009, %v1033
    %v1036 = vadd.f32 %v1010, %v1034
    %v1037 = vstv %s157
    %v1038 = vmul.f32 %v1037, %v1025
    %v1039 = vmul.f32 %v1037, %v1026
    %v1040 = vadd.f32 %v1014, %v1038
    %v1041 = vadd.f32 %v1015, %v1039
    %v1042 = vstv %s193
    %v1043 = vmul.f32 %v1042, %v1025
    %v1044 = vmul.f32 %v1042, %v1026
    %v1045 = vadd.f32 %v1019, %v1043
    %v1046 = vadd.f32 %v1020, %v1044
    %1047 = vrot.lane.b32.xlu0 %v987, 1
    %v1048 = vpop.permute.xlu0 %1047
    %1049 = vrot.lane.b32.xlu0 %v988, 1
    %v1050 = vpop.permute.xlu0 %1049
    %v1051 = vsel %vm61, %v1048, 0.0
    %v1052 = vsel %vm61, %v1050, 0.0
    %v1053 = vstv %s94
    %v1054 = vmul.f32 %v1053, %v1051
    %v1055 = vmul.f32 %v1053, %v1052
    %v1056 = vadd.f32 %v1030, %v1054
    %v1057 = vadd.f32 %v1031, %v1055
    %v1058 = vstv %s130
    %v1059 = vmul.f32 %v1058, %v1051
    %v1060 = vmul.f32 %v1058, %v1052
    %v1061 = vadd.f32 %v1035, %v1059
    %v1062 = vadd.f32 %v1036, %v1060
    %v1063 = vstv %s166
    %v1064 = vmul.f32 %v1063, %v1051
    %v1065 = vmul.f32 %v1063, %v1052
    %v1066 = vadd.f32 %v1040, %v1064
    %v1067 = vadd.f32 %v1041, %v1065
    %v1068 = vstv %s202
    %v1069 = vmul.f32 %v1068, %v1051
    %v1070 = vmul.f32 %v1068, %v1052
    %v1071 = vadd.f32 %v1045, %v1069
    %v1072 = vadd.f32 %v1046, %v1070
    %1073 = vrot.lane.b32.xlu0 %v993, 1
    %v1074 = vpop.permute.xlu0 %1073
    %1075 = vrot.lane.b32.xlu0 %v994, 1
    %v1076 = vpop.permute.xlu0 %1075
    %v1077 = vsel %vm61, %v1074, 0.0
    %v1078 = vsel %vm61, %v1076, 0.0
    %v1079 = vstv %s103
    %v1080 = vmul.f32 %v1079, %v1077
    %v1081 = vmul.f32 %v1079, %v1078
    %v1082 = vadd.f32 %v1056, %v1080
    %v1083 = vadd.f32 %v1057, %v1081
    %v1084 = vstv %s139
    %v1085 = vmul.f32 %v1084, %v1077
    %v1086 = vmul.f32 %v1084, %v1078
    %v1087 = vadd.f32 %v1061, %v1085
    %v1088 = vadd.f32 %v1062, %v1086
    %v1089 = vstv %s175
    %v1090 = vmul.f32 %v1089, %v1077
    %v1091 = vmul.f32 %v1089, %v1078
    %v1092 = vadd.f32 %v1066, %v1090
    %v1093 = vadd.f32 %v1067, %v1091
    %v1094 = vstv %s211
    %v1095 = vmul.f32 %v1094, %v1077
    %v1096 = vmul.f32 %v1094, %v1078
    %v1097 = vadd.f32 %v1071, %v1095
    %v1098 = vadd.f32 %v1072, %v1096
    %v1099 = vstv %s77
    %v1100 = vmul.f32 %v1099, %v975
    %v1101 = vmul.f32 %v1099, %v976
    %v1102 = vadd.f32 %v1082, %v1100
    %v1103 = vadd.f32 %v1083, %v1101
    %v1104 = vstv %s113
    %v1105 = vmul.f32 %v1104, %v975
    %v1106 = vmul.f32 %v1104, %v976
    %v1107 = vadd.f32 %v1087, %v1105
    %v1108 = vadd.f32 %v1088, %v1106
    %v1109 = vstv %s149
    %v1110 = vmul.f32 %v1109, %v975
    %v1111 = vmul.f32 %v1109, %v976
    %v1112 = vadd.f32 %v1092, %v1110
    %v1113 = vadd.f32 %v1093, %v1111
    %v1114 = vstv %s185
    %v1115 = vmul.f32 %v1114, %v975
    %v1116 = vmul.f32 %v1114, %v976
    %v1117 = vadd.f32 %v1097, %v1115
    %v1118 = vadd.f32 %v1098, %v1116
    %v1119 = vstv %s86
    %v1120 = vmul.f32 %v1119, %v981
    %v1121 = vmul.f32 %v1119, %v982
    %v1122 = vadd.f32 %v1102, %v1120
    %v1123 = vadd.f32 %v1103, %v1121
    %v1124 = vstv %s122
    %v1125 = vmul.f32 %v1124, %v981
    %v1126 = vmul.f32 %v1124, %v982
    %v1127 = vadd.f32 %v1107, %v1125
    %v1128 = vadd.f32 %v1108, %v1126
    %v1129 = vstv %s158
    %v1130 = vmul.f32 %v1129, %v981
    %v1131 = vmul.f32 %v1129, %v982
    %v1132 = vadd.f32 %v1112, %v1130
    %v1133 = vadd.f32 %v1113, %v1131
    %v1134 = vstv %s194
    %v1135 = vmul.f32 %v1134, %v981
    %v1136 = vmul.f32 %v1134, %v982
    %v1137 = vadd.f32 %v1117, %v1135
    %v1138 = vadd.f32 %v1118, %v1136
    %v1139 = vstv %s95
    %v1140 = vmul.f32 %v1139, %v987
    %v1141 = vmul.f32 %v1139, %v988
    %v1142 = vadd.f32 %v1122, %v1140
    %v1143 = vadd.f32 %v1123, %v1141
    %v1144 = vstv %s131
    %v1145 = vmul.f32 %v1144, %v987
    %v1146 = vmul.f32 %v1144, %v988
    %v1147 = vadd.f32 %v1127, %v1145
    %v1148 = vadd.f32 %v1128, %v1146
    %v1149 = vstv %s167
    %v1150 = vmul.f32 %v1149, %v987
    %v1151 = vmul.f32 %v1149, %v988
    %v1152 = vadd.f32 %v1132, %v1150
    %v1153 = vadd.f32 %v1133, %v1151
    %v1154 = vstv %s203
    %v1155 = vmul.f32 %v1154, %v987
    %v1156 = vmul.f32 %v1154, %v988
    %v1157 = vadd.f32 %v1137, %v1155
    %v1158 = vadd.f32 %v1138, %v1156
    %v1159 = vstv %s104
    %v1160 = vmul.f32 %v1159, %v993
    %v1161 = vmul.f32 %v1159, %v994
    %v1162 = vadd.f32 %v1142, %v1160
    %v1163 = vadd.f32 %v1143, %v1161
    %v1164 = vstv %s140
    %v1165 = vmul.f32 %v1164, %v993
    %v1166 = vmul.f32 %v1164, %v994
    %v1167 = vadd.f32 %v1147, %v1165
    %v1168 = vadd.f32 %v1148, %v1166
    %v1169 = vstv %s176
    %v1170 = vmul.f32 %v1169, %v993
    %v1171 = vmul.f32 %v1169, %v994
    %v1172 = vadd.f32 %v1152, %v1170
    %v1173 = vadd.f32 %v1153, %v1171
    %v1174 = vstv %s212
    %v1175 = vmul.f32 %v1174, %v993
    %v1176 = vmul.f32 %v1174, %v994
    %v1177 = vadd.f32 %v1157, %v1175
    %v1178 = vadd.f32 %v1158, %v1176
    %1179 = vrot.lane.b32.xlu0 %v975, 127
    %v1180 = vpop.permute.xlu0 %1179
    %1181 = vrot.lane.b32.xlu0 %v976, 127
    %v1182 = vpop.permute.xlu0 %1181
    %v1183 = vsel %vm60, %v1180, 0.0
    %v1184 = vsel %vm60, %v1182, 0.0
    %v1185 = vstv %s78
    %v1186 = vmul.f32 %v1185, %v1183
    %v1187 = vmul.f32 %v1185, %v1184
    %v1188 = vadd.f32 %v1162, %v1186
    %v1189 = vadd.f32 %v1163, %v1187
    %v1190 = vstv %s114
    %v1191 = vmul.f32 %v1190, %v1183
    %v1192 = vmul.f32 %v1190, %v1184
    %v1193 = vadd.f32 %v1167, %v1191
    %v1194 = vadd.f32 %v1168, %v1192
    %v1195 = vstv %s150
    %v1196 = vmul.f32 %v1195, %v1183
    %v1197 = vmul.f32 %v1195, %v1184
    %v1198 = vadd.f32 %v1172, %v1196
    %v1199 = vadd.f32 %v1173, %v1197
    %v1200 = vstv %s186
    %v1201 = vmul.f32 %v1200, %v1183
    %v1202 = vmul.f32 %v1200, %v1184
    %v1203 = vadd.f32 %v1177, %v1201
    %v1204 = vadd.f32 %v1178, %v1202
    %1205 = vrot.lane.b32.xlu0 %v981, 127
    %v1206 = vpop.permute.xlu0 %1205
    %1207 = vrot.lane.b32.xlu0 %v982, 127
    %v1208 = vpop.permute.xlu0 %1207
    %v1209 = vsel %vm60, %v1206, 0.0
    %v1210 = vsel %vm60, %v1208, 0.0
    %v1211 = vstv %s87
    %v1212 = vmul.f32 %v1211, %v1209
    %v1213 = vmul.f32 %v1211, %v1210
    %v1214 = vadd.f32 %v1188, %v1212
    %v1215 = vadd.f32 %v1189, %v1213
    %v1216 = vstv %s123
    %v1217 = vmul.f32 %v1216, %v1209
    %v1218 = vmul.f32 %v1216, %v1210
    %v1219 = vadd.f32 %v1193, %v1217
    %v1220 = vadd.f32 %v1194, %v1218
    %v1221 = vstv %s159
    %v1222 = vmul.f32 %v1221, %v1209
    %v1223 = vmul.f32 %v1221, %v1210
    %v1224 = vadd.f32 %v1198, %v1222
    %v1225 = vadd.f32 %v1199, %v1223
    %v1226 = vstv %s195
    %v1227 = vmul.f32 %v1226, %v1209
    %v1228 = vmul.f32 %v1226, %v1210
    %v1229 = vadd.f32 %v1203, %v1227
    %v1230 = vadd.f32 %v1204, %v1228
    %1231 = vrot.lane.b32.xlu0 %v987, 127
    %v1232 = vpop.permute.xlu0 %1231
    %1233 = vrot.lane.b32.xlu0 %v988, 127
    %v1234 = vpop.permute.xlu0 %1233
    %v1235 = vsel %vm60, %v1232, 0.0
    %v1236 = vsel %vm60, %v1234, 0.0
    %v1237 = vstv %s96
    %v1238 = vmul.f32 %v1237, %v1235
    %v1239 = vmul.f32 %v1237, %v1236
    %v1240 = vadd.f32 %v1214, %v1238
    %v1241 = vadd.f32 %v1215, %v1239
    %v1242 = vstv %s132
    %v1243 = vmul.f32 %v1242, %v1235
    %v1244 = vmul.f32 %v1242, %v1236
    %v1245 = vadd.f32 %v1219, %v1243
    %v1246 = vadd.f32 %v1220, %v1244
    %v1247 = vstv %s168
    %v1248 = vmul.f32 %v1247, %v1235
    %v1249 = vmul.f32 %v1247, %v1236
    %v1250 = vadd.f32 %v1224, %v1248
    %v1251 = vadd.f32 %v1225, %v1249
    %v1252 = vstv %s204
    %v1253 = vmul.f32 %v1252, %v1235
    %v1254 = vmul.f32 %v1252, %v1236
    %v1255 = vadd.f32 %v1229, %v1253
    %v1256 = vadd.f32 %v1230, %v1254
    %1257 = vrot.lane.b32.xlu0 %v993, 127
    %v1258 = vpop.permute.xlu0 %1257
    %1259 = vrot.lane.b32.xlu0 %v994, 127
    %v1260 = vpop.permute.xlu0 %1259
    %v1261 = vsel %vm60, %v1258, 0.0
    %v1262 = vsel %vm60, %v1260, 0.0
    %v1263 = vstv %s105
    %v1264 = vmul.f32 %v1263, %v1261
    %v1265 = vmul.f32 %v1263, %v1262
    %v1266 = vadd.f32 %v1240, %v1264
    %v1267 = vadd.f32 %v1241, %v1265
    %v1268 = vstv %s141
    %v1269 = vmul.f32 %v1268, %v1261
    %v1270 = vmul.f32 %v1268, %v1262
    %v1271 = vadd.f32 %v1245, %v1269
    %v1272 = vadd.f32 %v1246, %v1270
    %v1273 = vstv %s177
    %v1274 = vmul.f32 %v1273, %v1261
    %v1275 = vmul.f32 %v1273, %v1262
    %v1276 = vadd.f32 %v1250, %v1274
    %v1277 = vadd.f32 %v1251, %v1275
    %v1278 = vstv %s213
    %v1279 = vmul.f32 %v1278, %v1261
    %v1280 = vmul.f32 %v1278, %v1262
    %v1281 = vadd.f32 %v1255, %v1279
    %v1282 = vadd.f32 %v1256, %v1280
    %v1283 = vadd.f32 %v1266, %v1267
    %v1284 = vrot.slane %v1283, 4
    %v1285 = vadd.f32 %v1283, %v1284
    %v1286 = vrot.slane %v1285, 2
    %v1287 = vadd.f32 %v1285, %v1286
    %v1288 = vrot.slane %v1287, 1
    %v1289 = vadd.f32 %v1287, %v1288
    %v1290 = vadd.f32 %v1271, %v1272
    %v1291 = vrot.slane %v1290, 4
    %v1292 = vadd.f32 %v1290, %v1291
    %v1293 = vrot.slane %v1292, 2
    %v1294 = vadd.f32 %v1292, %v1293
    %v1295 = vrot.slane %v1294, 1
    %v1296 = vadd.f32 %v1294, %v1295
    %v1297 = vadd.f32 %v1276, %v1277
    %v1298 = vrot.slane %v1297, 4
    %v1299 = vadd.f32 %v1297, %v1298
    %v1300 = vrot.slane %v1299, 2
    %v1301 = vadd.f32 %v1299, %v1300
    %v1302 = vrot.slane %v1301, 1
    %v1303 = vadd.f32 %v1301, %v1302
    %v1304 = vadd.f32 %v1281, %v1282
    %v1305 = vrot.slane %v1304, 4
    %v1306 = vadd.f32 %v1304, %v1305
    %v1307 = vrot.slane %v1306, 2
    %v1308 = vadd.f32 %v1306, %v1307
    %v1309 = vrot.slane %v1308, 1
    %v1310 = vadd.f32 %v1308, %v1309
    %v1311 = vmul.f32 %v1266, %v1266
    %v1312 = vmul.f32 %v1267, %v1267
    %v1313 = vadd.f32 %v1311, %v1312
    %v1314 = vrot.slane %v1313, 4
    %v1315 = vadd.f32 %v1313, %v1314
    %v1316 = vrot.slane %v1315, 2
    %v1317 = vadd.f32 %v1315, %v1316
    %v1318 = vrot.slane %v1317, 1
    %v1319 = vadd.f32 %v1317, %v1318
    %v1320 = vmul.f32 %v1271, %v1271
    %v1321 = vmul.f32 %v1272, %v1272
    %v1322 = vadd.f32 %v1320, %v1321
    %v1323 = vrot.slane %v1322, 4
    %v1324 = vadd.f32 %v1322, %v1323
    %v1325 = vrot.slane %v1324, 2
    %v1326 = vadd.f32 %v1324, %v1325
    %v1327 = vrot.slane %v1326, 1
    %v1328 = vadd.f32 %v1326, %v1327
    %v1329 = vmul.f32 %v1276, %v1276
    %v1330 = vmul.f32 %v1277, %v1277
    %v1331 = vadd.f32 %v1329, %v1330
    %v1332 = vrot.slane %v1331, 4
    %v1333 = vadd.f32 %v1331, %v1332
    %v1334 = vrot.slane %v1333, 2
    %v1335 = vadd.f32 %v1333, %v1334
    %v1336 = vrot.slane %v1335, 1
    %v1337 = vadd.f32 %v1335, %v1336
    %v1338 = vmul.f32 %v1281, %v1281
    %v1339 = vmul.f32 %v1282, %v1282
    %v1340 = vadd.f32 %v1338, %v1339
    %v1341 = vrot.slane %v1340, 4
    %v1342 = vadd.f32 %v1340, %v1341
    %v1343 = vrot.slane %v1342, 2
    %v1344 = vadd.f32 %v1342, %v1343
    %v1345 = vrot.slane %v1344, 1
    %v1346 = vadd.f32 %v1344, %v1345
    %vm1347 = vcmask 1040384
    %v1348 = vsel %vm1347, %v1289, %v1296
    %vm1349 = vcmask 1041408
    %v1350 = vsel %vm1349, %v1348, %v1303
    %vm1351 = vcmask 1042432
    %v1352 = vsel %vm1351, %v1350, %v1310
    %vm1353 = vcmask 1043456
    %v1354 = vsel %vm1353, %v1352, %v1319
    %vm1355 = vcmask 1044480
    %v1356 = vsel %vm1355, %v1354, %v1328
    %vm1357 = vcmask 1045504
    %v1358 = vsel %vm1357, %v1356, %v1337
    %vm1359 = vcmask 1046528
    %v1360 = vsel %vm1359, %v1358, %v1346
    %1361 = vrot.lane.b32.xlu0 %v1360, 127
    %v1362 = vpop.permute.xlu0 %1361
    %1363 = vrot.lane.b32.xlu0 %v1360, 1
    %v1364 = vpop.permute.xlu0 %1363
    %v1365 = vsel %vm63, 1, 0
    %vm1366 = vcmp.eq.s32.totalorder %v1365, 1
    %v1367 = vsel %vm1366, %v1362, %v1364
    %v1368 = vadd.f32 %v1360, %v1367
    %1369 = vrot.lane.b32.xlu0 %v1368, 126
    %v1370 = vpop.permute.xlu0 %1369
    %1371 = vrot.lane.b32.xlu0 %v1368, 2
    %v1372 = vpop.permute.xlu0 %1371
    %v1373 = vsel %vm65, 1, 0
    %vm1374 = vcmp.eq.s32.totalorder %v1373, 1
    %v1375 = vsel %vm1374, %v1370, %v1372
    %v1376 = vadd.f32 %v1368, %v1375
    %1377 = vrot.lane.b32.xlu0 %v1376, 124
    %v1378 = vpop.permute.xlu0 %1377
    %1379 = vrot.lane.b32.xlu0 %v1376, 4
    %v1380 = vpop.permute.xlu0 %1379
    %v1381 = vsel %vm67, 1, 0
    %vm1382 = vcmp.eq.s32.totalorder %v1381, 1
    %v1383 = vsel %vm1382, %v1378, %v1380
    %v1384 = vadd.f32 %v1376, %v1383
    %1385 = vrot.lane.b32.xlu0 %v1384, 120
    %v1386 = vpop.permute.xlu0 %1385
    %1387 = vrot.lane.b32.xlu0 %v1384, 8
    %v1388 = vpop.permute.xlu0 %1387
    %v1389 = vsel %vm69, 1, 0
    %vm1390 = vcmp.eq.s32.totalorder %v1389, 1
    %v1391 = vsel %vm1390, %v1386, %v1388
    %v1392 = vadd.f32 %v1384, %v1391
    %v1393 = vmul.f32 %v1392, 0.00390625
    %v1394 = vmul.f32 %v1393, %v1393
    %v1396 = vrot.slane %v1394, 4
    %v1398 = vsub.f32 %v1393, %v1396
    %v1399 = vmax.f32 %v1398, 0.0
    %v1400 = vadd.f32 %v1399, 1e-05
    %v1401 = vrsqrt.pop %v1400
    %v1402 = vmul.f32 %v1401, %v1400
    %v1403 = vmul.f32 %v1402, %v1401
    %v1404 = vmul.f32 0.5, %v1403
    %v1405 = vsub.f32 1.5, %v1404
    %v1406 = vmul.f32 %v1401, %v1405
    %vm1407 = vweird.f32 %v1400
    %vm1408 = vweird.f32 %v1401
    %vm1409 = vmor %vm1407, %vm1408
    %v1410 = vsel %vm1409, %v1401, %v1406
    %v1411 = vperm.slane %v1393, 0
    %v1412 = vsub.f32 %v1266, %v1411
    %v1413 = vsub.f32 %v1267, %v1411
    %v1414 = vperm.slane %v1410, 4
    %v1415 = vmul.f32 %v1412, %v1414
    %v1416 = vmul.f32 %v1413, %v1414
    %v1417 = vmax.f32 %v1415, 0.0
    %v1418 = vmax.f32 %v1416, 0.0
    %v1419 = vperm.slane %v1393, 1
    %v1420 = vsub.f32 %v1271, %v1419
    %v1421 = vsub.f32 %v1272, %v1419
    %v1422 = vperm.slane %v1410, 5
    %v1423 = vmul.f32 %v1420, %v1422
    %v1424 = vmul.f32 %v1421, %v1422
    %v1425 = vmax.f32 %v1423, 0.0
    %v1426 = vmax.f32 %v1424, 0.0
    %v1427 = vperm.slane %v1393, 2
    %v1428 = vsub.f32 %v1276, %v1427
    %v1429 = vsub.f32 %v1277, %v1427
    %v1430 = vperm.slane %v1410, 6
    %v1431 = vmul.f32 %v1428, %v1430
    %v1432 = vmul.f32 %v1429, %v1430
    %v1433 = vmax.f32 %v1431, 0.0
    %v1434 = vmax.f32 %v1432, 0.0
    %v1435 = vperm.slane %v1393, 3
    %v1436 = vsub.f32 %v1281, %v1435
    %v1437 = vsub.f32 %v1282, %v1435
    %v1438 = vperm.slane %v1410, 7
    %v1439 = vmul.f32 %v1436, %v1438
    %v1440 = vmul.f32 %v1437, %v1438
    %v1441 = vmax.f32 %v1439, 0.0
    %v1442 = vmax.f32 %v1440, 0.0
    %v1443 = vrot.slane %v1417, 7
    %v1444 = vrot.slane %v1418, 7
    %v1445 = vsel %vm371, %v1443, %v1444
    %v1446 = vsel %vm371, %v1444, %v1443
    %v1447 = vsel %vm58, %v1446, 0.0
    %v1448 = vsel %vm59, %v1445, 0.0
    %v1449 = vrot.slane %v1425, 7
    %v1450 = vrot.slane %v1426, 7
    %v1451 = vsel %vm371, %v1449, %v1450
    %v1452 = vsel %vm371, %v1450, %v1449
    %v1453 = vsel %vm58, %v1452, 0.0
    %v1454 = vsel %vm59, %v1451, 0.0
    %v1455 = vrot.slane %v1433, 7
    %v1456 = vrot.slane %v1434, 7
    %v1457 = vsel %vm371, %v1455, %v1456
    %v1458 = vsel %vm371, %v1456, %v1455
    %v1459 = vsel %vm58, %v1458, 0.0
    %v1460 = vsel %vm59, %v1457, 0.0
    %v1461 = vrot.slane %v1441, 7
    %v1462 = vrot.slane %v1442, 7
    %v1463 = vsel %vm371, %v1461, %v1462
    %v1464 = vsel %vm371, %v1462, %v1461
    %v1465 = vsel %vm58, %v1464, 0.0
    %v1466 = vsel %vm59, %v1463, 0.0
    %1467 = vrot.lane.b32.xlu0 %v1447, 1
    %v1468 = vpop.permute.xlu0 %1467
    %1469 = vrot.lane.b32.xlu0 %v1448, 1
    %v1470 = vpop.permute.xlu0 %1469
    %v1471 = vsel %vm61, %v1468, 0.0
    %v1472 = vsel %vm61, %v1470, 0.0
    %v1473 = vstv %s214
    %v1474 = vmul.f32 %v1473, %v1471
    %v1475 = vmul.f32 %v1473, %v1472
    %v1476 = vadd.f32 %v1474, 0.0
    %v1477 = vadd.f32 %v1475, 0.0
    %v1478 = vstv %s250
    %v1479 = vmul.f32 %v1478, %v1471
    %v1480 = vmul.f32 %v1478, %v1472
    %v1481 = vadd.f32 %v1479, 0.0
    %v1482 = vadd.f32 %v1480, 0.0
    %v1483 = vstv %s286
    %v1484 = vmul.f32 %v1483, %v1471
    %v1485 = vmul.f32 %v1483, %v1472
    %v1486 = vadd.f32 %v1484, 0.0
    %v1487 = vadd.f32 %v1485, 0.0
    %v1488 = vstv %s322
    %v1489 = vmul.f32 %v1488, %v1471
    %v1490 = vmul.f32 %v1488, %v1472
    %v1491 = vadd.f32 %v1489, 0.0
    %v1492 = vadd.f32 %v1490, 0.0
    %1493 = vrot.lane.b32.xlu0 %v1453, 1
    %v1494 = vpop.permute.xlu0 %1493
    %1495 = vrot.lane.b32.xlu0 %v1454, 1
    %v1496 = vpop.permute.xlu0 %1495
    %v1497 = vsel %vm61, %v1494, 0.0
    %v1498 = vsel %vm61, %v1496, 0.0
    %v1499 = vstv %s223
    %v1500 = vmul.f32 %v1499, %v1497
    %v1501 = vmul.f32 %v1499, %v1498
    %v1502 = vadd.f32 %v1476, %v1500
    %v1503 = vadd.f32 %v1477, %v1501
    %v1504 = vstv %s259
    %v1505 = vmul.f32 %v1504, %v1497
    %v1506 = vmul.f32 %v1504, %v1498
    %v1507 = vadd.f32 %v1481, %v1505
    %v1508 = vadd.f32 %v1482, %v1506
    %v1509 = vstv %s295
    %v1510 = vmul.f32 %v1509, %v1497
    %v1511 = vmul.f32 %v1509, %v1498
    %v1512 = vadd.f32 %v1486, %v1510
    %v1513 = vadd.f32 %v1487, %v1511
    %v1514 = vstv %s331
    %v1515 = vmul.f32 %v1514, %v1497
    %v1516 = vmul.f32 %v1514, %v1498
    %v1517 = vadd.f32 %v1491, %v1515
    %v1518 = vadd.f32 %v1492, %v1516
    %1519 = vrot.lane.b32.xlu0 %v1459, 1
    %v1520 = vpop.permute.xlu0 %1519
    %1521 = vrot.lane.b32.xlu0 %v1460, 1
    %v1522 = vpop.permute.xlu0 %1521
    %v1523 = vsel %vm61, %v1520, 0.0
    %v1524 = vsel %vm61, %v1522, 0.0
    %v1525 = vstv %s232
    %v1526 = vmul.f32 %v1525, %v1523
    %v1527 = vmul.f32 %v1525, %v1524
    %v1528 = vadd.f32 %v1502, %v1526
    %v1529 = vadd.f32 %v1503, %v1527
    %v1530 = vstv %s268
    %v1531 = vmul.f32 %v1530, %v1523
    %v1532 = vmul.f32 %v1530, %v1524
    %v1533 = vadd.f32 %v1507, %v1531
    %v1534 = vadd.f32 %v1508, %v1532
    %v1535 = vstv %s304
    %v1536 = vmul.f32 %v1535, %v1523
    %v1537 = vmul.f32 %v1535, %v1524
    %v1538 = vadd.f32 %v1512, %v1536
    %v1539 = vadd.f32 %v1513, %v1537
    %v1540 = vstv %s340
    %v1541 = vmul.f32 %v1540, %v1523
    %v1542 = vmul.f32 %v1540, %v1524
    %v1543 = vadd.f32 %v1517, %v1541
    %v1544 = vadd.f32 %v1518, %v1542
    %1545 = vrot.lane.b32.xlu0 %v1465, 1
    %v1546 = vpop.permute.xlu0 %1545
    %1547 = vrot.lane.b32.xlu0 %v1466, 1
    %v1548 = vpop.permute.xlu0 %1547
    %v1549 = vsel %vm61, %v1546, 0.0
    %v1550 = vsel %vm61, %v1548, 0.0
    %v1551 = vstv %s241
    %v1552 = vmul.f32 %v1551, %v1549
    %v1553 = vmul.f32 %v1551, %v1550
    %v1554 = vadd.f32 %v1528, %v1552
    %v1555 = vadd.f32 %v1529, %v1553
    %v1556 = vstv %s277
    %v1557 = vmul.f32 %v1556, %v1549
    %v1558 = vmul.f32 %v1556, %v1550
    %v1559 = vadd.f32 %v1533, %v1557
    %v1560 = vadd.f32 %v1534, %v1558
    %v1561 = vstv %s313
    %v1562 = vmul.f32 %v1561, %v1549
    %v1563 = vmul.f32 %v1561, %v1550
    %v1564 = vadd.f32 %v1538, %v1562
    %v1565 = vadd.f32 %v1539, %v1563
    %v1566 = vstv %s349
    %v1567 = vmul.f32 %v1566, %v1549
    %v1568 = vmul.f32 %v1566, %v1550
    %v1569 = vadd.f32 %v1543, %v1567
    %v1570 = vadd.f32 %v1544, %v1568
    %v1571 = vstv %s215
    %v1572 = vmul.f32 %v1571, %v1447
    %v1573 = vmul.f32 %v1571, %v1448
    %v1574 = vadd.f32 %v1554, %v1572
    %v1575 = vadd.f32 %v1555, %v1573
    %v1576 = vstv %s251
    %v1577 = vmul.f32 %v1576, %v1447
    %v1578 = vmul.f32 %v1576, %v1448
    %v1579 = vadd.f32 %v1559, %v1577
    %v1580 = vadd.f32 %v1560, %v1578
    %v1581 = vstv %s287
    %v1582 = vmul.f32 %v1581, %v1447
    %v1583 = vmul.f32 %v1581, %v1448
    %v1584 = vadd.f32 %v1564, %v1582
    %v1585 = vadd.f32 %v1565, %v1583
    %v1586 = vstv %s323
    %v1587 = vmul.f32 %v1586, %v1447
    %v1588 = vmul.f32 %v1586, %v1448
    %v1589 = vadd.f32 %v1569, %v1587
    %v1590 = vadd.f32 %v1570, %v1588
    %v1591 = vstv %s224
    %v1592 = vmul.f32 %v1591, %v1453
    %v1593 = vmul.f32 %v1591, %v1454
    %v1594 = vadd.f32 %v1574, %v1592
    %v1595 = vadd.f32 %v1575, %v1593
    %v1596 = vstv %s260
    %v1597 = vmul.f32 %v1596, %v1453
    %v1598 = vmul.f32 %v1596, %v1454
    %v1599 = vadd.f32 %v1579, %v1597
    %v1600 = vadd.f32 %v1580, %v1598
    %v1601 = vstv %s296
    %v1602 = vmul.f32 %v1601, %v1453
    %v1603 = vmul.f32 %v1601, %v1454
    %v1604 = vadd.f32 %v1584, %v1602
    %v1605 = vadd.f32 %v1585, %v1603
    %v1606 = vstv %s332
    %v1607 = vmul.f32 %v1606, %v1453
    %v1608 = vmul.f32 %v1606, %v1454
    %v1609 = vadd.f32 %v1589, %v1607
    %v1610 = vadd.f32 %v1590, %v1608
    %v1611 = vstv %s233
    %v1612 = vmul.f32 %v1611, %v1459
    %v1613 = vmul.f32 %v1611, %v1460
    %v1614 = vadd.f32 %v1594, %v1612
    %v1615 = vadd.f32 %v1595, %v1613
    %v1616 = vstv %s269
    %v1617 = vmul.f32 %v1616, %v1459
    %v1618 = vmul.f32 %v1616, %v1460
    %v1619 = vadd.f32 %v1599, %v1617
    %v1620 = vadd.f32 %v1600, %v1618
    %v1621 = vstv %s305
    %v1622 = vmul.f32 %v1621, %v1459
    %v1623 = vmul.f32 %v1621, %v1460
    %v1624 = vadd.f32 %v1604, %v1622
    %v1625 = vadd.f32 %v1605, %v1623
    %v1626 = vstv %s341
    %v1627 = vmul.f32 %v1626, %v1459
    %v1628 = vmul.f32 %v1626, %v1460
    %v1629 = vadd.f32 %v1609, %v1627
    %v1630 = vadd.f32 %v1610, %v1628
    %v1631 = vstv %s242
    %v1632 = vmul.f32 %v1631, %v1465
    %v1633 = vmul.f32 %v1631, %v1466
    %v1634 = vadd.f32 %v1614, %v1632
    %v1635 = vadd.f32 %v1615, %v1633
    %v1636 = vstv %s278
    %v1637 = vmul.f32 %v1636, %v1465
    %v1638 = vmul.f32 %v1636, %v1466
    %v1639 = vadd.f32 %v1619, %v1637
    %v1640 = vadd.f32 %v1620, %v1638
    %v1641 = vstv %s314
    %v1642 = vmul.f32 %v1641, %v1465
    %v1643 = vmul.f32 %v1641, %v1466
    %v1644 = vadd.f32 %v1624, %v1642
    %v1645 = vadd.f32 %v1625, %v1643
    %v1646 = vstv %s350
    %v1647 = vmul.f32 %v1646, %v1465
    %v1648 = vmul.f32 %v1646, %v1466
    %v1649 = vadd.f32 %v1629, %v1647
    %v1650 = vadd.f32 %v1630, %v1648
    %1651 = vrot.lane.b32.xlu0 %v1447, 127
    %v1652 = vpop.permute.xlu0 %1651
    %1653 = vrot.lane.b32.xlu0 %v1448, 127
    %v1654 = vpop.permute.xlu0 %1653
    %v1655 = vsel %vm60, %v1652, 0.0
    %v1656 = vsel %vm60, %v1654, 0.0
    %v1657 = vstv %s216
    %v1658 = vmul.f32 %v1657, %v1655
    %v1659 = vmul.f32 %v1657, %v1656
    %v1660 = vadd.f32 %v1634, %v1658
    %v1661 = vadd.f32 %v1635, %v1659
    %v1662 = vstv %s252
    %v1663 = vmul.f32 %v1662, %v1655
    %v1664 = vmul.f32 %v1662, %v1656
    %v1665 = vadd.f32 %v1639, %v1663
    %v1666 = vadd.f32 %v1640, %v1664
    %v1667 = vstv %s288
    %v1668 = vmul.f32 %v1667, %v1655
    %v1669 = vmul.f32 %v1667, %v1656
    %v1670 = vadd.f32 %v1644, %v1668
    %v1671 = vadd.f32 %v1645, %v1669
    %v1672 = vstv %s324
    %v1673 = vmul.f32 %v1672, %v1655
    %v1674 = vmul.f32 %v1672, %v1656
    %v1675 = vadd.f32 %v1649, %v1673
    %v1676 = vadd.f32 %v1650, %v1674
    %1677 = vrot.lane.b32.xlu0 %v1453, 127
    %v1678 = vpop.permute.xlu0 %1677
    %1679 = vrot.lane.b32.xlu0 %v1454, 127
    %v1680 = vpop.permute.xlu0 %1679
    %v1681 = vsel %vm60, %v1678, 0.0
    %v1682 = vsel %vm60, %v1680, 0.0
    %v1683 = vstv %s225
    %v1684 = vmul.f32 %v1683, %v1681
    %v1685 = vmul.f32 %v1683, %v1682
    %v1686 = vadd.f32 %v1660, %v1684
    %v1687 = vadd.f32 %v1661, %v1685
    %v1688 = vstv %s261
    %v1689 = vmul.f32 %v1688, %v1681
    %v1690 = vmul.f32 %v1688, %v1682
    %v1691 = vadd.f32 %v1665, %v1689
    %v1692 = vadd.f32 %v1666, %v1690
    %v1693 = vstv %s297
    %v1694 = vmul.f32 %v1693, %v1681
    %v1695 = vmul.f32 %v1693, %v1682
    %v1696 = vadd.f32 %v1670, %v1694
    %v1697 = vadd.f32 %v1671, %v1695
    %v1698 = vstv %s333
    %v1699 = vmul.f32 %v1698, %v1681
    %v1700 = vmul.f32 %v1698, %v1682
    %v1701 = vadd.f32 %v1675, %v1699
    %v1702 = vadd.f32 %v1676, %v1700
    %1703 = vrot.lane.b32.xlu0 %v1459, 127
    %v1704 = vpop.permute.xlu0 %1703
    %1705 = vrot.lane.b32.xlu0 %v1460, 127
    %v1706 = vpop.permute.xlu0 %1705
    %v1707 = vsel %vm60, %v1704, 0.0
    %v1708 = vsel %vm60, %v1706, 0.0
    %v1709 = vstv %s234
    %v1710 = vmul.f32 %v1709, %v1707
    %v1711 = vmul.f32 %v1709, %v1708
    %v1712 = vadd.f32 %v1686, %v1710
    %v1713 = vadd.f32 %v1687, %v1711
    %v1714 = vstv %s270
    %v1715 = vmul.f32 %v1714, %v1707
    %v1716 = vmul.f32 %v1714, %v1708
    %v1717 = vadd.f32 %v1691, %v1715
    %v1718 = vadd.f32 %v1692, %v1716
    %v1719 = vstv %s306
    %v1720 = vmul.f32 %v1719, %v1707
    %v1721 = vmul.f32 %v1719, %v1708
    %v1722 = vadd.f32 %v1696, %v1720
    %v1723 = vadd.f32 %v1697, %v1721
    %v1724 = vstv %s342
    %v1725 = vmul.f32 %v1724, %v1707
    %v1726 = vmul.f32 %v1724, %v1708
    %v1727 = vadd.f32 %v1701, %v1725
    %v1728 = vadd.f32 %v1702, %v1726
    %1729 = vrot.lane.b32.xlu0 %v1465, 127
    %v1730 = vpop.permute.xlu0 %1729
    %1731 = vrot.lane.b32.xlu0 %v1466, 127
    %v1732 = vpop.permute.xlu0 %1731
    %v1733 = vsel %vm60, %v1730, 0.0
    %v1734 = vsel %vm60, %v1732, 0.0
    %v1735 = vstv %s243
    %v1736 = vmul.f32 %v1735, %v1733
    %v1737 = vmul.f32 %v1735, %v1734
    %v1738 = vadd.f32 %v1712, %v1736
    %v1739 = vadd.f32 %v1713, %v1737
    %v1740 = vstv %s279
    %v1741 = vmul.f32 %v1740, %v1733
    %v1742 = vmul.f32 %v1740, %v1734
    %v1743 = vadd.f32 %v1717, %v1741
    %v1744 = vadd.f32 %v1718, %v1742
    %v1745 = vstv %s315
    %v1746 = vmul.f32 %v1745, %v1733
    %v1747 = vmul.f32 %v1745, %v1734
    %v1748 = vadd.f32 %v1722, %v1746
    %v1749 = vadd.f32 %v1723, %v1747
    %v1750 = vstv %s351
    %v1751 = vmul.f32 %v1750, %v1733
    %v1752 = vmul.f32 %v1750, %v1734
    %v1753 = vadd.f32 %v1727, %v1751
    %v1754 = vadd.f32 %v1728, %v1752
    %1755 = vrot.lane.b32.xlu0 %v1417, 1
    %v1756 = vpop.permute.xlu0 %1755
    %1757 = vrot.lane.b32.xlu0 %v1418, 1
    %v1758 = vpop.permute.xlu0 %1757
    %v1759 = vsel %vm61, %v1756, 0.0
    %v1760 = vsel %vm61, %v1758, 0.0
    %v1761 = vstv %s217
    %v1762 = vmul.f32 %v1761, %v1759
    %v1763 = vmul.f32 %v1761, %v1760
    %v1764 = vadd.f32 %v1738, %v1762
    %v1765 = vadd.f32 %v1739, %v1763
    %v1766 = vstv %s253
    %v1767 = vmul.f32 %v1766, %v1759
    %v1768 = vmul.f32 %v1766, %v1760
    %v1769 = vadd.f32 %v1743, %v1767
    %v1770 = vadd.f32 %v1744, %v1768
    %v1771 = vstv %s289
    %v1772 = vmul.f32 %v1771, %v1759
    %v1773 = vmul.f32 %v1771, %v1760
    %v1774 = vadd.f32 %v1748, %v1772
    %v1775 = vadd.f32 %v1749, %v1773
    %v1776 = vstv %s325
    %v1777 = vmul.f32 %v1776, %v1759
    %v1778 = vmul.f32 %v1776, %v1760
    %v1779 = vadd.f32 %v1753, %v1777
    %v1780 = vadd.f32 %v1754, %v1778
    %1781 = vrot.lane.b32.xlu0 %v1425, 1
    %v1782 = vpop.permute.xlu0 %1781
    %1783 = vrot.lane.b32.xlu0 %v1426, 1
    %v1784 = vpop.permute.xlu0 %1783
    %v1785 = vsel %vm61, %v1782, 0.0
    %v1786 = vsel %vm61, %v1784, 0.0
    %v1787 = vstv %s226
    %v1788 = vmul.f32 %v1787, %v1785
    %v1789 = vmul.f32 %v1787, %v1786
    %v1790 = vadd.f32 %v1764, %v1788
    %v1791 = vadd.f32 %v1765, %v1789
    %v1792 = vstv %s262
    %v1793 = vmul.f32 %v1792, %v1785
    %v1794 = vmul.f32 %v1792, %v1786
    %v1795 = vadd.f32 %v1769, %v1793
    %v1796 = vadd.f32 %v1770, %v1794
    %v1797 = vstv %s298
    %v1798 = vmul.f32 %v1797, %v1785
    %v1799 = vmul.f32 %v1797, %v1786
    %v1800 = vadd.f32 %v1774, %v1798
    %v1801 = vadd.f32 %v1775, %v1799
    %v1802 = vstv %s334
    %v1803 = vmul.f32 %v1802, %v1785
    %v1804 = vmul.f32 %v1802, %v1786
    %v1805 = vadd.f32 %v1779, %v1803
    %v1806 = vadd.f32 %v1780, %v1804
    %1807 = vrot.lane.b32.xlu0 %v1433, 1
    %v1808 = vpop.permute.xlu0 %1807
    %1809 = vrot.lane.b32.xlu0 %v1434, 1
    %v1810 = vpop.permute.xlu0 %1809
    %v1811 = vsel %vm61, %v1808, 0.0
    %v1812 = vsel %vm61, %v1810, 0.0
    %v1813 = vstv %s235
    %v1814 = vmul.f32 %v1813, %v1811
    %v1815 = vmul.f32 %v1813, %v1812
    %v1816 = vadd.f32 %v1790, %v1814
    %v1817 = vadd.f32 %v1791, %v1815
    %v1818 = vstv %s271
    %v1819 = vmul.f32 %v1818, %v1811
    %v1820 = vmul.f32 %v1818, %v1812
    %v1821 = vadd.f32 %v1795, %v1819
    %v1822 = vadd.f32 %v1796, %v1820
    %v1823 = vstv %s307
    %v1824 = vmul.f32 %v1823, %v1811
    %v1825 = vmul.f32 %v1823, %v1812
    %v1826 = vadd.f32 %v1800, %v1824
    %v1827 = vadd.f32 %v1801, %v1825
    %v1828 = vstv %s343
    %v1829 = vmul.f32 %v1828, %v1811
    %v1830 = vmul.f32 %v1828, %v1812
    %v1831 = vadd.f32 %v1805, %v1829
    %v1832 = vadd.f32 %v1806, %v1830
    %1833 = vrot.lane.b32.xlu0 %v1441, 1
    %v1834 = vpop.permute.xlu0 %1833
    %1835 = vrot.lane.b32.xlu0 %v1442, 1
    %v1836 = vpop.permute.xlu0 %1835
    %v1837 = vsel %vm61, %v1834, 0.0
    %v1838 = vsel %vm61, %v1836, 0.0
    %v1839 = vstv %s244
    %v1840 = vmul.f32 %v1839, %v1837
    %v1841 = vmul.f32 %v1839, %v1838
    %v1842 = vadd.f32 %v1816, %v1840
    %v1843 = vadd.f32 %v1817, %v1841
    %v1844 = vstv %s280
    %v1845 = vmul.f32 %v1844, %v1837
    %v1846 = vmul.f32 %v1844, %v1838
    %v1847 = vadd.f32 %v1821, %v1845
    %v1848 = vadd.f32 %v1822, %v1846
    %v1849 = vstv %s316
    %v1850 = vmul.f32 %v1849, %v1837
    %v1851 = vmul.f32 %v1849, %v1838
    %v1852 = vadd.f32 %v1826, %v1850
    %v1853 = vadd.f32 %v1827, %v1851
    %v1854 = vstv %s352
    %v1855 = vmul.f32 %v1854, %v1837
    %v1856 = vmul.f32 %v1854, %v1838
    %v1857 = vadd.f32 %v1831, %v1855
    %v1858 = vadd.f32 %v1832, %v1856
    %v1859 = vstv %s218
    %v1860 = vmul.f32 %v1859, %v1417
    %v1861 = vmul.f32 %v1859, %v1418
    %v1862 = vadd.f32 %v1842, %v1860
    %v1863 = vadd.f32 %v1843, %v1861
    %v1864 = vstv %s254
    %v1865 = vmul.f32 %v1864, %v1417
    %v1866 = vmul.f32 %v1864, %v1418
    %v1867 = vadd.f32 %v1847, %v1865
    %v1868 = vadd.f32 %v1848, %v1866
    %v1869 = vstv %s290
    %v1870 = vmul.f32 %v1869, %v1417
    %v1871 = vmul.f32 %v1869, %v1418
    %v1872 = vadd.f32 %v1852, %v1870
    %v1873 = vadd.f32 %v1853, %v1871
    %v1874 = vstv %s326
    %v1875 = vmul.f32 %v1874, %v1417
    %v1876 = vmul.f32 %v1874, %v1418
    %v1877 = vadd.f32 %v1857, %v1875
    %v1878 = vadd.f32 %v1858, %v1876
    %v1879 = vstv %s227
    %v1880 = vmul.f32 %v1879, %v1425
    %v1881 = vmul.f32 %v1879, %v1426
    %v1882 = vadd.f32 %v1862, %v1880
    %v1883 = vadd.f32 %v1863, %v1881
    %v1884 = vstv %s263
    %v1885 = vmul.f32 %v1884, %v1425
    %v1886 = vmul.f32 %v1884, %v1426
    %v1887 = vadd.f32 %v1867, %v1885
    %v1888 = vadd.f32 %v1868, %v1886
    %v1889 = vstv %s299
    %v1890 = vmul.f32 %v1889, %v1425
    %v1891 = vmul.f32 %v1889, %v1426
    %v1892 = vadd.f32 %v1872, %v1890
    %v1893 = vadd.f32 %v1873, %v1891
    %v1894 = vstv %s335
    %v1895 = vmul.f32 %v1894, %v1425
    %v1896 = vmul.f32 %v1894, %v1426
    %v1897 = vadd.f32 %v1877, %v1895
    %v1898 = vadd.f32 %v1878, %v1896
    %v1899 = vstv %s236
    %v1900 = vmul.f32 %v1899, %v1433
    %v1901 = vmul.f32 %v1899, %v1434
    %v1902 = vadd.f32 %v1882, %v1900
    %v1903 = vadd.f32 %v1883, %v1901
    %v1904 = vstv %s272
    %v1905 = vmul.f32 %v1904, %v1433
    %v1906 = vmul.f32 %v1904, %v1434
    %v1907 = vadd.f32 %v1887, %v1905
    %v1908 = vadd.f32 %v1888, %v1906
    %v1909 = vstv %s308
    %v1910 = vmul.f32 %v1909, %v1433
    %v1911 = vmul.f32 %v1909, %v1434
    %v1912 = vadd.f32 %v1892, %v1910
    %v1913 = vadd.f32 %v1893, %v1911
    %v1914 = vstv %s344
    %v1915 = vmul.f32 %v1914, %v1433
    %v1916 = vmul.f32 %v1914, %v1434
    %v1917 = vadd.f32 %v1897, %v1915
    %v1918 = vadd.f32 %v1898, %v1916
    %v1919 = vstv %s245
    %v1920 = vmul.f32 %v1919, %v1441
    %v1921 = vmul.f32 %v1919, %v1442
    %v1922 = vadd.f32 %v1902, %v1920
    %v1923 = vadd.f32 %v1903, %v1921
    %v1924 = vstv %s281
    %v1925 = vmul.f32 %v1924, %v1441
    %v1926 = vmul.f32 %v1924, %v1442
    %v1927 = vadd.f32 %v1907, %v1925
    %v1928 = vadd.f32 %v1908, %v1926
    %v1929 = vstv %s317
    %v1930 = vmul.f32 %v1929, %v1441
    %v1931 = vmul.f32 %v1929, %v1442
    %v1932 = vadd.f32 %v1912, %v1930
    %v1933 = vadd.f32 %v1913, %v1931
    %v1934 = vstv %s353
    %v1935 = vmul.f32 %v1934, %v1441
    %v1936 = vmul.f32 %v1934, %v1442
    %v1937 = vadd.f32 %v1917, %v1935
    %v1938 = vadd.f32 %v1918, %v1936
    %1939 = vrot.lane.b32.xlu0 %v1417, 127
    %v1940 = vpop.permute.xlu0 %1939
    %1941 = vrot.lane.b32.xlu0 %v1418, 127
    %v1942 = vpop.permute.xlu0 %1941
    %v1943 = vsel %vm60, %v1940, 0.0
    %v1944 = vsel %vm60, %v1942, 0.0
    %v1945 = vstv %s219
    %v1946 = vmul.f32 %v1945, %v1943
    %v1947 = vmul.f32 %v1945, %v1944
    %v1948 = vadd.f32 %v1922, %v1946
    %v1949 = vadd.f32 %v1923, %v1947
    %v1950 = vstv %s255
    %v1951 = vmul.f32 %v1950, %v1943
    %v1952 = vmul.f32 %v1950, %v1944
    %v1953 = vadd.f32 %v1927, %v1951
    %v1954 = vadd.f32 %v1928, %v1952
    %v1955 = vstv %s291
    %v1956 = vmul.f32 %v1955, %v1943
    %v1957 = vmul.f32 %v1955, %v1944
    %v1958 = vadd.f32 %v1932, %v1956
    %v1959 = vadd.f32 %v1933, %v1957
    %v1960 = vstv %s327
    %v1961 = vmul.f32 %v1960, %v1943
    %v1962 = vmul.f32 %v1960, %v1944
    %v1963 = vadd.f32 %v1937, %v1961
    %v1964 = vadd.f32 %v1938, %v1962
    %1965 = vrot.lane.b32.xlu0 %v1425, 127
    %v1966 = vpop.permute.xlu0 %1965
    %1967 = vrot.lane.b32.xlu0 %v1426, 127
    %v1968 = vpop.permute.xlu0 %1967
    %v1969 = vsel %vm60, %v1966, 0.0
    %v1970 = vsel %vm60, %v1968, 0.0
    %v1971 = vstv %s228
    %v1972 = vmul.f32 %v1971, %v1969
    %v1973 = vmul.f32 %v1971, %v1970
    %v1974 = vadd.f32 %v1948, %v1972
    %v1975 = vadd.f32 %v1949, %v1973
    %v1976 = vstv %s264
    %v1977 = vmul.f32 %v1976, %v1969
    %v1978 = vmul.f32 %v1976, %v1970
    %v1979 = vadd.f32 %v1953, %v1977
    %v1980 = vadd.f32 %v1954, %v1978
    %v1981 = vstv %s300
    %v1982 = vmul.f32 %v1981, %v1969
    %v1983 = vmul.f32 %v1981, %v1970
    %v1984 = vadd.f32 %v1958, %v1982
    %v1985 = vadd.f32 %v1959, %v1983
    %v1986 = vstv %s336
    %v1987 = vmul.f32 %v1986, %v1969
    %v1988 = vmul.f32 %v1986, %v1970
    %v1989 = vadd.f32 %v1963, %v1987
    %v1990 = vadd.f32 %v1964, %v1988
    %1991 = vrot.lane.b32.xlu0 %v1433, 127
    %v1992 = vpop.permute.xlu0 %1991
    %1993 = vrot.lane.b32.xlu0 %v1434, 127
    %v1994 = vpop.permute.xlu0 %1993
    %v1995 = vsel %vm60, %v1992, 0.0
    %v1996 = vsel %vm60, %v1994, 0.0
    %v1997 = vstv %s237
    %v1998 = vmul.f32 %v1997, %v1995
    %v1999 = vmul.f32 %v1997, %v1996
    %v2000 = vadd.f32 %v1974, %v1998
    %v2001 = vadd.f32 %v1975, %v1999
    %v2002 = vstv %s273
    %v2003 = vmul.f32 %v2002, %v1995
    %v2004 = vmul.f32 %v2002, %v1996
    %v2005 = vadd.f32 %v1979, %v2003
    %v2006 = vadd.f32 %v1980, %v2004
    %v2007 = vstv %s309
    %v2008 = vmul.f32 %v2007, %v1995
    %v2009 = vmul.f32 %v2007, %v1996
    %v2010 = vadd.f32 %v1984, %v2008
    %v2011 = vadd.f32 %v1985, %v2009
    %v2012 = vstv %s345
    %v2013 = vmul.f32 %v2012, %v1995
    %v2014 = vmul.f32 %v2012, %v1996
    %v2015 = vadd.f32 %v1989, %v2013
    %v2016 = vadd.f32 %v1990, %v2014
    %2017 = vrot.lane.b32.xlu0 %v1441, 127
    %v2018 = vpop.permute.xlu0 %2017
    %2019 = vrot.lane.b32.xlu0 %v1442, 127
    %v2020 = vpop.permute.xlu0 %2019
    %v2021 = vsel %vm60, %v2018, 0.0
    %v2022 = vsel %vm60, %v2020, 0.0
    %v2023 = vstv %s246
    %v2024 = vmul.f32 %v2023, %v2021
    %v2025 = vmul.f32 %v2023, %v2022
    %v2026 = vadd.f32 %v2000, %v2024
    %v2027 = vadd.f32 %v2001, %v2025
    %v2028 = vstv %s282
    %v2029 = vmul.f32 %v2028, %v2021
    %v2030 = vmul.f32 %v2028, %v2022
    %v2031 = vadd.f32 %v2005, %v2029
    %v2032 = vadd.f32 %v2006, %v2030
    %v2033 = vstv %s318
    %v2034 = vmul.f32 %v2033, %v2021
    %v2035 = vmul.f32 %v2033, %v2022
    %v2036 = vadd.f32 %v2010, %v2034
    %v2037 = vadd.f32 %v2011, %v2035
    %v2038 = vstv %s354
    %v2039 = vmul.f32 %v2038, %v2021
    %v2040 = vmul.f32 %v2038, %v2022
    %v2041 = vadd.f32 %v2015, %v2039
    %v2042 = vadd.f32 %v2016, %v2040
    %v2043 = vrot.slane %v1417, 1
    %v2044 = vrot.slane %v1418, 1
    %v2045 = vsel %vm972, %v2043, %v2044
    %v2046 = vsel %vm972, %v2044, %v2043
    %v2047 = vsel %vm56, %v2045, 0.0
    %v2048 = vsel %vm57, %v2046, 0.0
    %v2049 = vrot.slane %v1425, 1
    %v2050 = vrot.slane %v1426, 1
    %v2051 = vsel %vm972, %v2049, %v2050
    %v2052 = vsel %vm972, %v2050, %v2049
    %v2053 = vsel %vm56, %v2051, 0.0
    %v2054 = vsel %vm57, %v2052, 0.0
    %v2055 = vrot.slane %v1433, 1
    %v2056 = vrot.slane %v1434, 1
    %v2057 = vsel %vm972, %v2055, %v2056
    %v2058 = vsel %vm972, %v2056, %v2055
    %v2059 = vsel %vm56, %v2057, 0.0
    %v2060 = vsel %vm57, %v2058, 0.0
    %v2061 = vrot.slane %v1441, 1
    %v2062 = vrot.slane %v1442, 1
    %v2063 = vsel %vm972, %v2061, %v2062
    %v2064 = vsel %vm972, %v2062, %v2061
    %v2065 = vsel %vm56, %v2063, 0.0
    %v2066 = vsel %vm57, %v2064, 0.0
    %2067 = vrot.lane.b32.xlu0 %v2047, 1
    %v2068 = vpop.permute.xlu0 %2067
    %2069 = vrot.lane.b32.xlu0 %v2048, 1
    %v2070 = vpop.permute.xlu0 %2069
    %v2071 = vsel %vm61, %v2068, 0.0
    %v2072 = vsel %vm61, %v2070, 0.0
    %v2073 = vstv %s220
    %v2074 = vmul.f32 %v2073, %v2071
    %v2075 = vmul.f32 %v2073, %v2072
    %v2076 = vadd.f32 %v2026, %v2074
    %v2077 = vadd.f32 %v2027, %v2075
    %v2078 = vstv %s256
    %v2079 = vmul.f32 %v2078, %v2071
    %v2080 = vmul.f32 %v2078, %v2072
    %v2081 = vadd.f32 %v2031, %v2079
    %v2082 = vadd.f32 %v2032, %v2080
    %v2083 = vstv %s292
    %v2084 = vmul.f32 %v2083, %v2071
    %v2085 = vmul.f32 %v2083, %v2072
    %v2086 = vadd.f32 %v2036, %v2084
    %v2087 = vadd.f32 %v2037, %v2085
    %v2088 = vstv %s328
    %v2089 = vmul.f32 %v2088, %v2071
    %v2090 = vmul.f32 %v2088, %v2072
    %v2091 = vadd.f32 %v2041, %v2089
    %v2092 = vadd.f32 %v2042, %v2090
    %2093 = vrot.lane.b32.xlu0 %v2053, 1
    %v2094 = vpop.permute.xlu0 %2093
    %2095 = vrot.lane.b32.xlu0 %v2054, 1
    %v2096 = vpop.permute.xlu0 %2095
    %v2097 = vsel %vm61, %v2094, 0.0
    %v2098 = vsel %vm61, %v2096, 0.0
    %v2099 = vstv %s229
    %v2100 = vmul.f32 %v2099, %v2097
    %v2101 = vmul.f32 %v2099, %v2098
    %v2102 = vadd.f32 %v2076, %v2100
    %v2103 = vadd.f32 %v2077, %v2101
    %v2104 = vstv %s265
    %v2105 = vmul.f32 %v2104, %v2097
    %v2106 = vmul.f32 %v2104, %v2098
    %v2107 = vadd.f32 %v2081, %v2105
    %v2108 = vadd.f32 %v2082, %v2106
    %v2109 = vstv %s301
    %v2110 = vmul.f32 %v2109, %v2097
    %v2111 = vmul.f32 %v2109, %v2098
    %v2112 = vadd.f32 %v2086, %v2110
    %v2113 = vadd.f32 %v2087, %v2111
    %v2114 = vstv %s337
    %v2115 = vmul.f32 %v2114, %v2097
    %v2116 = vmul.f32 %v2114, %v2098
    %v2117 = vadd.f32 %v2091, %v2115
    %v2118 = vadd.f32 %v2092, %v2116
    %2119 = vrot.lane.b32.xlu0 %v2059, 1
    %v2120 = vpop.permute.xlu0 %2119
    %2121 = vrot.lane.b32.xlu0 %v2060, 1
    %v2122 = vpop.permute.xlu0 %2121
    %v2123 = vsel %vm61, %v2120, 0.0
    %v2124 = vsel %vm61, %v2122, 0.0
    %v2125 = vstv %s238
    %v2126 = vmul.f32 %v2125, %v2123
    %v2127 = vmul.f32 %v2125, %v2124
    %v2128 = vadd.f32 %v2102, %v2126
    %v2129 = vadd.f32 %v2103, %v2127
    %v2130 = vstv %s274
    %v2131 = vmul.f32 %v2130, %v2123
    %v2132 = vmul.f32 %v2130, %v2124
    %v2133 = vadd.f32 %v2107, %v2131
    %v2134 = vadd.f32 %v2108, %v2132
    %v2135 = vstv %s310
    %v2136 = vmul.f32 %v2135, %v2123
    %v2137 = vmul.f32 %v2135, %v2124
    %v2138 = vadd.f32 %v2112, %v2136
    %v2139 = vadd.f32 %v2113, %v2137
    %v2140 = vstv %s346
    %v2141 = vmul.f32 %v2140, %v2123
    %v2142 = vmul.f32 %v2140, %v2124
    %v2143 = vadd.f32 %v2117, %v2141
    %v2144 = vadd.f32 %v2118, %v2142
    %2145 = vrot.lane.b32.xlu0 %v2065, 1
    %v2146 = vpop.permute.xlu0 %2145
    %2147 = vrot.lane.b32.xlu0 %v2066, 1
    %v2148 = vpop.permute.xlu0 %2147
    %v2149 = vsel %vm61, %v2146, 0.0
    %v2150 = vsel %vm61, %v2148, 0.0
    %v2151 = vstv %s247
    %v2152 = vmul.f32 %v2151, %v2149
    %v2153 = vmul.f32 %v2151, %v2150
    %v2154 = vadd.f32 %v2128, %v2152
    %v2155 = vadd.f32 %v2129, %v2153
    %v2156 = vstv %s283
    %v2157 = vmul.f32 %v2156, %v2149
    %v2158 = vmul.f32 %v2156, %v2150
    %v2159 = vadd.f32 %v2133, %v2157
    %v2160 = vadd.f32 %v2134, %v2158
    %v2161 = vstv %s319
    %v2162 = vmul.f32 %v2161, %v2149
    %v2163 = vmul.f32 %v2161, %v2150
    %v2164 = vadd.f32 %v2138, %v2162
    %v2165 = vadd.f32 %v2139, %v2163
    %v2166 = vstv %s355
    %v2167 = vmul.f32 %v2166, %v2149
    %v2168 = vmul.f32 %v2166, %v2150
    %v2169 = vadd.f32 %v2143, %v2167
    %v2170 = vadd.f32 %v2144, %v2168
    %v2171 = vstv %s221
    %v2172 = vmul.f32 %v2171, %v2047
    %v2173 = vmul.f32 %v2171, %v2048
    %v2174 = vadd.f32 %v2154, %v2172
    %v2175 = vadd.f32 %v2155, %v2173
    %v2176 = vstv %s257
    %v2177 = vmul.f32 %v2176, %v2047
    %v2178 = vmul.f32 %v2176, %v2048
    %v2179 = vadd.f32 %v2159, %v2177
    %v2180 = vadd.f32 %v2160, %v2178
    %v2181 = vstv %s293
    %v2182 = vmul.f32 %v2181, %v2047
    %v2183 = vmul.f32 %v2181, %v2048
    %v2184 = vadd.f32 %v2164, %v2182
    %v2185 = vadd.f32 %v2165, %v2183
    %v2186 = vstv %s329
    %v2187 = vmul.f32 %v2186, %v2047
    %v2188 = vmul.f32 %v2186, %v2048
    %v2189 = vadd.f32 %v2169, %v2187
    %v2190 = vadd.f32 %v2170, %v2188
    %v2191 = vstv %s230
    %v2192 = vmul.f32 %v2191, %v2053
    %v2193 = vmul.f32 %v2191, %v2054
    %v2194 = vadd.f32 %v2174, %v2192
    %v2195 = vadd.f32 %v2175, %v2193
    %v2196 = vstv %s266
    %v2197 = vmul.f32 %v2196, %v2053
    %v2198 = vmul.f32 %v2196, %v2054
    %v2199 = vadd.f32 %v2179, %v2197
    %v2200 = vadd.f32 %v2180, %v2198
    %v2201 = vstv %s302
    %v2202 = vmul.f32 %v2201, %v2053
    %v2203 = vmul.f32 %v2201, %v2054
    %v2204 = vadd.f32 %v2184, %v2202
    %v2205 = vadd.f32 %v2185, %v2203
    %v2206 = vstv %s338
    %v2207 = vmul.f32 %v2206, %v2053
    %v2208 = vmul.f32 %v2206, %v2054
    %v2209 = vadd.f32 %v2189, %v2207
    %v2210 = vadd.f32 %v2190, %v2208
    %v2211 = vstv %s239
    %v2212 = vmul.f32 %v2211, %v2059
    %v2213 = vmul.f32 %v2211, %v2060
    %v2214 = vadd.f32 %v2194, %v2212
    %v2215 = vadd.f32 %v2195, %v2213
    %v2216 = vstv %s275
    %v2217 = vmul.f32 %v2216, %v2059
    %v2218 = vmul.f32 %v2216, %v2060
    %v2219 = vadd.f32 %v2199, %v2217
    %v2220 = vadd.f32 %v2200, %v2218
    %v2221 = vstv %s311
    %v2222 = vmul.f32 %v2221, %v2059
    %v2223 = vmul.f32 %v2221, %v2060
    %v2224 = vadd.f32 %v2204, %v2222
    %v2225 = vadd.f32 %v2205, %v2223
    %v2226 = vstv %s347
    %v2227 = vmul.f32 %v2226, %v2059
    %v2228 = vmul.f32 %v2226, %v2060
    %v2229 = vadd.f32 %v2209, %v2227
    %v2230 = vadd.f32 %v2210, %v2228
    %v2231 = vstv %s248
    %v2232 = vmul.f32 %v2231, %v2065
    %v2233 = vmul.f32 %v2231, %v2066
    %v2234 = vadd.f32 %v2214, %v2232
    %v2235 = vadd.f32 %v2215, %v2233
    %v2236 = vstv %s284
    %v2237 = vmul.f32 %v2236, %v2065
    %v2238 = vmul.f32 %v2236, %v2066
    %v2239 = vadd.f32 %v2219, %v2237
    %v2240 = vadd.f32 %v2220, %v2238
    %v2241 = vstv %s320
    %v2242 = vmul.f32 %v2241, %v2065
    %v2243 = vmul.f32 %v2241, %v2066
    %v2244 = vadd.f32 %v2224, %v2242
    %v2245 = vadd.f32 %v2225, %v2243
    %v2246 = vstv %s356
    %v2247 = vmul.f32 %v2246, %v2065
    %v2248 = vmul.f32 %v2246, %v2066
    %v2249 = vadd.f32 %v2229, %v2247
    %v2250 = vadd.f32 %v2230, %v2248
    %2251 = vrot.lane.b32.xlu0 %v2047, 127
    %v2252 = vpop.permute.xlu0 %2251
    %2253 = vrot.lane.b32.xlu0 %v2048, 127
    %v2254 = vpop.permute.xlu0 %2253
    %v2255 = vsel %vm60, %v2252, 0.0
    %v2256 = vsel %vm60, %v2254, 0.0
    %v2257 = vstv %s222
    %v2258 = vmul.f32 %v2257, %v2255
    %v2259 = vmul.f32 %v2257, %v2256
    %v2260 = vadd.f32 %v2234, %v2258
    %v2261 = vadd.f32 %v2235, %v2259
    %v2262 = vstv %s258
    %v2263 = vmul.f32 %v2262, %v2255
    %v2264 = vmul.f32 %v2262, %v2256
    %v2265 = vadd.f32 %v2239, %v2263
    %v2266 = vadd.f32 %v2240, %v2264
    %v2267 = vstv %s294
    %v2268 = vmul.f32 %v2267, %v2255
    %v2269 = vmul.f32 %v2267, %v2256
    %v2270 = vadd.f32 %v2244, %v2268
    %v2271 = vadd.f32 %v2245, %v2269
    %v2272 = vstv %s330
    %v2273 = vmul.f32 %v2272, %v2255
    %v2274 = vmul.f32 %v2272, %v2256
    %v2275 = vadd.f32 %v2249, %v2273
    %v2276 = vadd.f32 %v2250, %v2274
    %2277 = vrot.lane.b32.xlu0 %v2053, 127
    %v2278 = vpop.permute.xlu0 %2277
    %2279 = vrot.lane.b32.xlu0 %v2054, 127
    %v2280 = vpop.permute.xlu0 %2279
    %v2281 = vsel %vm60, %v2278, 0.0
    %v2282 = vsel %vm60, %v2280, 0.0
    %v2283 = vstv %s231
    %v2284 = vmul.f32 %v2283, %v2281
    %v2285 = vmul.f32 %v2283, %v2282
    %v2286 = vadd.f32 %v2260, %v2284
    %v2287 = vadd.f32 %v2261, %v2285
    %v2288 = vstv %s267
    %v2289 = vmul.f32 %v2288, %v2281
    %v2290 = vmul.f32 %v2288, %v2282
    %v2291 = vadd.f32 %v2265, %v2289
    %v2292 = vadd.f32 %v2266, %v2290
    %v2293 = vstv %s303
    %v2294 = vmul.f32 %v2293, %v2281
    %v2295 = vmul.f32 %v2293, %v2282
    %v2296 = vadd.f32 %v2270, %v2294
    %v2297 = vadd.f32 %v2271, %v2295
    %v2298 = vstv %s339
    %v2299 = vmul.f32 %v2298, %v2281
    %v2300 = vmul.f32 %v2298, %v2282
    %v2301 = vadd.f32 %v2275, %v2299
    %v2302 = vadd.f32 %v2276, %v2300
    %2303 = vrot.lane.b32.xlu0 %v2059, 127
    %v2304 = vpop.permute.xlu0 %2303
    %2305 = vrot.lane.b32.xlu0 %v2060, 127
    %v2306 = vpop.permute.xlu0 %2305
    %v2307 = vsel %vm60, %v2304, 0.0
    %v2308 = vsel %vm60, %v2306, 0.0
    %v2309 = vstv %s240
    %v2310 = vmul.f32 %v2309, %v2307
    %v2311 = vmul.f32 %v2309, %v2308
    %v2312 = vadd.f32 %v2286, %v2310
    %v2313 = vadd.f32 %v2287, %v2311
    %v2314 = vstv %s276
    %v2315 = vmul.f32 %v2314, %v2307
    %v2316 = vmul.f32 %v2314, %v2308
    %v2317 = vadd.f32 %v2291, %v2315
    %v2318 = vadd.f32 %v2292, %v2316
    %v2319 = vstv %s312
    %v2320 = vmul.f32 %v2319, %v2307
    %v2321 = vmul.f32 %v2319, %v2308
    %v2322 = vadd.f32 %v2296, %v2320
    %v2323 = vadd.f32 %v2297, %v2321
    %v2324 = vstv %s348
    %v2325 = vmul.f32 %v2324, %v2307
    %v2326 = vmul.f32 %v2324, %v2308
    %v2327 = vadd.f32 %v2301, %v2325
    %v2328 = vadd.f32 %v2302, %v2326
    %2329 = vrot.lane.b32.xlu0 %v2065, 127
    %v2330 = vpop.permute.xlu0 %2329
    %2331 = vrot.lane.b32.xlu0 %v2066, 127
    %v2332 = vpop.permute.xlu0 %2331
    %v2333 = vsel %vm60, %v2330, 0.0
    %v2334 = vsel %vm60, %v2332, 0.0
    %v2335 = vstv %s249
    %v2336 = vmul.f32 %v2335, %v2333
    %v2337 = vmul.f32 %v2335, %v2334
    %v2338 = vadd.f32 %v2312, %v2336
    %v2339 = vadd.f32 %v2313, %v2337
    %v2340 = vstv %s285
    %v2341 = vmul.f32 %v2340, %v2333
    %v2342 = vmul.f32 %v2340, %v2334
    %v2343 = vadd.f32 %v2317, %v2341
    %v2344 = vadd.f32 %v2318, %v2342
    %v2345 = vstv %s321
    %v2346 = vmul.f32 %v2345, %v2333
    %v2347 = vmul.f32 %v2345, %v2334
    %v2348 = vadd.f32 %v2322, %v2346
    %v2349 = vadd.f32 %v2323, %v2347
    %v2350 = vstv %s357
    %v2351 = vmul.f32 %v2350, %v2333
    %v2352 = vmul.f32 %v2350, %v2334
    %v2353 = vadd.f32 %v2327, %v2351
    %v2354 = vadd.f32 %v2328, %v2352
    %v2355 = vadd.f32 %v2338, %v2339
    %v2356 = vrot.slane %v2355, 4
    %v2357 = vadd.f32 %v2355, %v2356
    %v2358 = vrot.slane %v2357, 2
    %v2359 = vadd.f32 %v2357, %v2358
    %v2360 = vrot.slane %v2359, 1
    %v2361 = vadd.f32 %v2359, %v2360
    %v2362 = vadd.f32 %v2343, %v2344
    %v2363 = vrot.slane %v2362, 4
    %v2364 = vadd.f32 %v2362, %v2363
    %v2365 = vrot.slane %v2364, 2
    %v2366 = vadd.f32 %v2364, %v2365
    %v2367 = vrot.slane %v2366, 1
    %v2368 = vadd.f32 %v2366, %v2367
    %v2369 = vadd.f32 %v2348, %v2349
    %v2370 = vrot.slane %v2369, 4
    %v2371 = vadd.f32 %v2369, %v2370
    %v2372 = vrot.slane %v2371, 2
    %v2373 = vadd.f32 %v2371, %v2372
    %v2374 = vrot.slane %v2373, 1
    %v2375 = vadd.f32 %v2373, %v2374
    %v2376 = vadd.f32 %v2353, %v2354
    %v2377 = vrot.slane %v2376, 4
    %v2378 = vadd.f32 %v2376, %v2377
    %v2379 = vrot.slane %v2378, 2
    %v2380 = vadd.f32 %v2378, %v2379
    %v2381 = vrot.slane %v2380, 1
    %v2382 = vadd.f32 %v2380, %v2381
    %v2383 = vmul.f32 %v2338, %v2338
    %v2384 = vmul.f32 %v2339, %v2339
    %v2385 = vadd.f32 %v2383, %v2384
    %v2386 = vrot.slane %v2385, 4
    %v2387 = vadd.f32 %v2385, %v2386
    %v2388 = vrot.slane %v2387, 2
    %v2389 = vadd.f32 %v2387, %v2388
    %v2390 = vrot.slane %v2389, 1
    %v2391 = vadd.f32 %v2389, %v2390
    %v2392 = vmul.f32 %v2343, %v2343
    %v2393 = vmul.f32 %v2344, %v2344
    %v2394 = vadd.f32 %v2392, %v2393
    %v2395 = vrot.slane %v2394, 4
    %v2396 = vadd.f32 %v2394, %v2395
    %v2397 = vrot.slane %v2396, 2
    %v2398 = vadd.f32 %v2396, %v2397
    %v2399 = vrot.slane %v2398, 1
    %v2400 = vadd.f32 %v2398, %v2399
    %v2401 = vmul.f32 %v2348, %v2348
    %v2402 = vmul.f32 %v2349, %v2349
    %v2403 = vadd.f32 %v2401, %v2402
    %v2404 = vrot.slane %v2403, 4
    %v2405 = vadd.f32 %v2403, %v2404
    %v2406 = vrot.slane %v2405, 2
    %v2407 = vadd.f32 %v2405, %v2406
    %v2408 = vrot.slane %v2407, 1
    %v2409 = vadd.f32 %v2407, %v2408
    %v2410 = vmul.f32 %v2353, %v2353
    %v2411 = vmul.f32 %v2354, %v2354
    %v2412 = vadd.f32 %v2410, %v2411
    %v2413 = vrot.slane %v2412, 4
    %v2414 = vadd.f32 %v2412, %v2413
    %v2415 = vrot.slane %v2414, 2
    %v2416 = vadd.f32 %v2414, %v2415
    %v2417 = vrot.slane %v2416, 1
    %v2418 = vadd.f32 %v2416, %v2417
    %v2419 = vsel %vm1347, %v2361, %v2368
    %v2420 = vsel %vm1349, %v2419, %v2375
    %v2421 = vsel %vm1351, %v2420, %v2382
    %v2422 = vsel %vm1353, %v2421, %v2391
    %v2423 = vsel %vm1355, %v2422, %v2400
    %v2424 = vsel %vm1357, %v2423, %v2409
    %v2425 = vsel %vm1359, %v2424, %v2418
    %2426 = vrot.lane.b32.xlu0 %v2425, 127
    %v2427 = vpop.permute.xlu0 %2426
    %2428 = vrot.lane.b32.xlu0 %v2425, 1
    %v2429 = vpop.permute.xlu0 %2428
    %v2430 = vsel %vm1366, %v2427, %v2429
    %v2431 = vadd.f32 %v2425, %v2430
    %2432 = vrot.lane.b32.xlu0 %v2431, 126
    %v2433 = vpop.permute.xlu0 %2432
    %2434 = vrot.lane.b32.xlu0 %v2431, 2
    %v2435 = vpop.permute.xlu0 %2434
    %v2436 = vsel %vm1374, %v2433, %v2435
    %v2437 = vadd.f32 %v2431, %v2436
    %2438 = vrot.lane.b32.xlu0 %v2437, 124
    %v2439 = vpop.permute.xlu0 %2438
    %2440 = vrot.lane.b32.xlu0 %v2437, 4
    %v2441 = vpop.permute.xlu0 %2440
    %v2442 = vsel %vm1382, %v2439, %v2441
    %v2443 = vadd.f32 %v2437, %v2442
    %2444 = vrot.lane.b32.xlu0 %v2443, 120
    %v2445 = vpop.permute.xlu0 %2444
    %2446 = vrot.lane.b32.xlu0 %v2443, 8
    %v2447 = vpop.permute.xlu0 %2446
    %v2448 = vsel %vm1390, %v2445, %v2447
    %v2449 = vadd.f32 %v2443, %v2448
    %v2450 = vmul.f32 %v2449, 0.00390625
    %v2451 = vmul.f32 %v2450, %v2450
    %v2453 = vrot.slane %v2451, 4
    %v2455 = vsub.f32 %v2450, %v2453
    %v2456 = vmax.f32 %v2455, 0.0
    %v2457 = vadd.f32 %v2456, 1e-05
    %v2458 = vrsqrt.pop %v2457
    %v2459 = vmul.f32 %v2458, %v2457
    %v2460 = vmul.f32 %v2459, %v2458
    %v2461 = vmul.f32 0.5, %v2460
    %v2462 = vsub.f32 1.5, %v2461
    %v2463 = vmul.f32 %v2458, %v2462
    %vm2464 = vweird.f32 %v2457
    %vm2465 = vweird.f32 %v2458
    %vm2466 = vmor %vm2464, %vm2465
    %v2467 = vsel %vm2466, %v2458, %v2463
    %v2468 = vperm.slane %v2450, 0
    %v2469 = vsub.f32 %v2338, %v2468
    %v2470 = vsub.f32 %v2339, %v2468
    %v2471 = vperm.slane %v2467, 4
    %v2472 = vmul.f32 %v2469, %v2471
    %v2473 = vmul.f32 %v2470, %v2471
    %v2474 = vperm.slane %v2450, 1
    %v2475 = vsub.f32 %v2343, %v2474
    %v2476 = vsub.f32 %v2344, %v2474
    %v2477 = vperm.slane %v2467, 5
    %v2478 = vmul.f32 %v2475, %v2477
    %v2479 = vmul.f32 %v2476, %v2477
    %v2480 = vperm.slane %v2450, 2
    %v2481 = vsub.f32 %v2348, %v2480
    %v2482 = vsub.f32 %v2349, %v2480
    %v2483 = vperm.slane %v2467, 6
    %v2484 = vmul.f32 %v2481, %v2483
    %v2485 = vmul.f32 %v2482, %v2483
    %v2486 = vperm.slane %v2450, 3
    %v2487 = vsub.f32 %v2353, %v2486
    %v2488 = vsub.f32 %v2354, %v2486
    %v2489 = vperm.slane %v2467, 7
    %v2490 = vmul.f32 %v2487, %v2489
    %v2491 = vmul.f32 %v2488, %v2489
    %v2492 = vadd.f32 %v358, %v2472
    %v2493 = vadd.f32 %v359, %v2473
    %2494 = vst [vmem:[%s3] sm:$0xff] %v2492
    %2495 = vst [vmem:[%s3 + $0x8] sm:$0xff] %v2493
    %v2496 = vadd.f32 %v361, %v2478
    %v2497 = vadd.f32 %v362, %v2479
    %s2498 = scalar_lea.vmem %s3, 16
    %2499 = vst [vmem:[%s2498] sm:$0xff] %v2496
    %2500 = vst [vmem:[%s2498 + $0x8] sm:$0xff] %v2497
    %v2501 = vadd.f32 %v364, %v2484
    %v2502 = vadd.f32 %v365, %v2485
    %s2503 = scalar_lea.vmem %s3, 32
    %2504 = vst [vmem:[%s2503] sm:$0xff] %v2501
    %2505 = vst [vmem:[%s2503 + $0x8] sm:$0xff] %v2502
    %v2506 = vadd.f32 %v367, %v2490
    %v2507 = vadd.f32 %v368, %v2491
    %s2508 = scalar_lea.vmem %s3, 48
    %2509 = vst [vmem:[%s2508] sm:$0xff] %v2506
    %2510 = vst [vmem:[%s2508 + $0x8] sm:$0xff] %v2507
    // Predicated region
    $region22: #{_resconv_forward.1} parent=1 // pred_check
      _
    $region23: #{_resconv_forward.1} parent=1 // pred_check_branch
      %2512 = sbr.rel (0) target = $region25
    $region24: #{_resconv_forward.1} parent=1 // pred_region
      _
    $region25: #{_resconv_forward.1} parent=1 // pred_fallthru
      _
    // Predicated region
    $region26: #{_resconv_forward.1} parent=1 // pred_check
      _
    $region27: #{_resconv_forward.1} parent=1 // pred_check_branch
      %2514 = sbr.rel (0) target = $region29
    $region28: #{_resconv_forward.1} parent=1 // pred_region
      _
    $region29: #{_resconv_forward.1} parent=1 // pred_fallthru
      _
    %2515 = vsyncpa [#allocation3], 1
    %2516 = vsyncpa [#allocation5], 1

</llo_original>
